<compile_context>
chip_gen: v7x
topology: tpu7x:2x2x1
jax: 0.10.0
libtpu: 0.0.40
codegen_flags: <defaults>
</compile_context>

<pallas_src>
import functools
import math

import numpy as np
import jax
import jax.numpy as jnp
from jax import lax
from jax.experimental import pallas as pl
from jax.experimental.pallas import tpu as pltpu


# -----------------------------------------------------------------------------
# dtype / hardware helpers
# -----------------------------------------------------------------------------
def _f32(x):
    x = jnp.asarray(x)
    return x if x.dtype == jnp.float32 else x.astype(jnp.float32)


def _bf16(x):
    x = jnp.asarray(x)
    return x if x.dtype == jnp.bfloat16 else x.astype(jnp.bfloat16)


def _vmem_capacity_bytes():
    try:
        return int(pltpu.get_tpu_info().vmem_capacity_bytes)
    except Exception:                     # be conservative if the query fails
        return 64 * 1024 * 1024


_VMEM_CAP = _vmem_capacity_bytes()
_BIG_VMEM = _VMEM_CAP >= 100 * 1024 * 1024        # v5e/v6e: 128 MiB; v7x: 64 MiB
# matmul tile targets: large on v5e/v6e, conservative on v7x (64 MiB VMEM)
_TGT_M, _TGT_N, _TGT_K = (512, 512, 1024) if _BIG_VMEM else (256, 256, 512)
_FFN_TGT_M = 512 if _BIG_VMEM else 256
_VMEM_LIMIT = (64 if _BIG_VMEM else 32) * 1024 * 1024


def _pick_tile(dim, target, align):
    """Largest divisor of `dim` that is <= target and `align`-aligned; else the
    full dim (always a legal block extent)."""
    if dim <= target:
        return dim
    for t in range(target, align - 1, -1):
        if dim % t == 0 and t % align == 0:
            return t
    return dim


_SQRT1_2 = np.float32(1.0 / math.sqrt(2.0))
_GELU_EXACT = False     # True -> erf (exact torch F.gelu); False -> tanh approx (EUP)


def _gelu(x):
    if _GELU_EXACT:
        return 0.5 * x * (1.0 + lax.erf(x * _SQRT1_2))
    c0 = np.float32(math.sqrt(2.0 / math.pi))
    c1 = np.float32(0.044715)
    return 0.5 * x * (1.0 + jnp.tanh(c0 * (x + c1 * x * x * x)))


# -----------------------------------------------------------------------------
# Pallas kernels
# -----------------------------------------------------------------------------
def _linear2d_kernel(*refs, has_bias, has_res):
    # (i, j) grid: K fits in a single tile -> no accumulator scratch needed.
    x_ref, w_ref = refs[0], refs[1]
    pos = 2
    b_ref = refs[pos] if has_bias else None
    pos += int(has_bias)
    r_ref = refs[pos] if has_res else None
    pos += int(has_res)
    o_ref = refs[pos]
    acc = jnp.dot(x_ref[...], w_ref[...], preferred_element_type=jnp.float32)
    if has_bias:
        acc = acc + b_ref[...]
    if has_res:
        acc = acc + r_ref[...]
    o_ref[...] = acc.astype(o_ref.dtype)


def _linear3d_kernel(*refs, has_bias, has_res):
    # (i, j, k) tiled matmul with f32 VMEM accumulator; bias/residual epilogue
    # applied on the last k step.
    x_ref, w_ref = refs[0], refs[1]
    pos = 2
    b_ref = refs[pos] if has_bias else None
    pos += int(has_bias)
    r_ref = refs[pos] if has_res else None
    pos += int(has_res)
    o_ref = refs[pos]
    acc_ref = refs[pos + 1]

    @pl.when(pl.program_id(2) == 0)
    def _():
        acc_ref[...] = jnp.zeros_like(acc_ref)

    acc_ref[...] += jnp.dot(x_ref[...], w_ref[...],
                            preferred_element_type=jnp.float32)

    @pl.when(pl.program_id(2) == pl.num_programs(2) - 1)
    def _():
        acc = acc_ref[...]
        if has_bias:
            acc = acc + b_ref[...]
        if has_res:
            acc = acc + r_ref[...]
        o_ref[...] = acc.astype(o_ref.dtype)


def _ffn_kernel(x_ref, w1_ref, w2_ref, o_ref):
    # out = x + gelu(x @ w1) @ w2  (Conv1d k=1 FFN + residual, fused).
    # x arrives in f32 so the residual stays exact; MXU operands are bf16.
    x = x_ref[...]
    h = jnp.dot(x.astype(jnp.bfloat16), w1_ref[...],
                preferred_element_type=jnp.float32)
    h = _gelu(h)
    y = jnp.dot(h.astype(jnp.bfloat16), w2_ref[...],
                preferred_element_type=jnp.float32)
    o_ref[...] = (x + y).astype(o_ref.dtype)


def _decomp_kernel(*refs, with_trend):
    # moving average == banded (L, L) matmul (replicate padding folded into the
    # band); seasonal = x - mean.  One MXU matmul per batch row.
    x_ref, band_ref = refs[0], refs[1]
    seas_ref = refs[2]
    trend_ref = refs[3] if with_trend else None
    x = x_ref[...]                                       # (L, D)
    mean = jnp.dot(band_ref[...], x, preferred_element_type=jnp.float32)
    seas_ref[...] = (x - mean).astype(seas_ref.dtype)
    if with_trend:
        trend_ref[...] = mean.astype(trend_ref.dtype)


def _my_layernorm_kernel(x_ref, g_ref, b_ref, o_ref):
    x = x_ref[...]                                       # (L, D)
    mu = jnp.mean(x, axis=-1, keepdims=True)
    xc = x - mu
    var = jnp.mean(xc * xc, axis=-1, keepdims=True)
    xhat = xc * lax.rsqrt(var + np.float32(1e-5))
    xhat = xhat * g_ref[...] + b_ref[...]
    tbias = jnp.mean(xhat, axis=0, keepdims=True)        # mean over time (my_Layernorm)
    o_ref[...] = (xhat - tbias).astype(o_ref.dtype)


# -----------------------------------------------------------------------------
# Wrappers
# -----------------------------------------------------------------------------
def pallas_linear(x, w, b=None, residual=None):
    """(M, K) @ (K, N) [+ b] [+ residual] -> (M, N) float32.

    bf16 MXU operands, f32 accumulation; tiles picked from divisors of the
    shape (remainder free) and sized per the detected VMEM budget.
    """
    M, K = x.shape
    K2, N = w.shape
    assert K == K2
    x = _bf16(x)
    w = _bf16(w)
    has_bias = b is not None
    has_res = residual is not None

    tm = _pick_tile(M, _TGT_M, 8)
    tn = _pick_tile(N, _TGT_N, 128)
    tk = _pick_tile(K, _TGT_K, 128)

    args = [x, w]
    if has_bias:
        args.append(_f32(b).reshape(1, N))
    if has_res:
        args.append(_f32(residual).reshape(M, N))

    if tk == K:
        # single reduction step: 2-D grid, no scratch, no pl.when predication
        in_specs = [pl.BlockSpec((tm, K), lambda i, j: (i, 0)),
                    pl.BlockSpec((K, tn), lambda i, j: (0, j))]
        if has_bias:
            in_specs.append(pl.BlockSpec((1, tn), lambda i, j: (0, j)))
        if has_res:
            in_specs.append(pl.BlockSpec((tm, tn), lambda i, j: (i, j)))
        return pl.pallas_call(
            functools.partial(_linear2d_kernel, has_bias=has_bias, has_res=has_res),
            out_shape=jax.ShapeDtypeStruct((M, N), jnp.float32),
            grid=(M // tm, N // tn),
            in_specs=in_specs,
            out_specs=pl.BlockSpec((tm, tn), lambda i, j: (i, j)),
            compiler_params=pltpu.CompilerParams(
                dimension_semantics=("parallel", "parallel"),
                vmem_limit_bytes=_VMEM_LIMIT),
        )(*args)

    in_specs = [pl.BlockSpec((tm, tk), lambda i, j, k: (i, k)),
                pl.BlockSpec((tk, tn), lambda i, j, k: (k, j))]
    if has_bias:
        in_specs.append(pl.BlockSpec((1, tn), lambda i, j, k: (0, j)))
    if has_res:
        in_specs.append(pl.BlockSpec((tm, tn), lambda i, j, k: (i, j)))
    return pl.pallas_call(
        functools.partial(_linear3d_kernel, has_bias=has_bias, has_res=has_res),
        out_shape=jax.ShapeDtypeStruct((M, N), jnp.float32),
        grid=(M // tm, N // tn, K // tk),
        in_specs=in_specs,
        out_specs=pl.BlockSpec((tm, tn), lambda i, j, k: (i, j)),
        scratch_shapes=[pltpu.VMEM((tm, tn), jnp.float32)],
        compiler_params=pltpu.CompilerParams(
            dimension_semantics=("parallel", "parallel", "arbitrary"),
            vmem_limit_bytes=_VMEM_LIMIT),
    )(*args)


def linear3d(x, w, b=None, residual=None):
    B, L, Din = x.shape
    N = w.shape[1]
    r2 = None
    if residual is not None:
        r2 = jnp.broadcast_to(_f32(residual), (B, L, N)).reshape(B * L, N)
    out = pallas_linear(x.reshape(B * L, Din), w, b, r2)
    return out.reshape(B, L, N)


def ffn3d(x, w1, w2):
    """x + gelu(x @ w1) @ w2, tiled over M; d_ff intermediate stays in VMEM."""
    B, L, D = x.shape
    dff = w1.shape[1]
    M = B * L
    tm = _pick_tile(M, _FFN_TGT_M, 8)
    out = pl.pallas_call(
        _ffn_kernel,
        out_shape=jax.ShapeDtypeStruct((M, D), jnp.float32),
        grid=(M // tm,),
        in_specs=[pl.BlockSpec((tm, D), lambda i: (i, 0)),
                  pl.BlockSpec((D, dff), lambda i: (0, 0)),
                  pl.BlockSpec((dff, D), lambda i: (0, 0))],
        out_specs=pl.BlockSpec((tm, D), lambda i: (i, 0)),
        compiler_params=pltpu.CompilerParams(
            dimension_semantics=("parallel",),
            vmem_limit_bytes=_VMEM_LIMIT),
    )(_f32(x).reshape(M, D), _bf16(w1), _bf16(w2))
    return out.reshape(B, L, D)


def conv1d_circular3(x, w_flat, add=None):
    """Conv1d(kernel=3, padding=1, circular, bias=False) [+ fused add].

    Taps are gathered once in the wrapper (channel count is tiny), turning the
    conv into a single tiled MXU matmul (B*L, 3*Cin) @ (3*Cin, Cout); the
    positional/temporal embedding add rides the residual epilogue.
    """
    B, L, C = x.shape
    x = _f32(x)
    xcat = jnp.concatenate(
        [jnp.roll(x, 1, axis=1), x, jnp.roll(x, -1, axis=1)], axis=-1)
    return linear3d(xcat, w_flat, residual=add)


_BAND_CACHE = {}


def _ma_band(L, ksize):
    """(L, L) banded operator implementing the replicate-padded moving average."""
    key = (L, ksize)
    if key not in _BAND_CACHE:
        pad = (ksize - 1) // 2
        band = np.zeros((L, L), np.float32)
        inv = 1.0 / ksize
        for t in range(L):
            for k in range(ksize):
                s = min(max(t - pad + k, 0), L - 1)
                band[t, s] += inv
        _BAND_CACHE[key] = jnp.asarray(band)
    return _BAND_CACHE[key]


def series_decomp(x, ksize, with_trend=True):
    """series_decomp: seasonal = x - moving_avg(x) [, trend = moving_avg(x)].

    Padding + 25-tap window folded into a compile-time band matrix -> one MXU
    matmul per batch row; grid over B, "parallel".
    """
    B, L, D = x.shape
    band = _ma_band(L, ksize)
    kernel = functools.partial(_decomp_kernel, with_trend=with_trend)
    in_specs = [pl.BlockSpec((None, L, D), lambda b: (b, 0, 0)),
                pl.BlockSpec((L, L), lambda b: (0, 0))]
    if with_trend:
        out_shape = (jax.ShapeDtypeStruct((B, L, D), jnp.float32),
                     jax.ShapeDtypeStruct((B, L, D), jnp.float32))
        out_specs = (pl.BlockSpec((None, L, D), lambda b: (b, 0, 0)),
                     pl.BlockSpec((None, L, D), lambda b: (b, 0, 0)))
    else:
        out_shape = jax.ShapeDtypeStruct((B, L, D), jnp.float32)
        out_specs = pl.BlockSpec((None, L, D), lambda b: (b, 0, 0))
    return pl.pallas_call(
        kernel,
        out_shape=out_shape,
        grid=(B,),
        in_specs=in_specs,
        out_specs=out_specs,
        compiler_params=pltpu.CompilerParams(
            dimension_semantics=("parallel",),
            vmem_limit_bytes=_VMEM_LIMIT),
    )(_f32(x), band)


def my_layernorm(x, gamma, beta):
    B, L, D = x.shape
    return pl.pallas_call(
        _my_layernorm_kernel,
        out_shape=jax.ShapeDtypeStruct((B, L, D), jnp.float32),
        grid=(B,),
        in_specs=[pl.BlockSpec((None, L, D), lambda b: (b, 0, 0)),
                  pl.BlockSpec((1, D), lambda b: (0, 0)),
                  pl.BlockSpec((1, D), lambda b: (0, 0))],
        out_specs=pl.BlockSpec((None, L, D), lambda b: (b, 0, 0)),
        compiler_params=pltpu.CompilerParams(
            dimension_semantics=("parallel",),
            vmem_limit_bytes=_VMEM_LIMIT),
    )(_f32(x), _f32(gamma).reshape(1, D), _f32(beta).reshape(1, D))


# -----------------------------------------------------------------------------
# Embeddings
# -----------------------------------------------------------------------------
def positional_embedding(L, d_model):
    pos = np.arange(L)[:, None].astype(np.float64)
    div = np.exp(np.arange(0, d_model, 2).astype(np.float64)
                 * -(math.log(10000.0) / d_model))
    pe = np.zeros((L, d_model), np.float32)
    pe[:, 0::2] = np.sin(pos * div)
    pe[:, 1::2] = np.cos(pos * div)
    return jnp.asarray(pe)


def _fixed_table(c, d_model):
    pos = np.arange(c)[:, None].astype(np.float64)
    div = np.exp(np.arange(0, d_model, 2).astype(np.float64)
                 * -(math.log(10000.0) / d_model))
    w = np.zeros((c, d_model), np.float32)
    w[:, 0::2] = np.sin(pos * div)
    w[:, 1::2] = np.cos(pos * div)
    return jnp.asarray(w)


def temporal_embedding(x_mark, d_model):
    # fixed-sinusoidal embedding, freq='h': columns = [month, day, weekday, hour]
    idx = x_mark.astype(jnp.int32)
    month = jnp.take(_fixed_table(13, d_model), idx[:, :, 0], axis=0)
    day = jnp.take(_fixed_table(32, d_model), idx[:, :, 1], axis=0)
    weekday = jnp.take(_fixed_table(7, d_model), idx[:, :, 2], axis=0)
    hour = jnp.take(_fixed_table(24, d_model), idx[:, :, 3], axis=0)
    return hour + weekday + day + month


def data_embedding(x, x_mark, token_w, d_model):
    B, L, _ = x.shape
    pos = positional_embedding(L, d_model)[None]         # (1, L, d)
    temp = temporal_embedding(x_mark, d_model)            # (B, L, d)
    # TokenEmbedding conv + positional + temporal adds fused into the matmul;
    # dropout == identity (eval).
    return conv1d_circular3(x, token_w, add=pos + temp)


# -----------------------------------------------------------------------------
# Frequency-domain attention (FourierBlock / FourierCrossAttention)
# TODO(synk): rfft/irfft + complex mode-mixing einsums have no Pallas TPU
#             equivalent (no complex dtype in Mosaic); kept in plain JAX but
#             vectorized over all selected modes (no per-mode Python loops).
# -----------------------------------------------------------------------------
def fourier_block(q, index, w1, w2):
    # q: (B, L, H, E) -> (B, H, E, L)
    B, L, H, E = q.shape
    x = jnp.transpose(q, (0, 2, 3, 1))
    x_ft = jnp.fft.rfft(x, axis=-1)            # (B, H, E, F)
    F = L // 2 + 1
    out_ft = jnp.zeros((B, H, E, F), jnp.complex64)
    pairs = [(wi, i) for wi, i in enumerate(index) if i < F and wi < F]
    if pairs:
        wis = np.array([p[0] for p in pairs], np.int32)
        iis = np.array([p[1] for p in pairs], np.int32)
        xsel = x_ft[:, :, :, iis]                                  # (B,H,E,M)
        w = (w1[:, :, :, wis] + 1j * w2[:, :, :, wis]).astype(jnp.complex64)
        ysel = jnp.einsum("bhim,hiom->bhom", xsel, w)              # (B,H,E,M)
        out_ft = out_ft.at[:, :, :, wis].set(ysel)
    return jnp.fft.irfft(out_ft, n=L, axis=-1)


def _gather_modes(x_ft_full, index):
    B, H, E, F = x_ft_full.shape
    M = len(index)
    valid = [(pos, j) for pos, j in enumerate(index) if j < F]
    if len(valid) == M:
        return x_ft_full[:, :, :, np.asarray(index, np.int32)]
    out = jnp.zeros((B, H, E, M), jnp.complex64)
    if valid:
        pos = np.array([p for p, _ in valid], np.int32)
        js = np.array([j for _, j in valid], np.int32)
        out = out.at[:, :, :, pos].set(x_ft_full[:, :, :, js])
    return out


def fourier_self_attention(x, proj, fw1, fw2, index, n_heads, residual):
    # AutoCorrelationLayer(FourierBlock): K/V projections are dead code in the
    # reference (FourierBlock only consumes Q) and are skipped here.
    B, L, D = x.shape
    H, E = n_heads, D // n_heads
    q = linear3d(x, proj["wq"], proj["bq"]).reshape(B, L, H, E)
    out = fourier_block(q, index, fw1, fw2)          # (B, H, E, L)
    # NOTE: raw memory reinterpretation, mirrors the PyTorch .view() on the
    # contiguous (B, H, E, L) tensor — do NOT replace with a transpose.
    out = out.reshape(B, L, H * E)
    return linear3d(out, proj["wo"], proj["bo"], residual=residual)


def fourier_cross_attention(x_q, x_kv, proj, fw1, fw2, index_q, index_kv,
                            n_heads, d_model, residual):
    # V projection is unused by FourierCrossAttention and skipped.
    B, L, D = x_q.shape
    S = x_kv.shape[1]
    H, E = n_heads, D // n_heads
    q = linear3d(x_q, proj["wq"], proj["bq"]).reshape(B, L, H, E)
    k = linear3d(x_kv, proj["wk"], proj["bk"]).reshape(B, S, H, E)
    xq = jnp.transpose(q, (0, 2, 3, 1))
    xk = jnp.transpose(k, (0, 2, 3, 1))
    xq_ft_full = jnp.fft.rfft(xq, axis=-1)
    xk_ft_full = jnp.fft.rfft(xk, axis=-1)
    Fq = L // 2 + 1
    xq_ft = _gather_modes(xq_ft_full, index_q)        # (B,H,E,Mq)
    xk_ft = _gather_modes(xk_ft_full, index_kv)       # (B,H,E,Mk)
    xqk_ft = jnp.einsum("bhex,bhey->bhxy", xq_ft, xk_ft)
    xqk_ft = jnp.tanh(xqk_ft.real) + 1j * jnp.tanh(xqk_ft.imag)   # activation='tanh'
    xqkv_ft = jnp.einsum("bhxy,bhey->bhex", xqk_ft, xk_ft)
    w = (fw1 + 1j * fw2).astype(jnp.complex64)
    xqkvw = jnp.einsum("bhex,heox->bhox", xqkv_ft, w)
    valid = [(i, j) for i, j in enumerate(index_q) if j < Fq]
    out_ft = jnp.zeros((B, H, E, Fq), jnp.complex64)
    if valid:
        iis = np.array([i for i, _ in valid], np.int32)
        js = np.array([j for _, j in valid], np.int32)
        out_ft = out_ft.at[:, :, :, js].set(xqkvw[:, :, :, iis])
    out = jnp.fft.irfft(out_ft / d_model / d_model, n=L, axis=-1)   # (B,H,E,L)
    out = out.reshape(B, L, H * E)   # raw reinterpretation (torch .view quirk)
    return linear3d(out, proj["wo"], proj["bo"], residual=residual)


# -----------------------------------------------------------------------------
# Encoder / Decoder layers
# -----------------------------------------------------------------------------
def encoder_layer(x, lp, fw1, fw2, index, cfg):
    x = fourier_self_attention(x, lp["attn"], fw1, fw2, index,
                               cfg["n_heads"], residual=x)
    x = series_decomp(x, cfg["moving_avg"], with_trend=False)
    y = ffn3d(x, lp["ff_w1"], lp["ff_w2"])                 # x + FFN(x), fused
    res = series_decomp(y, cfg["moving_avg"], with_trend=False)
    return res


def decoder_layer(x, cross, lp, p, cfg):
    x = fourier_self_attention(x, lp["self_attn"], p["dec_fw1"], p["dec_fw2"],
                               cfg["index_dec"], cfg["n_heads"], residual=x)
    x, trend1 = series_decomp(x, cfg["moving_avg"], with_trend=True)
    x = fourier_cross_attention(x, cross, lp["cross_attn"], p["cross_fw1"],
                                p["cross_fw2"], cfg["index_cross_q"],
                                cfg["index_cross_kv"], cfg["n_heads"],
                                cfg["d_model"], residual=x)
    x, trend2 = series_decomp(x, cfg["moving_avg"], with_trend=True)
    y = ffn3d(x, lp["ff_w1"], lp["ff_w2"])
    x, trend3 = series_decomp(y, cfg["moving_avg"], with_trend=True)
    residual_trend = trend1 + trend2 + trend3
    residual_trend = conv1d_circular3(residual_trend, lp["trend_w"])
    return x, residual_trend


def fedformer_forward(p, x_enc, x_mark_enc, x_dec, x_mark_dec, cfg):
    pred_len, label_len = cfg["pred_len"], cfg["label_len"]
    mean = jnp.repeat(jnp.mean(x_enc, axis=1, keepdims=True), pred_len, axis=1)
    seasonal_init, trend_init = series_decomp(x_enc, cfg["moving_avg"],
                                              with_trend=True)
    trend_init = jnp.concatenate([trend_init[:, -label_len:, :], mean], axis=1)
    seasonal_init = jnp.pad(seasonal_init[:, -label_len:, :],
                            ((0, 0), (0, pred_len), (0, 0)))
    enc_out = data_embedding(x_enc, x_mark_enc, p["enc_token_w"], cfg["d_model"])
    dec_out = data_embedding(seasonal_init, x_mark_dec, p["dec_token_w"],
                             cfg["d_model"])

    # Encoder (FourierBlock weights shared across encoder layers, as in __init__)
    x = enc_out
    for lp in p["enc_layers"]:
        x = encoder_layer(x, lp, p["enc_fw1"], p["enc_fw2"], cfg["index_enc"], cfg)
    enc_out = my_layernorm(x, p["enc_norm_g"], p["enc_norm_b"])

    # Decoder
    x = dec_out
    trend = _f32(trend_init)
    for lp in p["dec_layers"]:
        x, residual_trend = decoder_layer(x, enc_out, lp, p, cfg)
        trend = trend + residual_trend
    x = my_layernorm(x, p["dec_norm_g"], p["dec_norm_b"])
    # Only the last pred_len rows (and last channel) are ever returned: slice
    # before the projection so no dead rows hit the MXU; the trend add is the
    # kernel's residual epilogue (trend_part + seasonal_part).
    x_last = x[:, -pred_len:, :]
    trend_last = trend[:, -pred_len:, :]
    out = linear3d(x_last, p["proj_w"], p["proj_b"], residual=trend_last)
    return out[:, :, -1:]            # (B, pred_len, 1)


# -----------------------------------------------------------------------------
# Deterministic parameter init
# -----------------------------------------------------------------------------
def get_frequency_modes(seq_len, modes, method):
    modes = min(modes, seq_len // 2)
    if method == "random":
        rng = np.random.RandomState(0)      # deterministic in-script
        idx = list(range(seq_len // 2))
        rng.shuffle(idx)
        idx = idx[:modes]
    else:
        idx = list(range(modes))
    idx.sort()
    return idx


def init_params(key, cfg):
    keys = iter(jax.random.split(key, 256))
    nk = lambda: next(keys)
    d, H, dff = cfg["d_model"], cfg["n_heads"], cfg["d_ff"]
    E = d // H

    def lin(fan_in, shape):
        bound = 1.0 / math.sqrt(fan_in)
        return jax.random.uniform(nk(), shape, jnp.float32, -bound, bound)

    scale = 1.0 / (d * d)
    p = {
        "enc_token_w": lin(3 * cfg["enc_in"], (3 * cfg["enc_in"], d)),
        "dec_token_w": lin(3 * cfg["dec_in"], (3 * cfg["dec_in"], d)),
        # Fourier weights (shared module instances in the PyTorch constructor)
        "enc_fw1": scale * jax.random.uniform(nk(), (H, E, E, len(cfg["index_enc"]))),
        "enc_fw2": scale * jax.random.uniform(nk(), (H, E, E, len(cfg["index_enc"]))),
        "dec_fw1": scale * jax.random.uniform(nk(), (H, E, E, len(cfg["index_dec"]))),
        "dec_fw2": scale * jax.random.uniform(nk(), (H, E, E, len(cfg["index_dec"]))),
        "cross_fw1": scale * jax.random.uniform(nk(), (H, E, E, len(cfg["index_cross_q"]))),
        "cross_fw2": scale * jax.random.uniform(nk(), (H, E, E, len(cfg["index_cross_q"]))),
        "enc_norm_g": jnp.ones((d,), jnp.float32),
        "enc_norm_b": jnp.zeros((d,), jnp.float32),
        "dec_norm_g": jnp.ones((d,), jnp.float32),
        "dec_norm_b": jnp.zeros((d,), jnp.float32),
        "proj_w": lin(d, (d, cfg["c_out"])),
        "proj_b": lin(d, (cfg["c_out"],)),
    }

    def attn_proj():
        return dict(
            wq=lin(d, (d, d)), bq=lin(d, (d,)),
            wk=lin(d, (d, d)), bk=lin(d, (d,)),
            wv=lin(d, (d, d)), bv=lin(d, (d,)),   # kept for parity; unused by the
            wo=lin(d, (d, d)), bo=lin(d, (d,)),   # Fourier attention forward pass
        )

    p["enc_layers"] = [dict(attn=attn_proj(),
                            ff_w1=lin(d, (d, dff)),
                            ff_w2=lin(dff, (dff, d)))
                       for _ in range(cfg["e_layers"])]
    p["dec_layers"] = [dict(self_attn=attn_proj(),
                            cross_attn=attn_proj(),
                            ff_w1=lin(d, (d, dff)),
                            ff_w2=lin(dff, (dff, d)),
                            trend_w=lin(3 * d, (3 * d, cfg["c_out"])))
                       for _ in range(cfg["d_layers"])]
    return p


# -----------------------------------------------------------------------------
# Main
# -----------------------------------------------------------------------------
if __name__ == "__main__":
    B = 2
    seq_len, label_len, pred_len = 16, 8, 8
    enc_in = dec_in = c_out = 4
    d_model, n_heads, d_ff = 32, 8, 64
    e_layers, d_layers = 2, 1
    moving_avg_k = 25
    modes = 32
    dec_len = seq_len // 2 + pred_len   # label_len == seq_len // 2

    cfg = dict(
        d_model=d_model, n_heads=n_heads, d_ff=d_ff,
        e_layers=e_layers, d_layers=d_layers,
        enc_in=enc_in, dec_in=dec_in, c_out=c_out,
        seq_len=seq_len, label_len=label_len, pred_len=pred_len,
        moving_avg=moving_avg_k,
        index_enc=get_frequency_modes(seq_len, modes, "random"),
        index_dec=get_frequency_modes(dec_len, modes, "random"),
        index_cross_q=get_frequency_modes(dec_len, modes, "random"),
        index_cross_kv=get_frequency_modes(seq_len, modes, "random"),
    )

    key = jax.random.PRNGKey(0)
    k_data, k_param = jax.random.split(key)
    x_enc = jax.random.normal(k_data, (B, seq_len, enc_in), jnp.float32)
    # prepare_batch semantics
    x_dec = jnp.concatenate(
        [x_enc[:, -label_len:, :], jnp.zeros((B, pred_len, enc_in), jnp.float32)], axis=1)
    x_mark_enc = jnp.zeros((B, seq_len, 4), jnp.float32)
    x_mark_dec = jnp.zeros((B, label_len + pred_len, 4), jnp.float32)

    params = init_params(k_param, cfg)

    fwd = jax.jit(lambda p, a, b, c, d: fedformer_forward(p, a, b, c, d, cfg))
    out = fwd(params, x_enc, x_mark_enc, x_dec, x_mark_dec)
    out = jax.block_until_ready(out)
    assert out.shape == (B, pred_len, 1), out.shape
    assert bool(jnp.all(jnp.isfinite(out)))
    print("KERNEL_OK")
</pallas_src>

<mosaic_0001>
module attributes {stable_mosaic.version = 11 : i64} {
  func.func @_linear2d_kernel(%arg0: i32, %arg1: i32, %arg2: memref<32x12xbf16, #tpu.memory_space<vmem>>, %arg3: memref<12x32xbf16, #tpu.memory_space<vmem>>, %arg4: memref<32x32xf32, #tpu.memory_space<vmem>>, %arg5: memref<32x32xf32, #tpu.memory_space<vmem>>) attributes {dimension_semantics = [#tpu.dimension_semantics<parallel>, #tpu.dimension_semantics<parallel>], iteration_bounds = array<i64: 1, 1>, scalar_prefetch = 0 : i64, scratch_operands = 0 : i64, tpu.core_type = #tpu.core_type<tc>, window_params = [{transform_indices = @transform_0, window_bounds = array<i64: 32, 12>}, {transform_indices = @transform_1, window_bounds = array<i64: 12, 32>}, {transform_indices = @transform_2, window_bounds = array<i64: 32, 32>}, {transform_indices = @transform_3, window_bounds = array<i64: 32, 32>}]} {
    %c0 = arith.constant 0 : index
    %c0_0 = arith.constant 0 : index
    %0 = vector.load %arg2[%c0, %c0_0] : memref<32x12xbf16, #tpu.memory_space<vmem>>, vector<32x12xbf16>
    %c0_1 = arith.constant 0 : index
    %c0_2 = arith.constant 0 : index
    %1 = vector.load %arg3[%c0_1, %c0_2] : memref<12x32xbf16, #tpu.memory_space<vmem>>, vector<12x32xbf16>
    %cst = arith.constant dense<0.000000e+00> : vector<32x32xf32>
    %2 = tpu.matmul %0, %1, %cst {dimension_numbers = #tpu.dot_dimension_numbers<[1], [0], [0], [1], [0, 0, 1, 1], [], []>} : vector<32x12xbf16>, vector<12x32xbf16>, vector<32x32xf32> -> vector<32x32xf32>
    %c0_3 = arith.constant 0 : index
    %c0_4 = arith.constant 0 : index
    %3 = vector.load %arg4[%c0_3, %c0_4] : memref<32x32xf32, #tpu.memory_space<vmem>>, vector<32x32xf32>
    %4 = arith.addf %2, %3 : vector<32x32xf32>
    %c0_5 = arith.constant 0 : index
    %c0_6 = arith.constant 0 : index
    %5 = vector.load %arg5[%c0_5, %c0_6] : memref<32x32xf32, #tpu.memory_space<vmem>>, vector<32x32xf32>
    tpu.vector_store %arg5[%c0_5, %c0_6], %4 {strides = array<i32>} : memref<32x32xf32, #tpu.memory_space<vmem>>, vector<32x32xf32>,
    return
  }
  func.func @transform_0(%arg0: i32, %arg1: i32) -> (i32, i32) {
    %c0_i32 = arith.constant 0 : i32
    %c0_i32_0 = arith.constant 0 : i32
    return %arg0, %c0_i32 : i32, i32
  }
  func.func @transform_1(%arg0: i32, %arg1: i32) -> (i32, i32) {
    %c0_i32 = arith.constant 0 : i32
    %c0_i32_0 = arith.constant 0 : i32
    return %c0_i32, %arg1 : i32, i32
  }
  func.func @transform_2(%arg0: i32, %arg1: i32) -> (i32, i32) {
    %c0_i32 = arith.constant 0 : i32
    return %arg0, %arg1 : i32, i32
  }
  func.func @transform_3(%arg0: i32, %arg1: i32) -> (i32, i32) {
    %c0_i32 = arith.constant 0 : i32
    return %arg0, %arg1 : i32, i32
  }
}

module attributes {stable_mosaic.version = 11 : i64} {
  func.func @_linear2d_kernel(%arg0: i32, %arg1: i32, %arg2: memref<32x32xbf16, #tpu.memory_space<vmem>>, %arg3: memref<32x32xbf16, #tpu.memory_space<vmem>>, %arg4: memref<1x32xf32, #tpu.memory_space<vmem>>, %arg5: memref<32x32xf32, #tpu.memory_space<vmem>>) attributes {dimension_semantics = [#tpu.dimension_semantics<parallel>, #tpu.dimension_semantics<parallel>], iteration_bounds = array<i64: 1, 1>, scalar_prefetch = 0 : i64, scratch_operands = 0 : i64, tpu.core_type = #tpu.core_type<tc>, window_params = [{transform_indices = @transform_0, window_bounds = array<i64: 32, 32>}, {transform_indices = @transform_1, window_bounds = array<i64: 32, 32>}, {transform_indices = @transform_2, window_bounds = array<i64: 1, 32>}, {transform_indices = @transform_3, window_bounds = array<i64: 32, 32>}]} {
    %c0 = arith.constant 0 : index
    %c0_0 = arith.constant 0 : index
    %0 = vector.load %arg2[%c0, %c0_0] : memref<32x32xbf16, #tpu.memory_space<vmem>>, vector<32x32xbf16>
    %c0_1 = arith.constant 0 : index
    %c0_2 = arith.constant 0 : index
    %1 = vector.load %arg3[%c0_1, %c0_2] : memref<32x32xbf16, #tpu.memory_space<vmem>>, vector<32x32xbf16>
    %cst = arith.constant dense<0.000000e+00> : vector<32x32xf32>
    %2 = tpu.matmul %0, %1, %cst {dimension_numbers = #tpu.dot_dimension_numbers<[1], [0], [0], [1], [0, 0, 1, 1], [], []>} : vector<32x32xbf16>, vector<32x32xbf16>, vector<32x32xf32> -> vector<32x32xf32>
    %c0_3 = arith.constant 0 : index
    %c0_4 = arith.constant 0 : index
    %3 = vector.load %arg4[%c0_3, %c0_4] : memref<1x32xf32, #tpu.memory_space<vmem>>, vector<1x32xf32>
    %4 = vector.broadcast %3 : vector<1x32xf32> to vector<32x32xf32>
    %5 = arith.addf %2, %4 : vector<32x32xf32>
    %c0_5 = arith.constant 0 : index
    %c0_6 = arith.constant 0 : index
    %6 = vector.load %arg5[%c0_5, %c0_6] : memref<32x32xf32, #tpu.memory_space<vmem>>, vector<32x32xf32>
    tpu.vector_store %arg5[%c0_5, %c0_6], %5 {strides = array<i32>} : memref<32x32xf32, #tpu.memory_space<vmem>>, vector<32x32xf32>,
    return
  }
  func.func @transform_0(%arg0: i32, %arg1: i32) -> (i32, i32) {
    %c0_i32 = arith.constant 0 : i32
    %c0_i32_0 = arith.constant 0 : i32
    return %arg0, %c0_i32 : i32, i32
  }
  func.func @transform_1(%arg0: i32, %arg1: i32) -> (i32, i32) {
    %c0_i32 = arith.constant 0 : i32
    %c0_i32_0 = arith.constant 0 : i32
    return %c0_i32, %arg1 : i32, i32
  }
  func.func @transform_2(%arg0: i32, %arg1: i32) -> (i32, i32) {
    %c0_i32 = arith.constant 0 : i32
    %c0_i32_0 = arith.constant 0 : i32
    return %c0_i32, %arg1 : i32, i32
  }
  func.func @transform_3(%arg0: i32, %arg1: i32) -> (i32, i32) {
    %c0_i32 = arith.constant 0 : i32
    return %arg0, %arg1 : i32, i32
  }
}

module attributes {stable_mosaic.version = 11 : i64} {
  func.func @_linear2d_kernel(%arg0: i32, %arg1: i32, %arg2: memref<32x32xbf16, #tpu.memory_space<vmem>>, %arg3: memref<32x32xbf16, #tpu.memory_space<vmem>>, %arg4: memref<1x32xf32, #tpu.memory_space<vmem>>, %arg5: memref<32x32xf32, #tpu.memory_space<vmem>>, %arg6: memref<32x32xf32, #tpu.memory_space<vmem>>) attributes {dimension_semantics = [#tpu.dimension_semantics<parallel>, #tpu.dimension_semantics<parallel>], iteration_bounds = array<i64: 1, 1>, scalar_prefetch = 0 : i64, scratch_operands = 0 : i64, tpu.core_type = #tpu.core_type<tc>, window_params = [{transform_indices = @transform_0, window_bounds = array<i64: 32, 32>}, {transform_indices = @transform_1, window_bounds = array<i64: 32, 32>}, {transform_indices = @transform_2, window_bounds = array<i64: 1, 32>}, {transform_indices = @transform_3, window_bounds = array<i64: 32, 32>}, {transform_indices = @transform_4, window_bounds = array<i64: 32, 32>}]} {
    %c0 = arith.constant 0 : index
    %c0_0 = arith.constant 0 : index
    %0 = vector.load %arg2[%c0, %c0_0] : memref<32x32xbf16, #tpu.memory_space<vmem>>, vector<32x32xbf16>
    %c0_1 = arith.constant 0 : index
    %c0_2 = arith.constant 0 : index
    %1 = vector.load %arg3[%c0_1, %c0_2] : memref<32x32xbf16, #tpu.memory_space<vmem>>, vector<32x32xbf16>
    %cst = arith.constant dense<0.000000e+00> : vector<32x32xf32>
    %2 = tpu.matmul %0, %1, %cst {dimension_numbers = #tpu.dot_dimension_numbers<[1], [0], [0], [1], [0, 0, 1, 1], [], []>} : vector<32x32xbf16>, vector<32x32xbf16>, vector<32x32xf32> -> vector<32x32xf32>
    %c0_3 = arith.constant 0 : index
    %c0_4 = arith.constant 0 : index
    %3 = vector.load %arg4[%c0_3, %c0_4] : memref<1x32xf32, #tpu.memory_space<vmem>>, vector<1x32xf32>
    %4 = vector.broadcast %3 : vector<1x32xf32> to vector<32x32xf32>
    %5 = arith.addf %2, %4 : vector<32x32xf32>
    %c0_5 = arith.constant 0 : index
    %c0_6 = arith.constant 0 : index
    %6 = vector.load %arg5[%c0_5, %c0_6] : memref<32x32xf32, #tpu.memory_space<vmem>>, vector<32x32xf32>
    %7 = arith.addf %5, %6 : vector<32x32xf32>
    %c0_7 = arith.constant 0 : index
    %c0_8 = arith.constant 0 : index
    %8 = vector.load %arg6[%c0_7, %c0_8] : memref<32x32xf32, #tpu.memory_space<vmem>>, vector<32x32xf32>
    tpu.vector_store %arg6[%c0_7, %c0_8], %7 {strides = array<i32>} : memref<32x32xf32, #tpu.memory_space<vmem>>, vector<32x32xf32>,
    return
  }
  func.func @transform_0(%arg0: i32, %arg1: i32) -> (i32, i32) {
    %c0_i32 = arith.constant 0 : i32
    %c0_i32_0 = arith.constant 0 : i32
    return %arg0, %c0_i32 : i32, i32
  }
  func.func @transform_1(%arg0: i32, %arg1: i32) -> (i32, i32) {
    %c0_i32 = arith.constant 0 : i32
    %c0_i32_0 = arith.constant 0 : i32
    return %c0_i32, %arg1 : i32, i32
  }
  func.func @transform_2(%arg0: i32, %arg1: i32) -> (i32, i32) {
    %c0_i32 = arith.constant 0 : i32
    %c0_i32_0 = arith.constant 0 : i32
    return %c0_i32, %arg1 : i32, i32
  }
  func.func @transform_3(%arg0: i32, %arg1: i32) -> (i32, i32) {
    %c0_i32 = arith.constant 0 : i32
    return %arg0, %arg1 : i32, i32
  }
  func.func @transform_4(%arg0: i32, %arg1: i32) -> (i32, i32) {
    %c0_i32 = arith.constant 0 : i32
    return %arg0, %arg1 : i32, i32
  }
}

module attributes {stable_mosaic.version = 11 : i64} {
  func.func @_decomp_kernel(%arg0: i32, %arg1: memref<1x16x32xf32, #tpu.memory_space<vmem>>, %arg2: memref<16x16xf32, #tpu.memory_space<vmem>>, %arg3: memref<1x16x32xf32, #tpu.memory_space<vmem>>) attributes {dimension_semantics = [#tpu.dimension_semantics<parallel>], iteration_bounds = array<i64: 2>, scalar_prefetch = 0 : i64, scratch_operands = 0 : i64, tpu.core_type = #tpu.core_type<tc>, window_params = [{transform_indices = @transform_0, window_bounds = array<i64: 1, 16, 32>}, {pipeline_mode = #tpu.pipeline_mode<synchronous>, transform_indices = @transform_1, window_bounds = array<i64: 16, 16>}, {transform_indices = @transform_2, window_bounds = array<i64: 1, 16, 32>}]} {
    %c0 = arith.constant 0 : index
    %c0_0 = arith.constant 0 : index
    %c0_1 = arith.constant 0 : index
    %0 = vector.load %arg1[%c0, %c0_0, %c0_1] : memref<1x16x32xf32, #tpu.memory_space<vmem>>, vector<1x16x32xf32>
    %1 = vector.shape_cast %0 : vector<1x16x32xf32> to vector<16x32xf32>
    %c0_2 = arith.constant 0 : index
    %c0_3 = arith.constant 0 : index
    %2 = vector.load %arg2[%c0_2, %c0_3] : memref<16x16xf32, #tpu.memory_space<vmem>>, vector<16x16xf32>
    %cst = arith.constant dense<0.000000e+00> : vector<16x32xf32>
    %3 = tpu.matmul %2, %1, %cst {dimension_numbers = #tpu.dot_dimension_numbers<[1], [0], [0], [1], [0, 0, 1, 1], [], []>} : vector<16x16xf32>, vector<16x32xf32>, vector<16x32xf32> -> vector<16x32xf32>
    %4 = arith.subf %1, %3 : vector<16x32xf32>
    %c0_4 = arith.constant 0 : index
    %c0_5 = arith.constant 0 : index
    %c0_6 = arith.constant 0 : index
    %5 = vector.load %arg3[%c0_4, %c0_5, %c0_6] : memref<1x16x32xf32, #tpu.memory_space<vmem>>, vector<1x16x32xf32>
    %6 = vector.shape_cast %5 : vector<1x16x32xf32> to vector<16x32xf32>
    %7 = vector.shape_cast %4 : vector<16x32xf32> to vector<1x16x32xf32>
    tpu.vector_store %arg3[%c0_4, %c0_5, %c0_6], %7 {strides = array<i32>} : memref<1x16x32xf32, #tpu.memory_space<vmem>>, vector<1x16x32xf32>,
    return
  }
  func.func @transform_0(%arg0: i32) -> (i32, i32, i32) {
    %c0_i32 = arith.constant 0 : i32
    %c0_i32_0 = arith.constant 0 : i32
    %c0_i32_1 = arith.constant 0 : i32
    return %arg0, %c0_i32, %c0_i32_0 : i32, i32, i32
  }
  func.func @transform_1(%arg0: i32) -> (i32, i32) {
    %c0_i32 = arith.constant 0 : i32
    %c0_i32_0 = arith.constant 0 : i32
    %c0_i32_1 = arith.constant 0 : i32
    return %c0_i32, %c0_i32_0 : i32, i32
  }
  func.func @transform_2(%arg0: i32) -> (i32, i32, i32) {
    %c0_i32 = arith.constant 0 : i32
    %c0_i32_0 = arith.constant 0 : i32
    %c0_i32_1 = arith.constant 0 : i32
    return %arg0, %c0_i32, %c0_i32_0 : i32, i32, i32
  }
}

module attributes {stable_mosaic.version = 11 : i64} {
  func.func @_my_layernorm_kernel(%arg0: i32, %arg1: memref<1x16x32xf32, #tpu.memory_space<vmem>>, %arg2: memref<1x32xf32, #tpu.memory_space<vmem>>, %arg3: memref<1x32xf32, #tpu.memory_space<vmem>>, %arg4: memref<1x16x32xf32, #tpu.memory_space<vmem>>) attributes {dimension_semantics = [#tpu.dimension_semantics<parallel>], iteration_bounds = array<i64: 2>, scalar_prefetch = 0 : i64, scratch_operands = 0 : i64, tpu.core_type = #tpu.core_type<tc>, window_params = [{transform_indices = @transform_0, window_bounds = array<i64: 1, 16, 32>}, {pipeline_mode = #tpu.pipeline_mode<synchronous>, transform_indices = @transform_1, window_bounds = array<i64: 1, 32>}, {pipeline_mode = #tpu.pipeline_mode<synchronous>, transform_indices = @transform_2, window_bounds = array<i64: 1, 32>}, {transform_indices = @transform_3, window_bounds = array<i64: 1, 16, 32>}]} {
    %c0 = arith.constant 0 : index
    %c0_0 = arith.constant 0 : index
    %c0_1 = arith.constant 0 : index
    %0 = vector.load %arg1[%c0, %c0_0, %c0_1] : memref<1x16x32xf32, #tpu.memory_space<vmem>>, vector<1x16x32xf32>
    %1 = vector.shape_cast %0 : vector<1x16x32xf32> to vector<16x32xf32>
    %cst = arith.constant dense<0.000000e+00> : vector<16xf32>
    %2 = vector.multi_reduction <add>, %1, %cst [1] : vector<16x32xf32> to vector<16xf32>
    %3 = vector.shape_cast %2 : vector<16xf32> to vector<16x1xf32>
    %cst_2 = arith.constant 3.200000e+01 : f32
    %4 = vector.broadcast %cst_2 : f32 to vector<16x1xf32>
    %5 = arith.divf %3, %4 : vector<16x1xf32>
    %6 = vector.broadcast %5 : vector<16x1xf32> to vector<16x32xf32>
    %7 = arith.subf %1, %6 : vector<16x32xf32>
    %8 = arith.mulf %7, %7 : vector<16x32xf32>
    %cst_3 = arith.constant dense<0.000000e+00> : vector<16xf32>
    %9 = vector.multi_reduction <add>, %8, %cst_3 [1] : vector<16x32xf32> to vector<16xf32>
    %10 = vector.shape_cast %9 : vector<16xf32> to vector<16x1xf32>
    %cst_4 = arith.constant 3.200000e+01 : f32
    %11 = vector.broadcast %cst_4 : f32 to vector<16x1xf32>
    %12 = arith.divf %10, %11 : vector<16x1xf32>
    %cst_5 = arith.constant 9.99999974E-6 : f32
    %13 = vector.broadcast %cst_5 : f32 to vector<16x1xf32>
    %14 = arith.addf %12, %13 : vector<16x1xf32>
    %15 = math.rsqrt %14 : vector<16x1xf32>
    %16 = vector.broadcast %15 : vector<16x1xf32> to vector<16x32xf32>
    %17 = arith.mulf %7, %16 : vector<16x32xf32>
    %c0_6 = arith.constant 0 : index
    %c0_7 = arith.constant 0 : index
    %18 = vector.load %arg2[%c0_6, %c0_7] : memref<1x32xf32, #tpu.memory_space<vmem>>, vector<1x32xf32>
    %19 = vector.broadcast %18 : vector<1x32xf32> to vector<16x32xf32>
    %20 = arith.mulf %17, %19 : vector<16x32xf32>
    %c0_8 = arith.constant 0 : index
    %c0_9 = arith.constant 0 : index
    %21 = vector.load %arg3[%c0_8, %c0_9] : memref<1x32xf32, #tpu.memory_space<vmem>>, vector<1x32xf32>
    %22 = vector.broadcast %21 : vector<1x32xf32> to vector<16x32xf32>
    %23 = arith.addf %20, %22 : vector<16x32xf32>
    %cst_10 = arith.constant dense<0.000000e+00> : vector<32xf32>
    %24 = vector.multi_reduction <add>, %23, %cst_10 [0] : vector<16x32xf32> to vector<32xf32>
    %25 = vector.shape_cast %24 : vector<32xf32> to vector<1x32xf32>
    %cst_11 = arith.constant 1.600000e+01 : f32
    %26 = vector.broadcast %cst_11 : f32 to vector<1x32xf32>
    %27 = arith.divf %25, %26 : vector<1x32xf32>
    %28 = vector.broadcast %27 : vector<1x32xf32> to vector<16x32xf32>
    %29 = arith.subf %23, %28 : vector<16x32xf32>
    %c0_12 = arith.constant 0 : index
    %c0_13 = arith.constant 0 : index
    %c0_14 = arith.constant 0 : index
    %30 = vector.load %arg4[%c0_12, %c0_13, %c0_14] : memref<1x16x32xf32, #tpu.memory_space<vmem>>, vector<1x16x32xf32>
    %31 = vector.shape_cast %30 : vector<1x16x32xf32> to vector<16x32xf32>
    %32 = vector.shape_cast %29 : vector<16x32xf32> to vector<1x16x32xf32>
    tpu.vector_store %arg4[%c0_12, %c0_13, %c0_14], %32 {strides = array<i32>} : memref<1x16x32xf32, #tpu.memory_space<vmem>>, vector<1x16x32xf32>,
    return
  }
  func.func @transform_0(%arg0: i32) -> (i32, i32, i32) {
    %c0_i32 = arith.constant 0 : i32
    %c0_i32_0 = arith.constant 0 : i32
    %c0_i32_1 = arith.constant 0 : i32
    return %arg0, %c0_i32, %c0_i32_0 : i32, i32, i32
  }
  func.func @transform_1(%arg0: i32) -> (i32, i32) {
    %c0_i32 = arith.constant 0 : i32
    %c0_i32_0 = arith.constant 0 : i32
    %c0_i32_1 = arith.constant 0 : i32
    return %c0_i32, %c0_i32_0 : i32, i32
  }
  func.func @transform_2(%arg0: i32) -> (i32, i32) {
    %c0_i32 = arith.constant 0 : i32
    %c0_i32_0 = arith.constant 0 : i32
    %c0_i32_1 = arith.constant 0 : i32
    return %c0_i32, %c0_i32_0 : i32, i32
  }
  func.func @transform_3(%arg0: i32) -> (i32, i32, i32) {
    %c0_i32 = arith.constant 0 : i32
    %c0_i32_0 = arith.constant 0 : i32
    %c0_i32_1 = arith.constant 0 : i32
    return %arg0, %c0_i32, %c0_i32_0 : i32, i32, i32
  }
}

module attributes {stable_mosaic.version = 11 : i64} {
  func.func @_ffn_kernel(%arg0: i32, %arg1: memref<32x32xf32, #tpu.memory_space<vmem>>, %arg2: memref<32x64xbf16, #tpu.memory_space<vmem>>, %arg3: memref<64x32xbf16, #tpu.memory_space<vmem>>, %arg4: memref<32x32xf32, #tpu.memory_space<vmem>>) attributes {dimension_semantics = [#tpu.dimension_semantics<parallel>], iteration_bounds = array<i64: 1>, scalar_prefetch = 0 : i64, scratch_operands = 0 : i64, tpu.core_type = #tpu.core_type<tc>, window_params = [{transform_indices = @transform_0, window_bounds = array<i64: 32, 32>}, {pipeline_mode = #tpu.pipeline_mode<synchronous>, transform_indices = @transform_1, window_bounds = array<i64: 32, 64>}, {pipeline_mode = #tpu.pipeline_mode<synchronous>, transform_indices = @transform_2, window_bounds = array<i64: 64, 32>}, {transform_indices = @transform_3, window_bounds = array<i64: 32, 32>}]} {
    %c0 = arith.constant 0 : index
    %c0_0 = arith.constant 0 : index
    %0 = vector.load %arg1[%c0, %c0_0] : memref<32x32xf32, #tpu.memory_space<vmem>>, vector<32x32xf32>
    %1 = arith.truncf %0 : vector<32x32xf32> to vector<32x32xbf16>
    %c0_1 = arith.constant 0 : index
    %c0_2 = arith.constant 0 : index
    %2 = vector.load %arg2[%c0_1, %c0_2] : memref<32x64xbf16, #tpu.memory_space<vmem>>, vector<32x64xbf16>
    %cst = arith.constant dense<0.000000e+00> : vector<32x64xf32>
    %3 = tpu.matmul %1, %2, %cst {dimension_numbers = #tpu.dot_dimension_numbers<[1], [0], [0], [1], [0, 0, 1, 1], [], []>} : vector<32x32xbf16>, vector<32x64xbf16>, vector<32x64xf32> -> vector<32x64xf32>
    %cst_3 = arith.constant 5.000000e-01 : f32
    %4 = vector.broadcast %cst_3 : f32 to vector<32x64xf32>
    %5 = arith.mulf %4, %3 : vector<32x64xf32>
    %cst_4 = arith.constant 4.471500e-02 : f32
    %6 = vector.broadcast %cst_4 : f32 to vector<32x64xf32>
    %7 = arith.mulf %6, %3 : vector<32x64xf32>
    %8 = arith.mulf %7, %3 : vector<32x64xf32>
    %9 = arith.mulf %8, %3 : vector<32x64xf32>
    %10 = arith.addf %3, %9 : vector<32x64xf32>
    %cst_5 = arith.constant 0.797884583 : f32
    %11 = vector.broadcast %cst_5 : f32 to vector<32x64xf32>
    %12 = arith.mulf %11, %10 : vector<32x64xf32>
    %13 = math.tanh %12 : vector<32x64xf32>
    %cst_6 = arith.constant 1.000000e+00 : f32
    %14 = vector.broadcast %cst_6 : f32 to vector<32x64xf32>
    %15 = arith.addf %14, %13 : vector<32x64xf32>
    %16 = arith.mulf %5, %15 : vector<32x64xf32>
    %17 = arith.truncf %16 : vector<32x64xf32> to vector<32x64xbf16>
    %c0_7 = arith.constant 0 : index
    %c0_8 = arith.constant 0 : index
    %18 = vector.load %arg3[%c0_7, %c0_8] : memref<64x32xbf16, #tpu.memory_space<vmem>>, vector<64x32xbf16>
    %cst_9 = arith.constant dense<0.000000e+00> : vector<32x32xf32>
    %19 = tpu.matmul %17, %18, %cst_9 {dimension_numbers = #tpu.dot_dimension_numbers<[1], [0], [0], [1], [0, 0, 1, 1], [], []>} : vector<32x64xbf16>, vector<64x32xbf16>, vector<32x32xf32> -> vector<32x32xf32>
    %20 = arith.addf %0, %19 : vector<32x32xf32>
    %c0_10 = arith.constant 0 : index
    %c0_11 = arith.constant 0 : index
    %21 = vector.load %arg4[%c0_10, %c0_11] : memref<32x32xf32, #tpu.memory_space<vmem>>, vector<32x32xf32>
    tpu.vector_store %arg4[%c0_10, %c0_11], %20 {strides = array<i32>} : memref<32x32xf32, #tpu.memory_space<vmem>>, vector<32x32xf32>,
    return
  }
  func.func @transform_0(%arg0: i32) -> (i32, i32) {
    %c0_i32 = arith.constant 0 : i32
    %c0_i32_0 = arith.constant 0 : i32
    return %arg0, %c0_i32 : i32, i32
  }
  func.func @transform_1(%arg0: i32) -> (i32, i32) {
    %c0_i32 = arith.constant 0 : i32
    %c0_i32_0 = arith.constant 0 : i32
    %c0_i32_1 = arith.constant 0 : i32
    return %c0_i32, %c0_i32_0 : i32, i32
  }
  func.func @transform_2(%arg0: i32) -> (i32, i32) {
    %c0_i32 = arith.constant 0 : i32
    %c0_i32_0 = arith.constant 0 : i32
    %c0_i32_1 = arith.constant 0 : i32
    return %c0_i32, %c0_i32_0 : i32, i32
  }
  func.func @transform_3(%arg0: i32) -> (i32, i32) {
    %c0_i32 = arith.constant 0 : i32
    %c0_i32_0 = arith.constant 0 : i32
    return %arg0, %c0_i32 : i32, i32
  }
}

module attributes {stable_mosaic.version = 11 : i64} {
  func.func @_decomp_kernel(%arg0: i32, %arg1: memref<1x16x4xf32, #tpu.memory_space<vmem>>, %arg2: memref<16x16xf32, #tpu.memory_space<vmem>>, %arg3: memref<1x16x4xf32, #tpu.memory_space<vmem>>, %arg4: memref<1x16x4xf32, #tpu.memory_space<vmem>>) attributes {dimension_semantics = [#tpu.dimension_semantics<parallel>], iteration_bounds = array<i64: 2>, scalar_prefetch = 0 : i64, scratch_operands = 0 : i64, tpu.core_type = #tpu.core_type<tc>, window_params = [{transform_indices = @transform_0, window_bounds = array<i64: 1, 16, 4>}, {pipeline_mode = #tpu.pipeline_mode<synchronous>, transform_indices = @transform_1, window_bounds = array<i64: 16, 16>}, {transform_indices = @transform_2, window_bounds = array<i64: 1, 16, 4>}, {transform_indices = @transform_3, window_bounds = array<i64: 1, 16, 4>}]} {
    %c0 = arith.constant 0 : index
    %c0_0 = arith.constant 0 : index
    %c0_1 = arith.constant 0 : index
    %0 = vector.load %arg1[%c0, %c0_0, %c0_1] : memref<1x16x4xf32, #tpu.memory_space<vmem>>, vector<1x16x4xf32>
    %1 = vector.shape_cast %0 : vector<1x16x4xf32> to vector<16x4xf32>
    %c0_2 = arith.constant 0 : index
    %c0_3 = arith.constant 0 : index
    %2 = vector.load %arg2[%c0_2, %c0_3] : memref<16x16xf32, #tpu.memory_space<vmem>>, vector<16x16xf32>
    %cst = arith.constant dense<0.000000e+00> : vector<16x4xf32>
    %3 = tpu.matmul %2, %1, %cst {dimension_numbers = #tpu.dot_dimension_numbers<[1], [0], [0], [1], [0, 0, 1, 1], [], []>} : vector<16x16xf32>, vector<16x4xf32>, vector<16x4xf32> -> vector<16x4xf32>
    %4 = arith.subf %1, %3 : vector<16x4xf32>
    %c0_4 = arith.constant 0 : index
    %c0_5 = arith.constant 0 : index
    %c0_6 = arith.constant 0 : index
    %5 = vector.load %arg3[%c0_4, %c0_5, %c0_6] : memref<1x16x4xf32, #tpu.memory_space<vmem>>, vector<1x16x4xf32>
    %6 = vector.shape_cast %5 : vector<1x16x4xf32> to vector<16x4xf32>
    %7 = vector.shape_cast %4 : vector<16x4xf32> to vector<1x16x4xf32>
    tpu.vector_store %arg3[%c0_4, %c0_5, %c0_6], %7 {strides = array<i32>} : memref<1x16x4xf32, #tpu.memory_space<vmem>>, vector<1x16x4xf32>,
    %c0_7 = arith.constant 0 : index
    %c0_8 = arith.constant 0 : index
    %c0_9 = arith.constant 0 : index
    %8 = vector.load %arg4[%c0_7, %c0_8, %c0_9] : memref<1x16x4xf32, #tpu.memory_space<vmem>>, vector<1x16x4xf32>
    %9 = vector.shape_cast %8 : vector<1x16x4xf32> to vector<16x4xf32>
    %10 = vector.shape_cast %3 : vector<16x4xf32> to vector<1x16x4xf32>
    tpu.vector_store %arg4[%c0_7, %c0_8, %c0_9], %10 {strides = array<i32>} : memref<1x16x4xf32, #tpu.memory_space<vmem>>, vector<1x16x4xf32>,
    return
  }
  func.func @transform_0(%arg0: i32) -> (i32, i32, i32) {
    %c0_i32 = arith.constant 0 : i32
    %c0_i32_0 = arith.constant 0 : i32
    %c0_i32_1 = arith.constant 0 : i32
    return %arg0, %c0_i32, %c0_i32_0 : i32, i32, i32
  }
  func.func @transform_1(%arg0: i32) -> (i32, i32) {
    %c0_i32 = arith.constant 0 : i32
    %c0_i32_0 = arith.constant 0 : i32
    %c0_i32_1 = arith.constant 0 : i32
    return %c0_i32, %c0_i32_0 : i32, i32
  }
  func.func @transform_2(%arg0: i32) -> (i32, i32, i32) {
    %c0_i32 = arith.constant 0 : i32
    %c0_i32_0 = arith.constant 0 : i32
    %c0_i32_1 = arith.constant 0 : i32
    return %arg0, %c0_i32, %c0_i32_0 : i32, i32, i32
  }
  func.func @transform_3(%arg0: i32) -> (i32, i32, i32) {
    %c0_i32 = arith.constant 0 : i32
    %c0_i32_0 = arith.constant 0 : i32
    %c0_i32_1 = arith.constant 0 : i32
    return %arg0, %c0_i32, %c0_i32_0 : i32, i32, i32
  }
}

module attributes {stable_mosaic.version = 11 : i64} {
  func.func @_decomp_kernel(%arg0: i32, %arg1: memref<1x16x32xf32, #tpu.memory_space<vmem>>, %arg2: memref<16x16xf32, #tpu.memory_space<vmem>>, %arg3: memref<1x16x32xf32, #tpu.memory_space<vmem>>, %arg4: memref<1x16x32xf32, #tpu.memory_space<vmem>>) attributes {dimension_semantics = [#tpu.dimension_semantics<parallel>], iteration_bounds = array<i64: 2>, scalar_prefetch = 0 : i64, scratch_operands = 0 : i64, tpu.core_type = #tpu.core_type<tc>, window_params = [{transform_indices = @transform_0, window_bounds = array<i64: 1, 16, 32>}, {pipeline_mode = #tpu.pipeline_mode<synchronous>, transform_indices = @transform_1, window_bounds = array<i64: 16, 16>}, {transform_indices = @transform_2, window_bounds = array<i64: 1, 16, 32>}, {transform_indices = @transform_3, window_bounds = array<i64: 1, 16, 32>}]} {
    %c0 = arith.constant 0 : index
    %c0_0 = arith.constant 0 : index
    %c0_1 = arith.constant 0 : index
    %0 = vector.load %arg1[%c0, %c0_0, %c0_1] : memref<1x16x32xf32, #tpu.memory_space<vmem>>, vector<1x16x32xf32>
    %1 = vector.shape_cast %0 : vector<1x16x32xf32> to vector<16x32xf32>
    %c0_2 = arith.constant 0 : index
    %c0_3 = arith.constant 0 : index
    %2 = vector.load %arg2[%c0_2, %c0_3] : memref<16x16xf32, #tpu.memory_space<vmem>>, vector<16x16xf32>
    %cst = arith.constant dense<0.000000e+00> : vector<16x32xf32>
    %3 = tpu.matmul %2, %1, %cst {dimension_numbers = #tpu.dot_dimension_numbers<[1], [0], [0], [1], [0, 0, 1, 1], [], []>} : vector<16x16xf32>, vector<16x32xf32>, vector<16x32xf32> -> vector<16x32xf32>
    %4 = arith.subf %1, %3 : vector<16x32xf32>
    %c0_4 = arith.constant 0 : index
    %c0_5 = arith.constant 0 : index
    %c0_6 = arith.constant 0 : index
    %5 = vector.load %arg3[%c0_4, %c0_5, %c0_6] : memref<1x16x32xf32, #tpu.memory_space<vmem>>, vector<1x16x32xf32>
    %6 = vector.shape_cast %5 : vector<1x16x32xf32> to vector<16x32xf32>
    %7 = vector.shape_cast %4 : vector<16x32xf32> to vector<1x16x32xf32>
    tpu.vector_store %arg3[%c0_4, %c0_5, %c0_6], %7 {strides = array<i32>} : memref<1x16x32xf32, #tpu.memory_space<vmem>>, vector<1x16x32xf32>,
    %c0_7 = arith.constant 0 : index
    %c0_8 = arith.constant 0 : index
    %c0_9 = arith.constant 0 : index
    %8 = vector.load %arg4[%c0_7, %c0_8, %c0_9] : memref<1x16x32xf32, #tpu.memory_space<vmem>>, vector<1x16x32xf32>
    %9 = vector.shape_cast %8 : vector<1x16x32xf32> to vector<16x32xf32>
    %10 = vector.shape_cast %3 : vector<16x32xf32> to vector<1x16x32xf32>
    tpu.vector_store %arg4[%c0_7, %c0_8, %c0_9], %10 {strides = array<i32>} : memref<1x16x32xf32, #tpu.memory_space<vmem>>, vector<1x16x32xf32>,
    return
  }
  func.func @transform_0(%arg0: i32) -> (i32, i32, i32) {
    %c0_i32 = arith.constant 0 : i32
    %c0_i32_0 = arith.constant 0 : i32
    %c0_i32_1 = arith.constant 0 : i32
    return %arg0, %c0_i32, %c0_i32_0 : i32, i32, i32
  }
  func.func @transform_1(%arg0: i32) -> (i32, i32) {
    %c0_i32 = arith.constant 0 : i32
    %c0_i32_0 = arith.constant 0 : i32
    %c0_i32_1 = arith.constant 0 : i32
    return %c0_i32, %c0_i32_0 : i32, i32
  }
  func.func @transform_2(%arg0: i32) -> (i32, i32, i32) {
    %c0_i32 = arith.constant 0 : i32
    %c0_i32_0 = arith.constant 0 : i32
    %c0_i32_1 = arith.constant 0 : i32
    return %arg0, %c0_i32, %c0_i32_0 : i32, i32, i32
  }
  func.func @transform_3(%arg0: i32) -> (i32, i32, i32) {
    %c0_i32 = arith.constant 0 : i32
    %c0_i32_0 = arith.constant 0 : i32
    %c0_i32_1 = arith.constant 0 : i32
    return %arg0, %c0_i32, %c0_i32_0 : i32, i32, i32
  }
}

module attributes {stable_mosaic.version = 11 : i64} {
  func.func @_linear2d_kernel(%arg0: i32, %arg1: i32, %arg2: memref<32x96xbf16, #tpu.memory_space<vmem>>, %arg3: memref<96x4xbf16, #tpu.memory_space<vmem>>, %arg4: memref<32x4xf32, #tpu.memory_space<vmem>>) attributes {dimension_semantics = [#tpu.dimension_semantics<parallel>, #tpu.dimension_semantics<parallel>], iteration_bounds = array<i64: 1, 1>, scalar_prefetch = 0 : i64, scratch_operands = 0 : i64, tpu.core_type = #tpu.core_type<tc>, window_params = [{transform_indices = @transform_0, window_bounds = array<i64: 32, 96>}, {transform_indices = @transform_1, window_bounds = array<i64: 96, 4>}, {transform_indices = @transform_2, window_bounds = array<i64: 32, 4>}]} {
    %c0 = arith.constant 0 : index
    %c0_0 = arith.constant 0 : index
    %0 = vector.load %arg2[%c0, %c0_0] : memref<32x96xbf16, #tpu.memory_space<vmem>>, vector<32x96xbf16>
    %c0_1 = arith.constant 0 : index
    %c0_2 = arith.constant 0 : index
    %1 = vector.load %arg3[%c0_1, %c0_2] : memref<96x4xbf16, #tpu.memory_space<vmem>>, vector<96x4xbf16>
    %cst = arith.constant dense<0.000000e+00> : vector<32x4xf32>
    %2 = tpu.matmul %0, %1, %cst {dimension_numbers = #tpu.dot_dimension_numbers<[1], [0], [0], [1], [0, 0, 1, 1], [], []>} : vector<32x96xbf16>, vector<96x4xbf16>, vector<32x4xf32> -> vector<32x4xf32>
    %c0_3 = arith.constant 0 : index
    %c0_4 = arith.constant 0 : index
    %3 = vector.load %arg4[%c0_3, %c0_4] : memref<32x4xf32, #tpu.memory_space<vmem>>, vector<32x4xf32>
    tpu.vector_store %arg4[%c0_3, %c0_4], %2 {strides = array<i32>} : memref<32x4xf32, #tpu.memory_space<vmem>>, vector<32x4xf32>,
    return
  }
  func.func @transform_0(%arg0: i32, %arg1: i32) -> (i32, i32) {
    %c0_i32 = arith.constant 0 : i32
    %c0_i32_0 = arith.constant 0 : i32
    return %arg0, %c0_i32 : i32, i32
  }
  func.func @transform_1(%arg0: i32, %arg1: i32) -> (i32, i32) {
    %c0_i32 = arith.constant 0 : i32
    %c0_i32_0 = arith.constant 0 : i32
    return %c0_i32, %arg1 : i32, i32
  }
  func.func @transform_2(%arg0: i32, %arg1: i32) -> (i32, i32) {
    %c0_i32 = arith.constant 0 : i32
    return %arg0, %arg1 : i32, i32
  }
}

module attributes {stable_mosaic.version = 11 : i64} {
  func.func @_linear2d_kernel(%arg0: i32, %arg1: i32, %arg2: memref<16x32xbf16, #tpu.memory_space<vmem>>, %arg3: memref<32x4xbf16, #tpu.memory_space<vmem>>, %arg4: memref<1x4xf32, #tpu.memory_space<vmem>>, %arg5: memref<16x4xf32, #tpu.memory_space<vmem>>, %arg6: memref<16x4xf32, #tpu.memory_space<vmem>>) attributes {dimension_semantics = [#tpu.dimension_semantics<parallel>, #tpu.dimension_semantics<parallel>], iteration_bounds = array<i64: 1, 1>, scalar_prefetch = 0 : i64, scratch_operands = 0 : i64, tpu.core_type = #tpu.core_type<tc>, window_params = [{transform_indices = @transform_0, window_bounds = array<i64: 16, 32>}, {transform_indices = @transform_1, window_bounds = array<i64: 32, 4>}, {transform_indices = @transform_2, window_bounds = array<i64: 1, 4>}, {transform_indices = @transform_3, window_bounds = array<i64: 16, 4>}, {transform_indices = @transform_4, window_bounds = array<i64: 16, 4>}]} {
    %c0 = arith.constant 0 : index
    %c0_0 = arith.constant 0 : index
    %0 = vector.load %arg2[%c0, %c0_0] : memref<16x32xbf16, #tpu.memory_space<vmem>>, vector<16x32xbf16>
    %c0_1 = arith.constant 0 : index
    %c0_2 = arith.constant 0 : index
    %1 = vector.load %arg3[%c0_1, %c0_2] : memref<32x4xbf16, #tpu.memory_space<vmem>>, vector<32x4xbf16>
    %cst = arith.constant dense<0.000000e+00> : vector<16x4xf32>
    %2 = tpu.matmul %0, %1, %cst {dimension_numbers = #tpu.dot_dimension_numbers<[1], [0], [0], [1], [0, 0, 1, 1], [], []>} : vector<16x32xbf16>, vector<32x4xbf16>, vector<16x4xf32> -> vector<16x4xf32>
    %c0_3 = arith.constant 0 : index
    %c0_4 = arith.constant 0 : index
    %3 = vector.load %arg4[%c0_3, %c0_4] : memref<1x4xf32, #tpu.memory_space<vmem>>, vector<1x4xf32>
    %4 = vector.broadcast %3 : vector<1x4xf32> to vector<16x4xf32>
    %5 = arith.addf %2, %4 : vector<16x4xf32>
    %c0_5 = arith.constant 0 : index
    %c0_6 = arith.constant 0 : index
    %6 = vector.load %arg5[%c0_5, %c0_6] : memref<16x4xf32, #tpu.memory_space<vmem>>, vector<16x4xf32>
    %7 = arith.addf %5, %6 : vector<16x4xf32>
    %c0_7 = arith.constant 0 : index
    %c0_8 = arith.constant 0 : index
    %8 = vector.load %arg6[%c0_7, %c0_8] : memref<16x4xf32, #tpu.memory_space<vmem>>, vector<16x4xf32>
    tpu.vector_store %arg6[%c0_7, %c0_8], %7 {strides = array<i32>} : memref<16x4xf32, #tpu.memory_space<vmem>>, vector<16x4xf32>,
    return
  }
  func.func @transform_0(%arg0: i32, %arg1: i32) -> (i32, i32) {
    %c0_i32 = arith.constant 0 : i32
    %c0_i32_0 = arith.constant 0 : i32
    return %arg0, %c0_i32 : i32, i32
  }
  func.func @transform_1(%arg0: i32, %arg1: i32) -> (i32, i32) {
    %c0_i32 = arith.constant 0 : i32
    %c0_i32_0 = arith.constant 0 : i32
    return %c0_i32, %arg1 : i32, i32
  }
  func.func @transform_2(%arg0: i32, %arg1: i32) -> (i32, i32) {
    %c0_i32 = arith.constant 0 : i32
    %c0_i32_0 = arith.constant 0 : i32
    return %c0_i32, %arg1 : i32, i32
  }
  func.func @transform_3(%arg0: i32, %arg1: i32) -> (i32, i32) {
    %c0_i32 = arith.constant 0 : i32
    return %arg0, %arg1 : i32, i32
  }
  func.func @transform_4(%arg0: i32, %arg1: i32) -> (i32, i32) {
    %c0_i32 = arith.constant 0 : i32
    return %arg0, %arg1 : i32, i32
  }
}

</mosaic_0001>

<llo_original>
// kernel: _lambda_.26
$region0: #{_lambda_.26}
  #allocation0 [shape = 'u32[]', space=smem, size = 0x4, offset = 0x4, fixed_abs, tag = 'smem constant byte address 0x4 - core index']
  #allocation1 [shape = 'u32[144,128]{1,0:T(1,128)}', space=vmem, size = 0x12000, scoped, tag = 'internal scratch']
  %s0 = inlined_call_operand.vmem [shape: bf16[32,12], index: 0, kind: input, shape index: {}]
  %s1 = inlined_call_operand.vmem [shape: bf16[12,32], index: 1, kind: input, shape index: {}]
  %s2 = inlined_call_operand.vmem [shape: f32[32,32], index: 2, kind: input, shape index: {}]
  %s3 = inlined_call_operand.vmem [shape: f32[32,32], index: 3, kind: output, shape index: {}]
  %s4 = sld [smem:[#allocation0]]
  $region22: #{_lambda_.26} parent=0
    _
  %s6 = ssub.s32 1, %s4
  %s7 = scalar_select 0, %s6, %s4
  // Predicated region
  $region2: #{_lambda_.26} parent=0 // pred_check
    _
  $region3: #{_lambda_.26} parent=0 // pred_check_branch
    %9 = sbr.rel (0) target = $region5
  $region4: #{_lambda_.26} parent=0 // pred_region
    _
  $region5: #{_lambda_.26} parent=0 // pred_fallthru
    _
  // Predicated region
  $region6: #{_lambda_.26} parent=0 // pred_check
    _
  $region7: #{_lambda_.26} parent=0 // pred_check_branch
    %11 = sbr.rel (0) target = $region9
  $region8: #{_lambda_.26} parent=0 // pred_region
    _
  $region9: #{_lambda_.26} parent=0 // pred_fallthru
    _
  // Predicated region
  $region10: #{_lambda_.26} parent=0 // pred_check
    _
  $region11: #{_lambda_.26} parent=0 // pred_check_branch
    %13 = sbr.rel (0) target = $region13
  $region12: #{_lambda_.26} parent=0 // pred_region
    _
  $region13: #{_lambda_.26} parent=0 // pred_fallthru
    _
  %v15 = vld [vmem:[%s0] sm:$0xf]
  %v16 = vld [vmem:[%s0 + $0x4] sm:$0xf]
  %v17 = vld [vmem:[%s0 + $0x8] sm:$0xf]
  %v18 = vld [vmem:[%s0 + $0xc] sm:$0xf]
  %v19 = vld [vmem:[%s1] sm:$0xf]
  %v20 = vld [vmem:[%s1 + $0x4] sm:$0x3]
  %v21 = vld [vmem:[%s2] sm:$0xff]
  %v22 = vld [vmem:[%s2 + $0x8] sm:$0xff]
  %v23 = vld [vmem:[%s2 + $0x10] sm:$0xff]
  %v24 = vld [vmem:[%s2 + $0x18] sm:$0xff]
  %v29 = vunpack.c.l.b16 %v15
  %v30 = vunpack.c.l.b16 %v16
  %v31 = vunpack.c.l.b16 %v17
  %v32 = vunpack.c.l.b16 %v18
  %v33 = vpack.c.b16 %v30, %v29
  %v34 = vpack.c.b16 %v32, %v31
  %v37 = vunpack.c.l.b16 %v19
  %v38 = vunpack.c.l.b16 %v20
  %v39 = vpack.c.b16 %v38, %v37
  %vm40 = vcmask 97280
  %v42 = vsel %vm40, %v33, 0
  %v45 = vsel %vm40, %v34, 0
  %vm47 = vcmask 1045504
  %v49 = vsel %vm47, %v39, 0
  %51 = vmatprep.subr.bf16.mxu0 0
  %52 = vmatpush1.bf16.msra.mxu0 %v49
  %53 = vmatprep.subr.bf16.mxu0 0
  %54 = vmatpush1.bf16.msra.mxu0 0
  %55 = vmatprep.subr.bf16.mxu0 0
  %56 = vmatpush1.bf16.msra.mxu0 0
  %57 = vmatprep.subr.bf16.mxu0 0
  %58 = vmatpush1.bf16.msra.mxu0 0
  %59 = vmatprep.subr.bf16.mxu0 0
  %60 = vmatpush1.bf16.msra.mxu0 0
  %61 = vmatprep.subr.bf16.mxu0 0
  %62 = vmatpush1.bf16.msra.mxu0 0
  %63 = vmatprep.subr.bf16.mxu0 0
  %64 = vmatpush1.bf16.msra.mxu0 0
  %65 = vmatprep.subr.bf16.mxu0 0
  %66 = vmatpush1.bf16.msra.mxu0 0
  %67 = vmatprep.subr.bf16.mxu0 0
  %68 = vmatpush1.bf16.msra.mxu0 0
  %69 = vmatprep.subr.bf16.mxu0 0
  %70 = vmatpush1.bf16.msra.mxu0 0
  %71 = vmatprep.subr.bf16.mxu0 0
  %72 = vmatpush1.bf16.msra.mxu0 0
  %73 = vmatprep.subr.bf16.mxu0 0
  %74 = vmatpush1.bf16.msra.mxu0 0
  %75 = vmatprep.subr.bf16.mxu0 0
  %76 = vmatpush1.bf16.msra.mxu0 0
  %77 = vmatprep.subr.bf16.mxu0 0
  %78 = vmatpush1.bf16.msra.mxu0 0
  %79 = vmatprep.subr.bf16.mxu0 0
  %80 = vmatpush1.bf16.msra.mxu0 0
  %81 = vmatprep.subr.bf16.mxu0 0
  %82 = vmatpush1.bf16.msra.mxu0 0
  %83 = vmatprep.mubr.bf16.mxu0 0
  %84 = vmatmul.mubr.bf16.gmra.mrb[0].mxu0 %v42
  %v85 = vpop.f32.mrb[0].mxu0
  %v86 = vadd.f32 %v21, %v85
  %v87 = vpop.f32.mrb[0].mxu0
  %v88 = vpop.f32.mrb[0].mxu0
  %v89 = vadd.f32 %v22, %v88
  %v90 = vpop.f32.mrb[0].mxu0
  %91 = vmatprep.mubr.bf16.mxu0 0
  %92 = vmatmul.mubr.bf16.gmra.mrb[0].mxu0 %v45
  %v93 = vpop.f32.mrb[0].mxu0
  %v94 = vadd.f32 %v23, %v93
  %v95 = vpop.f32.mrb[0].mxu0
  %v96 = vpop.f32.mrb[0].mxu0
  %v97 = vadd.f32 %v24, %v96
  %v98 = vpop.f32.mrb[0].mxu0
  %99 = vdwg.mxu0
  %vm100 = vcmask 261120
  %101 = vst.msk [vmem:[%s3] sm:$0xff] %vm100, %v86
  %102 = vst.msk [vmem:[%s3 + $0x8] sm:$0xff] %vm100, %v89
  %103 = vst.msk [vmem:[%s3 + $0x10] sm:$0xff] %vm100, %v94
  %104 = vst.msk [vmem:[%s3 + $0x18] sm:$0xff] %vm100, %v97
  // Predicated region
  $region14: #{_lambda_.26} parent=0 // pred_check
    _
  $region15: #{_lambda_.26} parent=0 // pred_check_branch
    %106 = sbr.rel (0) target = $region17
  $region16: #{_lambda_.26} parent=0 // pred_region
    _
  $region17: #{_lambda_.26} parent=0 // pred_fallthru
    _
  // Predicated region
  $region18: #{_lambda_.26} parent=0 // pred_check
    _
  $region19: #{_lambda_.26} parent=0 // pred_check_branch
    %108 = sbr.rel (0) target = $region21
  $region20: #{_lambda_.26} parent=0 // pred_region
    _
  $region21: #{_lambda_.26} parent=0 // pred_fallthru
    _

// kernel: _lambda_.27
$region0: #{_lambda_.27}
  #allocation0 [shape = 'u32[]', space=smem, size = 0x4, offset = 0x4, fixed_abs, tag = 'smem constant byte address 0x4 - core index']
  #allocation1 [shape = 'u32[144,128]{1,0:T(1,128)}', space=vmem, size = 0x12000, scoped, tag = 'internal scratch']
  %s0 = inlined_call_operand.vmem [shape: bf16[32,32], index: 0, kind: input, shape index: {}]
  %s1 = inlined_call_operand.vmem [shape: bf16[32,32], index: 1, kind: input, shape index: {}]
  %s2 = inlined_call_operand.vmem [shape: f32[1,32], index: 2, kind: input, shape index: {}]
  %s3 = inlined_call_operand.vmem [shape: f32[32,32], index: 3, kind: output, shape index: {}]
  %s4 = sld [smem:[#allocation0]]
  $region22: #{_lambda_.27} parent=0
    _
  %s6 = ssub.s32 1, %s4
  %s7 = scalar_select 0, %s6, %s4
  // Predicated region
  $region2: #{_lambda_.27} parent=0 // pred_check
    _
  $region3: #{_lambda_.27} parent=0 // pred_check_branch
    %9 = sbr.rel (0) target = $region5
  $region4: #{_lambda_.27} parent=0 // pred_region
    _
  $region5: #{_lambda_.27} parent=0 // pred_fallthru
    _
  // Predicated region
  $region6: #{_lambda_.27} parent=0 // pred_check
    _
  $region7: #{_lambda_.27} parent=0 // pred_check_branch
    %11 = sbr.rel (0) target = $region9
  $region8: #{_lambda_.27} parent=0 // pred_region
    _
  $region9: #{_lambda_.27} parent=0 // pred_fallthru
    _
  // Predicated region
  $region10: #{_lambda_.27} parent=0 // pred_check
    _
  $region11: #{_lambda_.27} parent=0 // pred_check_branch
    %13 = sbr.rel (0) target = $region13
  $region12: #{_lambda_.27} parent=0 // pred_region
    _
  $region13: #{_lambda_.27} parent=0 // pred_fallthru
    _
  %v15 = vld [vmem:[%s0] sm:$0xf]
  %v16 = vld [vmem:[%s0 + $0x4] sm:$0xf]
  %v17 = vld [vmem:[%s0 + $0x8] sm:$0xf]
  %v18 = vld [vmem:[%s0 + $0xc] sm:$0xf]
  %v19 = vld [vmem:[%s1] sm:$0xf]
  %v20 = vld [vmem:[%s1 + $0x4] sm:$0xf]
  %v21 = vld [vmem:[%s1 + $0x8] sm:$0xf]
  %v22 = vld [vmem:[%s1 + $0xc] sm:$0xf]
  %v23 = vld [vmem:[%s2] sm:$0x1]
  %v25 = vlaneseq
  %v26 = vshrl.u32 %v25, 7
  %v27 = vsub.s32 0, %v26
  %v28 = vrot.slane %v23, %v27
  %v34 = vunpack.c.l.b16 %v15
  %v35 = vunpack.c.l.b16 %v16
  %v36 = vunpack.c.l.b16 %v17
  %v37 = vunpack.c.l.b16 %v18
  %v38 = vpack.c.b16 %v35, %v34
  %v39 = vpack.c.b16 %v37, %v36
  %v44 = vunpack.c.l.b16 %v19
  %v45 = vunpack.c.l.b16 %v20
  %v46 = vunpack.c.l.b16 %v21
  %v47 = vunpack.c.l.b16 %v22
  %v48 = vpack.c.b16 %v45, %v44
  %v49 = vpack.c.b16 %v47, %v46
  %vm52 = vcmask 261120
  %v54 = vsel %vm52, %v38, 0
  %v57 = vsel %vm52, %v39, 0
  %59 = vmatprep.subr.bf16.mxu0 0
  %60 = vmatpush1.bf16.msra.mxu0 %v48
  %61 = vmatprep.subr.bf16.mxu0 0
  %62 = vmatpush1.bf16.msra.mxu0 %v49
  %63 = vmatprep.subr.bf16.mxu0 0
  %64 = vmatpush1.bf16.msra.mxu0 0
  %65 = vmatprep.subr.bf16.mxu0 0
  %66 = vmatpush1.bf16.msra.mxu0 0
  %67 = vmatprep.subr.bf16.mxu0 0
  %68 = vmatpush1.bf16.msra.mxu0 0
  %69 = vmatprep.subr.bf16.mxu0 0
  %70 = vmatpush1.bf16.msra.mxu0 0
  %71 = vmatprep.subr.bf16.mxu0 0
  %72 = vmatpush1.bf16.msra.mxu0 0
  %73 = vmatprep.subr.bf16.mxu0 0
  %74 = vmatpush1.bf16.msra.mxu0 0
  %75 = vmatprep.subr.bf16.mxu0 0
  %76 = vmatpush1.bf16.msra.mxu0 0
  %77 = vmatprep.subr.bf16.mxu0 0
  %78 = vmatpush1.bf16.msra.mxu0 0
  %79 = vmatprep.subr.bf16.mxu0 0
  %80 = vmatpush1.bf16.msra.mxu0 0
  %81 = vmatprep.subr.bf16.mxu0 0
  %82 = vmatpush1.bf16.msra.mxu0 0
  %83 = vmatprep.subr.bf16.mxu0 0
  %84 = vmatpush1.bf16.msra.mxu0 0
  %85 = vmatprep.subr.bf16.mxu0 0
  %86 = vmatpush1.bf16.msra.mxu0 0
  %87 = vmatprep.subr.bf16.mxu0 0
  %88 = vmatpush1.bf16.msra.mxu0 0
  %89 = vmatprep.subr.bf16.mxu0 0
  %90 = vmatpush1.bf16.msra.mxu0 0
  %91 = vmatprep.mubr.bf16.mxu0 0
  %92 = vmatmul.mubr.bf16.gmra.mrb[0].mxu0 %v54
  %v93 = vpop.f32.mrb[0].mxu0
  %v94 = vadd.f32 %v28, %v93
  %v95 = vpop.f32.mrb[0].mxu0
  %v96 = vpop.f32.mrb[0].mxu0
  %v97 = vadd.f32 %v28, %v96
  %v98 = vpop.f32.mrb[0].mxu0
  %99 = vmatprep.mubr.bf16.mxu0 0
  %100 = vmatmul.mubr.bf16.gmra.mrb[0].mxu0 %v57
  %v101 = vpop.f32.mrb[0].mxu0
  %v102 = vadd.f32 %v28, %v101
  %v103 = vpop.f32.mrb[0].mxu0
  %v104 = vpop.f32.mrb[0].mxu0
  %v105 = vadd.f32 %v28, %v104
  %v106 = vpop.f32.mrb[0].mxu0
  %107 = vdwg.mxu0
  %108 = vst.msk [vmem:[%s3] sm:$0xff] %vm52, %v94
  %109 = vst.msk [vmem:[%s3 + $0x8] sm:$0xff] %vm52, %v97
  %110 = vst.msk [vmem:[%s3 + $0x10] sm:$0xff] %vm52, %v102
  %111 = vst.msk [vmem:[%s3 + $0x18] sm:$0xff] %vm52, %v105
  // Predicated region
  $region14: #{_lambda_.27} parent=0 // pred_check
    _
  $region15: #{_lambda_.27} parent=0 // pred_check_branch
    %113 = sbr.rel (0) target = $region17
  $region16: #{_lambda_.27} parent=0 // pred_region
    _
  $region17: #{_lambda_.27} parent=0 // pred_fallthru
    _
  // Predicated region
  $region18: #{_lambda_.27} parent=0 // pred_check
    _
  $region19: #{_lambda_.27} parent=0 // pred_check_branch
    %115 = sbr.rel (0) target = $region21
  $region20: #{_lambda_.27} parent=0 // pred_region
    _
  $region21: #{_lambda_.27} parent=0 // pred_fallthru
    _

// kernel: reverse.9
$region0: #{reverse.9}
  %s0 = inlined_call_operand.vmem [shape: f32[2,8,4,7], index: 0, kind: input, shape index: {}]
  %s1 = inlined_call_operand.vmem [shape: f32[2,8,4,7], index: 1, kind: output, shape index: {}]
  %v2 = vlaneseq
  %v3 = vsub.s32 6, %v2
  %4 = vset.pattern.permute.xlu0 %v3
  $region1: #{reverse.9} parent=0
    #allocation0 [shape = 'u8[32768]{0}', space=vmem, size = 0x8000, scoped, tag = 'operand span for operand 0']
    #allocation1 [shape = 'u8[32768]{0}', space=vmem, size = 0x8000, scoped, tag = 'operand span for operand 1']
    // Predicated region
    $region2: #{reverse.9} parent=1 // pred_check
      _
    $region3: #{reverse.9} parent=1 // pred_check_branch
      %6 = sbr.rel (0) target = $region5
    $region4: #{reverse.9} parent=1 // pred_region
      // Predicated region
      $region6: #{reverse.9} parent=4 // pred_check
        _
      $region7: #{reverse.9} parent=4 // pred_check_branch
        %8 = sbr.rel (0) target = $region9
      $region8: #{reverse.9} parent=4 // pred_region
        // Predicated region
        $region21: #{reverse.9} parent=8 // pred_check
          _
        $region22: #{reverse.9} parent=8 // pred_check_branch
          %37 = sbr.rel (0) target = $region24
        $region23: #{reverse.9} parent=8 // pred_region
          loop: start=0, step=1, limit=1
          $region25: #{reverse.9} parent=23 // loop_pre_header
            _
          $region26: #{reverse.9} parent=23 // loop_header
            %s39 = sphi 0, %s43
            %p40 = scmp.ge.s32.totalorder %s39, 1
            %s44 = sphi %s0, %s0
            %s45 = sphi [#allocation0], [#allocation0]
          $region27: #{reverse.9} parent=23 // loop_header_branch
            %42 = sbr.rel (%p40) target = $region31
          $region28: #{reverse.9} parent=23 // loop_body
            %v46 = vld [vmem:[%s44] sm:$0xff]
            %47 = vst [vmem:[%s45] sm:$0xff] %v46
            %v48 = vld [vmem:[%s44 + $0x8] sm:$0xff]
            %49 = vst [vmem:[%s45 + $0x8] sm:$0xff] %v48
            %v50 = vld [vmem:[%s44 + $0x10] sm:$0xff]
            %51 = vst [vmem:[%s45 + $0x10] sm:$0xff] %v50
            %v52 = vld [vmem:[%s44 + $0x18] sm:$0xff]
            %53 = vst [vmem:[%s45 + $0x18] sm:$0xff] %v52
            %v54 = vld [vmem:[%s44 + $0x20] sm:$0xff]
            %55 = vst [vmem:[%s45 + $0x20] sm:$0xff] %v54
            %v56 = vld [vmem:[%s44 + $0x28] sm:$0xff]
            %57 = vst [vmem:[%s45 + $0x28] sm:$0xff] %v56
            %v58 = vld [vmem:[%s44 + $0x30] sm:$0xff]
            %59 = vst [vmem:[%s45 + $0x30] sm:$0xff] %v58
            %v60 = vld [vmem:[%s44 + $0x38] sm:$0xff]
            %61 = vst [vmem:[%s45 + $0x38] sm:$0xff] %v60
          $region29: #{reverse.9} parent=23 // loop_footer
            %s43 = sadd.s32 1, %s39
          $region30: #{reverse.9} parent=23 // loop_footer_branch
            %38 = sbr.rel target = $region26
          $region31: #{reverse.9} parent=23 // loop_exit
            _
        $region24: #{reverse.9} parent=8 // pred_fallthru
          _
        // Predicated region
        $region32: #{reverse.9} parent=8 // pred_check
          _
        $region33: #{reverse.9} parent=8 // pred_check_branch
          %63 = sbr.rel target = $region35
        $region34: #{reverse.9} parent=8 // pred_region
          _
        $region35: #{reverse.9} parent=8 // pred_fallthru
          _
      $region9: #{reverse.9} parent=4 // pred_fallthru
        _
      // Predicated region
      $region10: #{reverse.9} parent=4 // pred_check
        _
      $region11: #{reverse.9} parent=4 // pred_check_branch
        %10 = sbr.rel target = $region13
      $region12: #{reverse.9} parent=4 // pred_region
        loop: start=0, step=1, limit=1
        $region14: #{reverse.9} parent=12 // loop_pre_header
          _
        $region15: #{reverse.9} parent=12 // loop_header
          %s13 = sphi 0, %s17
          %p14 = scmp.ge.s32.totalorder %s13, 1
          %s18 = sphi %s0, %s0
          %s19 = sphi [#allocation0], [#allocation0]
        $region16: #{reverse.9} parent=12 // loop_header_branch
          %16 = sbr.rel (%p14) target = $region20
        $region17: #{reverse.9} parent=12 // loop_body
          %v20 = vld [vmem:[%s18] sm:$0xff]
          %21 = vst [vmem:[%s19] sm:$0xff] %v20
          %v22 = vld [vmem:[%s18 + $0x8] sm:$0xff]
          %23 = vst [vmem:[%s19 + $0x8] sm:$0xff] %v22
          %v24 = vld [vmem:[%s18 + $0x10] sm:$0xff]
          %25 = vst [vmem:[%s19 + $0x10] sm:$0xff] %v24
          %v26 = vld [vmem:[%s18 + $0x18] sm:$0xff]
          %27 = vst [vmem:[%s19 + $0x18] sm:$0xff] %v26
          %v28 = vld [vmem:[%s18 + $0x20] sm:$0xff]
          %29 = vst [vmem:[%s19 + $0x20] sm:$0xff] %v28
          %v30 = vld [vmem:[%s18 + $0x28] sm:$0xff]
          %31 = vst [vmem:[%s19 + $0x28] sm:$0xff] %v30
          %v32 = vld [vmem:[%s18 + $0x30] sm:$0xff]
          %33 = vst [vmem:[%s19 + $0x30] sm:$0xff] %v32
          %v34 = vld [vmem:[%s18 + $0x38] sm:$0xff]
          %35 = vst [vmem:[%s19 + $0x38] sm:$0xff] %v34
        $region18: #{reverse.9} parent=12 // loop_footer
          %s17 = sadd.s32 1, %s13
        $region19: #{reverse.9} parent=12 // loop_footer_branch
          %12 = sbr.rel target = $region15
        $region20: #{reverse.9} parent=12 // loop_exit
          _
      $region13: #{reverse.9} parent=4 // pred_fallthru
        _
    $region5: #{reverse.9} parent=1 // pred_fallthru
      _
    %64 = vnop
    %v65 = vld [vmem:[#allocation0] sm:$0xff]
    %66 = vperm.xlu0 %4, %v65
    %v67 = vpop.permute.xlu0 %66
    %68 = vst [vmem:[#allocation1] sm:$0xff] %v67
    %s69 = scalar_lea.vmem [#allocation1], 8
    %s70 = scalar_lea.vmem [#allocation0], 8
    %v71 = vld [vmem:[%s70] sm:$0xff]
    %72 = vperm.xlu0 %4, %v71
    %v73 = vpop.permute.xlu0 %72
    %74 = vst [vmem:[%s69] sm:$0xff] %v73
    %s75 = scalar_lea.vmem [#allocation1], 16
    %s76 = scalar_lea.vmem [#allocation0], 16
    %v77 = vld [vmem:[%s76] sm:$0xff]
    %78 = vperm.xlu0 %4, %v77
    %v79 = vpop.permute.xlu0 %78
    %80 = vst [vmem:[%s75] sm:$0xff] %v79
    %s81 = scalar_lea.vmem [#allocation1], 24
    %s82 = scalar_lea.vmem [#allocation0], 24
    %v83 = vld [vmem:[%s82] sm:$0xff]
    %84 = vperm.xlu0 %4, %v83
    %v85 = vpop.permute.xlu0 %84
    %86 = vst [vmem:[%s81] sm:$0xff] %v85
    %s87 = scalar_lea.vmem [#allocation1], 32
    %s88 = scalar_lea.vmem [#allocation0], 32
    %v89 = vld [vmem:[%s88] sm:$0xff]
    %90 = vperm.xlu0 %4, %v89
    %v91 = vpop.permute.xlu0 %90
    %92 = vst [vmem:[%s87] sm:$0xff] %v91
    %s93 = scalar_lea.vmem [#allocation1], 40
    %s94 = scalar_lea.vmem [#allocation0], 40
    %v95 = vld [vmem:[%s94] sm:$0xff]
    %96 = vperm.xlu0 %4, %v95
    %v97 = vpop.permute.xlu0 %96
    %98 = vst [vmem:[%s93] sm:$0xff] %v97
    %s99 = scalar_lea.vmem [#allocation1], 48
    %s100 = scalar_lea.vmem [#allocation0], 48
    %v101 = vld [vmem:[%s100] sm:$0xff]
    %102 = vperm.xlu0 %4, %v101
    %v103 = vpop.permute.xlu0 %102
    %104 = vst [vmem:[%s99] sm:$0xff] %v103
    %s105 = scalar_lea.vmem [#allocation1], 56
    %s106 = scalar_lea.vmem [#allocation0], 56
    %v107 = vld [vmem:[%s106] sm:$0xff]
    %108 = vperm.xlu0 %4, %v107
    %v109 = vpop.permute.xlu0 %108
    %110 = vst [vmem:[%s105] sm:$0xff] %v109
    // Predicated region
    $region36: #{reverse.9} parent=1 // pred_check
      _
    $region37: #{reverse.9} parent=1 // pred_check_branch
      %112 = sbr.rel (0) target = $region39
    $region38: #{reverse.9} parent=1 // pred_region
      // Predicated region
      $region40: #{reverse.9} parent=38 // pred_check
        _
      $region41: #{reverse.9} parent=38 // pred_check_branch
        %114 = sbr.rel (0) target = $region43
      $region42: #{reverse.9} parent=38 // pred_region
        // Predicated region
        $region55: #{reverse.9} parent=42 // pred_check
          _
        $region56: #{reverse.9} parent=42 // pred_check_branch
          %143 = sbr.rel (0) target = $region58
        $region57: #{reverse.9} parent=42 // pred_region
          loop: start=0, step=1, limit=1
          $region59: #{reverse.9} parent=57 // loop_pre_header
            _
          $region60: #{reverse.9} parent=57 // loop_header
            %s145 = sphi 0, %s149
            %p146 = scmp.ge.s32.totalorder %s145, 1
            %s150 = sphi [#allocation1], [#allocation1]
            %s151 = sphi %s1, %s1
          $region61: #{reverse.9} parent=57 // loop_header_branch
            %148 = sbr.rel (%p146) target = $region65
          $region62: #{reverse.9} parent=57 // loop_body
            %v152 = vld [vmem:[%s150] sm:$0xff]
            %153 = vst [vmem:[%s151] sm:$0xff] %v152
            %v154 = vld [vmem:[%s150 + $0x8] sm:$0xff]
            %155 = vst [vmem:[%s151 + $0x8] sm:$0xff] %v154
            %v156 = vld [vmem:[%s150 + $0x10] sm:$0xff]
            %157 = vst [vmem:[%s151 + $0x10] sm:$0xff] %v156
            %v158 = vld [vmem:[%s150 + $0x18] sm:$0xff]
            %159 = vst [vmem:[%s151 + $0x18] sm:$0xff] %v158
            %v160 = vld [vmem:[%s150 + $0x20] sm:$0xff]
            %161 = vst [vmem:[%s151 + $0x20] sm:$0xff] %v160
            %v162 = vld [vmem:[%s150 + $0x28] sm:$0xff]
            %163 = vst [vmem:[%s151 + $0x28] sm:$0xff] %v162
            %v164 = vld [vmem:[%s150 + $0x30] sm:$0xff]
            %165 = vst [vmem:[%s151 + $0x30] sm:$0xff] %v164
            %v166 = vld [vmem:[%s150 + $0x38] sm:$0xff]
            %167 = vst [vmem:[%s151 + $0x38] sm:$0xff] %v166
          $region63: #{reverse.9} parent=57 // loop_footer
            %s149 = sadd.s32 1, %s145
          $region64: #{reverse.9} parent=57 // loop_footer_branch
            %144 = sbr.rel target = $region60
          $region65: #{reverse.9} parent=57 // loop_exit
            _
        $region58: #{reverse.9} parent=42 // pred_fallthru
          _
        // Predicated region
        $region66: #{reverse.9} parent=42 // pred_check
          _
        $region67: #{reverse.9} parent=42 // pred_check_branch
          %169 = sbr.rel target = $region69
        $region68: #{reverse.9} parent=42 // pred_region
          _
        $region69: #{reverse.9} parent=42 // pred_fallthru
          _
      $region43: #{reverse.9} parent=38 // pred_fallthru
        _
      // Predicated region
      $region44: #{reverse.9} parent=38 // pred_check
        _
      $region45: #{reverse.9} parent=38 // pred_check_branch
        %116 = sbr.rel target = $region47
      $region46: #{reverse.9} parent=38 // pred_region
        loop: start=0, step=1, limit=1
        $region48: #{reverse.9} parent=46 // loop_pre_header
          _
        $region49: #{reverse.9} parent=46 // loop_header
          %s119 = sphi 0, %s123
          %p120 = scmp.ge.s32.totalorder %s119, 1
          %s124 = sphi [#allocation1], [#allocation1]
          %s125 = sphi %s1, %s1
        $region50: #{reverse.9} parent=46 // loop_header_branch
          %122 = sbr.rel (%p120) target = $region54
        $region51: #{reverse.9} parent=46 // loop_body
          %v126 = vld [vmem:[%s124] sm:$0xff]
          %127 = vst [vmem:[%s125] sm:$0xff] %v126
          %v128 = vld [vmem:[%s124 + $0x8] sm:$0xff]
          %129 = vst [vmem:[%s125 + $0x8] sm:$0xff] %v128
          %v130 = vld [vmem:[%s124 + $0x10] sm:$0xff]
          %131 = vst [vmem:[%s125 + $0x10] sm:$0xff] %v130
          %v132 = vld [vmem:[%s124 + $0x18] sm:$0xff]
          %133 = vst [vmem:[%s125 + $0x18] sm:$0xff] %v132
          %v134 = vld [vmem:[%s124 + $0x20] sm:$0xff]
          %135 = vst [vmem:[%s125 + $0x20] sm:$0xff] %v134
          %v136 = vld [vmem:[%s124 + $0x28] sm:$0xff]
          %137 = vst [vmem:[%s125 + $0x28] sm:$0xff] %v136
          %v138 = vld [vmem:[%s124 + $0x30] sm:$0xff]
          %139 = vst [vmem:[%s125 + $0x30] sm:$0xff] %v138
          %v140 = vld [vmem:[%s124 + $0x38] sm:$0xff]
          %141 = vst [vmem:[%s125 + $0x38] sm:$0xff] %v140
        $region52: #{reverse.9} parent=46 // loop_footer
          %s123 = sadd.s32 1, %s119
        $region53: #{reverse.9} parent=46 // loop_footer_branch
          %118 = sbr.rel target = $region49
        $region54: #{reverse.9} parent=46 // loop_exit
          _
      $region47: #{reverse.9} parent=38 // pred_fallthru
        _
    $region39: #{reverse.9} parent=1 // pred_fallthru
      _
    %170 = vnop

// kernel: _lambda_.28
$region0: #{_lambda_.28}
  #allocation0 [shape = 'u32[]', space=smem, size = 0x4, offset = 0x4, fixed_abs, tag = 'smem constant byte address 0x4 - core index']
  #allocation1 [shape = 'u32[144,128]{1,0:T(1,128)}', space=vmem, size = 0x12000, scoped, tag = 'internal scratch']
  %s0 = inlined_call_operand.vmem [shape: bf16[32,32], index: 0, kind: input, shape index: {}]
  %s1 = inlined_call_operand.vmem [shape: bf16[32,32], index: 1, kind: input, shape index: {}]
  %s2 = inlined_call_operand.vmem [shape: f32[1,32], index: 2, kind: input, shape index: {}]
  %s3 = inlined_call_operand.vmem [shape: f32[32,32], index: 3, kind: input, shape index: {}]
  %s4 = inlined_call_operand.vmem [shape: f32[32,32], index: 4, kind: output, shape index: {}]
  %s5 = sld [smem:[#allocation0]]
  $region26: #{_lambda_.28} parent=0
    _
  %s7 = ssub.s32 1, %s5
  %s8 = scalar_select 0, %s7, %s5
  // Predicated region
  $region2: #{_lambda_.28} parent=0 // pred_check
    _
  $region3: #{_lambda_.28} parent=0 // pred_check_branch
    %10 = sbr.rel (0) target = $region5
  $region4: #{_lambda_.28} parent=0 // pred_region
    _
  $region5: #{_lambda_.28} parent=0 // pred_fallthru
    _
  // Predicated region
  $region6: #{_lambda_.28} parent=0 // pred_check
    _
  $region7: #{_lambda_.28} parent=0 // pred_check_branch
    %12 = sbr.rel (0) target = $region9
  $region8: #{_lambda_.28} parent=0 // pred_region
    _
  $region9: #{_lambda_.28} parent=0 // pred_fallthru
    _
  // Predicated region
  $region10: #{_lambda_.28} parent=0 // pred_check
    _
  $region11: #{_lambda_.28} parent=0 // pred_check_branch
    %14 = sbr.rel (0) target = $region13
  $region12: #{_lambda_.28} parent=0 // pred_region
    _
  $region13: #{_lambda_.28} parent=0 // pred_fallthru
    _
  // Predicated region
  $region14: #{_lambda_.28} parent=0 // pred_check
    _
  $region15: #{_lambda_.28} parent=0 // pred_check_branch
    %16 = sbr.rel (0) target = $region17
  $region16: #{_lambda_.28} parent=0 // pred_region
    _
  $region17: #{_lambda_.28} parent=0 // pred_fallthru
    _
  %v18 = vld [vmem:[%s0] sm:$0xf]
  %v19 = vld [vmem:[%s0 + $0x4] sm:$0xf]
  %v20 = vld [vmem:[%s0 + $0x8] sm:$0xf]
  %v21 = vld [vmem:[%s0 + $0xc] sm:$0xf]
  %v22 = vld [vmem:[%s1] sm:$0xf]
  %v23 = vld [vmem:[%s1 + $0x4] sm:$0xf]
  %v24 = vld [vmem:[%s1 + $0x8] sm:$0xf]
  %v25 = vld [vmem:[%s1 + $0xc] sm:$0xf]
  %v26 = vld [vmem:[%s2] sm:$0x1]
  %v28 = vlaneseq
  %v29 = vshrl.u32 %v28, 7
  %v30 = vsub.s32 0, %v29
  %v31 = vrot.slane %v26, %v30
  %v37 = vunpack.c.l.b16 %v18
  %v38 = vunpack.c.l.b16 %v19
  %v39 = vunpack.c.l.b16 %v20
  %v40 = vunpack.c.l.b16 %v21
  %v41 = vpack.c.b16 %v38, %v37
  %v42 = vpack.c.b16 %v40, %v39
  %v47 = vunpack.c.l.b16 %v22
  %v48 = vunpack.c.l.b16 %v23
  %v49 = vunpack.c.l.b16 %v24
  %v50 = vunpack.c.l.b16 %v25
  %v51 = vpack.c.b16 %v48, %v47
  %v52 = vpack.c.b16 %v50, %v49
  %vm55 = vcmask 261120
  %v57 = vsel %vm55, %v41, 0
  %v60 = vsel %vm55, %v42, 0
  %62 = vmatprep.subr.bf16.mxu0 0
  %63 = vmatpush1.bf16.msra.mxu0 %v51
  %64 = vmatprep.subr.bf16.mxu0 0
  %65 = vmatpush1.bf16.msra.mxu0 %v52
  %66 = vmatprep.subr.bf16.mxu0 0
  %67 = vmatpush1.bf16.msra.mxu0 0
  %68 = vmatprep.subr.bf16.mxu0 0
  %69 = vmatpush1.bf16.msra.mxu0 0
  %70 = vmatprep.subr.bf16.mxu0 0
  %71 = vmatpush1.bf16.msra.mxu0 0
  %72 = vmatprep.subr.bf16.mxu0 0
  %73 = vmatpush1.bf16.msra.mxu0 0
  %74 = vmatprep.subr.bf16.mxu0 0
  %75 = vmatpush1.bf16.msra.mxu0 0
  %76 = vmatprep.subr.bf16.mxu0 0
  %77 = vmatpush1.bf16.msra.mxu0 0
  %78 = vmatprep.subr.bf16.mxu0 0
  %79 = vmatpush1.bf16.msra.mxu0 0
  %80 = vmatprep.subr.bf16.mxu0 0
  %81 = vmatpush1.bf16.msra.mxu0 0
  %82 = vmatprep.subr.bf16.mxu0 0
  %83 = vmatpush1.bf16.msra.mxu0 0
  %84 = vmatprep.subr.bf16.mxu0 0
  %85 = vmatpush1.bf16.msra.mxu0 0
  %86 = vmatprep.subr.bf16.mxu0 0
  %87 = vmatpush1.bf16.msra.mxu0 0
  %88 = vmatprep.subr.bf16.mxu0 0
  %89 = vmatpush1.bf16.msra.mxu0 0
  %90 = vmatprep.subr.bf16.mxu0 0
  %91 = vmatpush1.bf16.msra.mxu0 0
  %92 = vmatprep.subr.bf16.mxu0 0
  %93 = vmatpush1.bf16.msra.mxu0 0
  %94 = vmatprep.mubr.bf16.mxu0 0
  %95 = vmatmul.mubr.bf16.gmra.mrb[0].mxu0 %v57
  %v96 = vpop.f32.mrb[0].mxu0
  %v97 = vadd.f32 %v31, %v96
  %v98 = vpop.f32.mrb[0].mxu0
  %v99 = vpop.f32.mrb[0].mxu0
  %v100 = vadd.f32 %v31, %v99
  %v101 = vpop.f32.mrb[0].mxu0
  %102 = vmatprep.mubr.bf16.mxu0 0
  %103 = vmatmul.mubr.bf16.gmra.mrb[0].mxu0 %v60
  %v104 = vpop.f32.mrb[0].mxu0
  %v105 = vadd.f32 %v31, %v104
  %v106 = vpop.f32.mrb[0].mxu0
  %v107 = vpop.f32.mrb[0].mxu0
  %v108 = vadd.f32 %v31, %v107
  %v109 = vpop.f32.mrb[0].mxu0
  %110 = vdwg.mxu0
  %v111 = vld [vmem:[%s3] sm:$0xff]
  %v112 = vld [vmem:[%s3 + $0x8] sm:$0xff]
  %v113 = vld [vmem:[%s3 + $0x10] sm:$0xff]
  %v114 = vld [vmem:[%s3 + $0x18] sm:$0xff]
  %v115 = vadd.f32 %v97, %v111
  %v116 = vadd.f32 %v100, %v112
  %v117 = vadd.f32 %v105, %v113
  %v118 = vadd.f32 %v108, %v114
  %119 = vst.msk [vmem:[%s4] sm:$0xff] %vm55, %v115
  %120 = vst.msk [vmem:[%s4 + $0x8] sm:$0xff] %vm55, %v116
  %121 = vst.msk [vmem:[%s4 + $0x10] sm:$0xff] %vm55, %v117
  %122 = vst.msk [vmem:[%s4 + $0x18] sm:$0xff] %vm55, %v118
  // Predicated region
  $region18: #{_lambda_.28} parent=0 // pred_check
    _
  $region19: #{_lambda_.28} parent=0 // pred_check_branch
    %124 = sbr.rel (0) target = $region21
  $region20: #{_lambda_.28} parent=0 // pred_region
    _
  $region21: #{_lambda_.28} parent=0 // pred_fallthru
    _
  // Predicated region
  $region22: #{_lambda_.28} parent=0 // pred_check
    _
  $region23: #{_lambda_.28} parent=0 // pred_check_branch
    %126 = sbr.rel (0) target = $region25
  $region24: #{_lambda_.28} parent=0 // pred_region
    _
  $region25: #{_lambda_.28} parent=0 // pred_fallthru
    _

// kernel: _lambda_.29
$region0: #{_lambda_.29}
  #allocation0 [shape = 'u32[]', space=smem, size = 0x4, offset = 0x4, fixed_abs, tag = 'smem constant byte address 0x4 - core index']
  #allocation1 [shape = 'u32[144,128]{1,0:T(1,128)}', space=vmem, size = 0x12000, scoped, tag = 'internal scratch']
  %s0 = inlined_call_operand.vmem [shape: f32[2,16,32], index: 0, kind: input, shape index: {}]
  %s1 = inlined_call_operand.vmem [shape: f32[16,16], index: 1, kind: input, shape index: {}]
  %s2 = inlined_call_operand.vmem [shape: f32[2,16,32], index: 2, kind: output, shape index: {}]
  %s3 = sld [smem:[#allocation0]]
  $region41: #{_lambda_.29} parent=0
    _
  %s5 = ssub.s32 1, %s3
  %s6 = scalar_select 0, %s5, %s3
  loop: start=0, step=1, limit=4
  $region2: #{_lambda_.29} parent=0 // loop_pre_header
    _
  $region3: #{_lambda_.29} parent=0 // loop_header
    %s8 = sphi 0, %s12
    %p9 = scmp.ge.s32.totalorder %s8, 4
    %s18 = sphi 0, %s20
    %s21 = sphi 0, %s18
    %s22 = sphi 0, %s21
    %s38 = sphi 0, %s22
    %s42 = sphi 0, %s42
    %s44 = sphi 0, %s42
    %s45 = sphi 0, %s44
    %s59 = sphi 0, %s45
    %s65 = sphi 0, %s67
    %s68 = sphi 0, %s65
    %s69 = sphi 0, %s68
    %s85 = sphi 0, %s69
  $region4: #{_lambda_.29} parent=0 // loop_header_branch
    %11 = sbr.rel (%p9) target = $region8
  $region5: #{_lambda_.29} parent=0 // loop_body
    %s13 = ssub.s32 %s8, 1
    %s14 = ssub.s32 %s8, 2
    %s15 = sadd.s32 %s8, 1
    %s16 = ssub.s32 %s8, %s15
    %p17 = scmp.eq.s32.totalorder %s16, 0
    %s19 = sadd.s32 %s18, 1
    %s20 = scalar_select %p17, %s18, %s19
    %p23 = pneg %p17
    %p24 = scmp.eq.s32.totalorder %s8, 1
    %p25 = por %p23, %p24
    %p26 = scmp.ne.s32.totalorder %s18, %s21
    %p27 = scmp.eq.s32.totalorder %s8, 0
    %p28 = por %p26, %p27
    %p29 = scmp.ne.s32.totalorder %s18, %s21
    %p30 = scmp.eq.s32.totalorder %s13, 1
    %p31 = por %p29, %p30
    %p32 = scmp.ne.s32.totalorder %s21, %s22
    %p33 = scmp.eq.s32.totalorder %s13, 0
    %p34 = por %p32, %p33
    %p35 = scmp.ne.s32.totalorder %s21, %s22
    %p36 = scmp.eq.s32.totalorder %s14, 1
    %p37 = por %p35, %p36
    %p39 = scmp.ne.s32.totalorder %s22, %s38
    %p40 = scmp.eq.s32.totalorder %s14, 0
    %p41 = por %p39, %p40
    %s43 = sadd.s32 %s42, 1
    %p46 = scmp.eq.s32.totalorder %s8, 1
    %p47 = scmp.ne.s32.totalorder %s42, %s44
    %p48 = scmp.eq.s32.totalorder %s8, 0
    %p49 = por %p47, %p48
    %p50 = scmp.ne.s32.totalorder %s42, %s44
    %p51 = scmp.eq.s32.totalorder %s13, 1
    %p52 = por %p50, %p51
    %p53 = scmp.ne.s32.totalorder %s44, %s45
    %p54 = scmp.eq.s32.totalorder %s13, 0
    %p55 = por %p53, %p54
    %p56 = scmp.ne.s32.totalorder %s44, %s45
    %p57 = scmp.eq.s32.totalorder %s14, 1
    %p58 = por %p56, %p57
    %p60 = scmp.ne.s32.totalorder %s45, %s59
    %p61 = scmp.eq.s32.totalorder %s14, 0
    %p62 = por %p60, %p61
    %s63 = ssub.s32 %s8, %s15
    %p64 = scmp.eq.s32.totalorder %s63, 0
    %s66 = sadd.s32 %s65, 1
    %s67 = scalar_select %p64, %s65, %s66
    %p70 = pneg %p64
    %p71 = scmp.eq.s32.totalorder %s8, 1
    %p72 = por %p70, %p71
    %p73 = scmp.ne.s32.totalorder %s65, %s68
    %p74 = scmp.eq.s32.totalorder %s8, 0
    %p75 = por %p73, %p74
    %p76 = scmp.ne.s32.totalorder %s65, %s68
    %p77 = scmp.eq.s32.totalorder %s13, 1
    %p78 = por %p76, %p77
    %p79 = scmp.ne.s32.totalorder %s68, %s69
    %p80 = scmp.eq.s32.totalorder %s13, 0
    %p81 = por %p79, %p80
    %p82 = scmp.ne.s32.totalorder %s68, %s69
    %p83 = scmp.eq.s32.totalorder %s14, 1
    %p84 = por %p82, %p83
    %p86 = scmp.ne.s32.totalorder %s69, %s85
    %p87 = scmp.eq.s32.totalorder %s14, 0
    %p88 = por %p86, %p87
    %p89 = scmp.le.s32.totalorder 1, %s8
    %p90 = scmp.lt.s32.totalorder %s8, 3
    %p91 = pnand %p89, %p90
    %p92 = pneg %p91
    // Predicated region
    $region9: #{_lambda_.29} parent=5 // pred_check
      _
    $region10: #{_lambda_.29} parent=5 // pred_check_branch
      %94 = sbr.rel (%p91) target = $region12
    $region11: #{_lambda_.29} parent=5 // pred_region
      %s95 = ssub.s32 %s8, 1
      // Predicated region
      $region13: #{_lambda_.29} parent=11 // pred_check
        %p96 = pneg %p55
      $region14: #{_lambda_.29} parent=11 // pred_check_branch
        %98 = sbr.rel (%p96) target = $region16
      $region15: #{_lambda_.29} parent=11 // pred_region
        _
      $region16: #{_lambda_.29} parent=11 // pred_fallthru
        _
    $region12: #{_lambda_.29} parent=5 // pred_fallthru
      _
    %p99 = scmp.lt.s32.totalorder %s8, 2
    // Predicated region
    $region17: #{_lambda_.29} parent=5 // pred_check
      %p100 = pneg %p99
    $region18: #{_lambda_.29} parent=5 // pred_check_branch
      %102 = sbr.rel (%p100) target = $region20
    $region19: #{_lambda_.29} parent=5 // pred_region
      // Predicated region
      $region21: #{_lambda_.29} parent=19 // pred_check
        %p103 = pneg %p28
      $region22: #{_lambda_.29} parent=19 // pred_check_branch
        %105 = sbr.rel (%p103) target = $region24
      $region23: #{_lambda_.29} parent=19 // pred_region
        %p106 = scmp.lt.s32.totalorder %s8, 1
        %s107 = scalar_select %p106, %s8, 1
        %s108 = smul.addr %s107, 2
        %s109 = smul.addr %s108, 8
        %s110 = scalar_lea.vmem %s0, %s109
      $region24: #{_lambda_.29} parent=19 // pred_fallthru
        _
    $region20: #{_lambda_.29} parent=5 // pred_fallthru
      _
    %p111 = scmp.le.s32.totalorder 1, %s8
    %p112 = scmp.lt.s32.totalorder %s8, 3
    %p113 = pnand %p111, %p112
    %p114 = pneg %p113
    // Predicated region
    $region25: #{_lambda_.29} parent=5 // pred_check
      _
    $region26: #{_lambda_.29} parent=5 // pred_check_branch
      %116 = sbr.rel (%p113) target = $region28
    $region27: #{_lambda_.29} parent=5 // pred_region
      %s117 = ssub.s32 %s8, 1
      %p118 = scmp.lt.s32.totalorder %s13, 1
      %s119 = scalar_select %p118, %s13, 1
      %s120 = smul.addr %s119, 2
      %s121 = smul.addr %s120, 8
      %s122 = scalar_lea.vmem %s0, %s121
      %p123 = pneg %p34
      %p124 = pneg %p31
      %p125 = pneg %p55
      %p126 = pneg %p52
      %p127 = pneg %p81
      %p128 = pneg %p78
      %p129 = scmp.lt.s32.totalorder %s13, 1
      %s130 = scalar_select %p129, %s13, 1
      %s131 = smul.addr %s130, 2
      %s132 = smul.addr %s131, 8
      %s133 = scalar_lea.vmem %s2, %s132
      %p134 = scmp.lt.s32.totalorder %s13, 1
      %s135 = scalar_select %p134, %s13, 1
      %s136 = smul.addr %s135, 2
      %s137 = smul.addr %s136, 8
      %s138 = scalar_lea.vmem %s0, %s137
      %p139 = scmp.lt.s32.totalorder %s13, 1
      %s140 = scalar_select %p139, %s13, 1
      %s141 = smul.addr %s140, 2
      %s142 = smul.addr %s141, 8
      %s143 = scalar_lea.vmem %s2, %s142
      %v144 = vld [vmem:[%s138] sm:$0xff]
      %v145 = vld [vmem:[%s138 + $0x8] sm:$0xff]
      %v146 = vld [vmem:[%s1] sm:$0xff]
      %v147 = vld [vmem:[%s1 + $0x8] sm:$0xff]
      %vm148 = vcmask 130048
      %v150 = vsel %vm148, %v146, 0
      %v153 = vsel %vm148, %v147, 0
      %155 = vmatprep.subr.mxu0 0.0
      %156 = vmatpush1.msra.mxu0 %v144
      %157 = vmatprep.subr.mxu0 0.0
      %158 = vmatpush1.msra.mxu0 %v145
      %159 = vmatprep.subr.mxu0 0.0
      %160 = vmatpush1.msra.mxu0 0.0
      %161 = vmatprep.subr.mxu0 0.0
      %162 = vmatpush1.msra.mxu0 0.0
      %163 = vmatprep.subr.mxu0 0.0
      %164 = vmatpush1.msra.mxu0 0.0
      %165 = vmatprep.subr.mxu0 0.0
      %166 = vmatpush1.msra.mxu0 0.0
      %167 = vmatprep.subr.mxu0 0.0
      %168 = vmatpush1.msra.mxu0 0.0
      %169 = vmatprep.subr.mxu0 0.0
      %170 = vmatpush1.msra.mxu0 0.0
      %171 = vmatprep.subr.mxu0 0.0
      %172 = vmatpush1.msra.mxu0 0.0
      %173 = vmatprep.subr.mxu0 0.0
      %174 = vmatpush1.msra.mxu0 0.0
      %175 = vmatprep.subr.mxu0 0.0
      %176 = vmatpush1.msra.mxu0 0.0
      %177 = vmatprep.subr.mxu0 0.0
      %178 = vmatpush1.msra.mxu0 0.0
      %179 = vmatprep.subr.mxu0 0.0
      %180 = vmatpush1.msra.mxu0 0.0
      %181 = vmatprep.subr.mxu0 0.0
      %182 = vmatpush1.msra.mxu0 0.0
      %183 = vmatprep.subr.mxu0 0.0
      %184 = vmatpush1.msra.mxu0 0.0
      %185 = vmatprep.subr.mxu0 0.0
      %186 = vmatpush1.msra.mxu0 0.0
      %187 = vmatprep.subr.mxu0 0.0
      %188 = vmatpush1.msra.mxu0 0.0
      %189 = vmatprep.subr.mxu0 0.0
      %190 = vmatpush1.msra.mxu0 0.0
      %191 = vmatprep.subr.mxu0 0.0
      %192 = vmatpush1.msra.mxu0 0.0
      %193 = vmatprep.subr.mxu0 0.0
      %194 = vmatpush1.msra.mxu0 0.0
      %195 = vmatprep.subr.mxu0 0.0
      %196 = vmatpush1.msra.mxu0 0.0
      %197 = vmatprep.subr.mxu0 0.0
      %198 = vmatpush1.msra.mxu0 0.0
      %199 = vmatprep.subr.mxu0 0.0
      %200 = vmatpush1.msra.mxu0 0.0
      %201 = vmatprep.subr.mxu0 0.0
      %202 = vmatpush1.msra.mxu0 0.0
      %203 = vmatprep.subr.mxu0 0.0
      %204 = vmatpush1.msra.mxu0 0.0
      %205 = vmatprep.subr.mxu0 0.0
      %206 = vmatpush1.msra.mxu0 0.0
      %207 = vmatprep.subr.mxu0 0.0
      %208 = vmatpush1.msra.mxu0 0.0
      %209 = vmatprep.subr.mxu0 0.0
      %210 = vmatpush1.msra.mxu0 0.0
      %211 = vmatprep.subr.mxu0 0.0
      %212 = vmatpush1.msra.mxu0 0.0
      %213 = vmatprep.subr.mxu0 0.0
      %214 = vmatpush1.msra.mxu0 0.0
      %215 = vmatprep.subr.mxu0 0.0
      %216 = vmatpush1.msra.mxu0 0.0
      %217 = vmatprep.subr.mxu0 0.0
      %218 = vmatpush1.msra.mxu0 0.0
      %219 = vmatprep.mubr.f32.mxu0 0.0
      %220 = vmatmul.mubr.f32.gmra.mrb[0].mxu0 %v150
      %v221 = vpop.f32.mrb[0].mxu0
      %v222 = vadd.f32 0.0, %v221
      %v223 = vpop.f32.mrb[0].mxu0
      %224 = vmatprep.mubr.f32.mxu0 0.0
      %225 = vmatmul.mubr.f32.gmra.mrb[0].mxu0 %v153
      %v226 = vpop.f32.mrb[0].mxu0
      %v227 = vadd.f32 0.0, %v226
      %v228 = vpop.f32.mrb[0].mxu0
      %229 = vdwg.mxu0
      %v230 = vsub.f32 %v144, %v222
      %v231 = vsub.f32 %v145, %v227
      %vm232 = vcmask 261120
      %233 = vst.msk [vmem:[%s143] sm:$0xff] %vm232, %v230
      %234 = vst.msk [vmem:[%s143 + $0x8] sm:$0xff] %vm232, %v231
      %p235 = scmp.lt.s32.totalorder %s13, 1
      %s236 = scalar_select %p235, %s13, 1
      %s237 = smul.addr %s236, 2
      %s238 = smul.addr %s237, 8
      %s239 = scalar_lea.vmem %s2, %s238
      // Predicated region
      $region29: #{_lambda_.29} parent=27 // pred_check
        %p240 = pneg %p78
      $region30: #{_lambda_.29} parent=27 // pred_check_branch
        %242 = sbr.rel (%p240) target = $region32
      $region31: #{_lambda_.29} parent=27 // pred_region
        _
      $region32: #{_lambda_.29} parent=27 // pred_fallthru
        _
    $region28: #{_lambda_.29} parent=5 // pred_fallthru
      _
    %p243 = scmp.le.s32.totalorder 2, %s8
    // Predicated region
    $region33: #{_lambda_.29} parent=5 // pred_check
      %p244 = pneg %p243
    $region34: #{_lambda_.29} parent=5 // pred_check_branch
      %246 = sbr.rel (%p244) target = $region36
    $region35: #{_lambda_.29} parent=5 // pred_region
      %s247 = ssub.s32 %s8, 2
      // Predicated region
      $region37: #{_lambda_.29} parent=35 // pred_check
        %p248 = pneg %p84
      $region38: #{_lambda_.29} parent=35 // pred_check_branch
        %250 = sbr.rel (%p248) target = $region40
      $region39: #{_lambda_.29} parent=35 // pred_region
        %p251 = scmp.lt.s32.totalorder %s14, 1
        %s252 = scalar_select %p251, %s14, 1
        %s253 = smul.addr %s252, 2
        %s254 = smul.addr %s253, 8
        %s255 = scalar_lea.vmem %s2, %s254
      $region40: #{_lambda_.29} parent=35 // pred_fallthru
        _
    $region36: #{_lambda_.29} parent=5 // pred_fallthru
      _
  $region6: #{_lambda_.29} parent=0 // loop_footer
    %s12 = sadd.s32 1, %s8
  $region7: #{_lambda_.29} parent=0 // loop_footer_branch
    %7 = sbr.rel target = $region3
  $region8: #{_lambda_.29} parent=0 // loop_exit
    _

// kernel: _lambda_.37
$region0: #{_lambda_.37}
  #allocation0 [shape = 'u32[]', space=smem, size = 0x4, offset = 0x4, fixed_abs, tag = 'smem constant byte address 0x4 - core index']
  #allocation1 [shape = 'u32[144,128]{1,0:T(1,128)}', space=vmem, size = 0x12000, scoped, tag = 'internal scratch']
  %s0 = inlined_call_operand.vmem [shape: f32[2,16,32], index: 0, kind: input, shape index: {}]
  %s1 = inlined_call_operand.vmem [shape: f32[1,32], index: 1, kind: input, shape index: {}]
  %s2 = inlined_call_operand.vmem [shape: f32[1,32], index: 2, kind: input, shape index: {}]
  %s3 = inlined_call_operand.vmem [shape: f32[2,16,32], index: 3, kind: output, shape index: {}]
  %s4 = sld [smem:[#allocation0]]
  $region45: #{_lambda_.37} parent=0
    _
  %s6 = ssub.s32 1, %s4
  %s7 = scalar_select 0, %s6, %s4
  loop: start=0, step=1, limit=4
  $region2: #{_lambda_.37} parent=0 // loop_pre_header
    _
  $region3: #{_lambda_.37} parent=0 // loop_header
    %s9 = sphi 0, %s13
    %p10 = scmp.ge.s32.totalorder %s9, 4
    %s19 = sphi 0, %s21
    %s22 = sphi 0, %s19
    %s23 = sphi 0, %s22
    %s39 = sphi 0, %s23
    %s43 = sphi 0, %s43
    %s45 = sphi 0, %s43
    %s46 = sphi 0, %s45
    %s60 = sphi 0, %s46
    %s64 = sphi 0, %s64
    %s66 = sphi 0, %s64
    %s67 = sphi 0, %s66
    %s81 = sphi 0, %s67
    %s87 = sphi 0, %s89
    %s90 = sphi 0, %s87
    %s91 = sphi 0, %s90
    %s107 = sphi 0, %s91
  $region4: #{_lambda_.37} parent=0 // loop_header_branch
    %12 = sbr.rel (%p10) target = $region8
  $region5: #{_lambda_.37} parent=0 // loop_body
    %s14 = ssub.s32 %s9, 1
    %s15 = ssub.s32 %s9, 2
    %s16 = sadd.s32 %s9, 1
    %s17 = ssub.s32 %s9, %s16
    %p18 = scmp.eq.s32.totalorder %s17, 0
    %s20 = sadd.s32 %s19, 1
    %s21 = scalar_select %p18, %s19, %s20
    %p24 = pneg %p18
    %p25 = scmp.eq.s32.totalorder %s9, 1
    %p26 = por %p24, %p25
    %p27 = scmp.ne.s32.totalorder %s19, %s22
    %p28 = scmp.eq.s32.totalorder %s9, 0
    %p29 = por %p27, %p28
    %p30 = scmp.ne.s32.totalorder %s19, %s22
    %p31 = scmp.eq.s32.totalorder %s14, 1
    %p32 = por %p30, %p31
    %p33 = scmp.ne.s32.totalorder %s22, %s23
    %p34 = scmp.eq.s32.totalorder %s14, 0
    %p35 = por %p33, %p34
    %p36 = scmp.ne.s32.totalorder %s22, %s23
    %p37 = scmp.eq.s32.totalorder %s15, 1
    %p38 = por %p36, %p37
    %p40 = scmp.ne.s32.totalorder %s23, %s39
    %p41 = scmp.eq.s32.totalorder %s15, 0
    %p42 = por %p40, %p41
    %s44 = sadd.s32 %s43, 1
    %p47 = scmp.eq.s32.totalorder %s9, 1
    %p48 = scmp.ne.s32.totalorder %s43, %s45
    %p49 = scmp.eq.s32.totalorder %s9, 0
    %p50 = por %p48, %p49
    %p51 = scmp.ne.s32.totalorder %s43, %s45
    %p52 = scmp.eq.s32.totalorder %s14, 1
    %p53 = por %p51, %p52
    %p54 = scmp.ne.s32.totalorder %s45, %s46
    %p55 = scmp.eq.s32.totalorder %s14, 0
    %p56 = por %p54, %p55
    %p57 = scmp.ne.s32.totalorder %s45, %s46
    %p58 = scmp.eq.s32.totalorder %s15, 1
    %p59 = por %p57, %p58
    %p61 = scmp.ne.s32.totalorder %s46, %s60
    %p62 = scmp.eq.s32.totalorder %s15, 0
    %p63 = por %p61, %p62
    %s65 = sadd.s32 %s64, 1
    %p68 = scmp.eq.s32.totalorder %s9, 1
    %p69 = scmp.ne.s32.totalorder %s64, %s66
    %p70 = scmp.eq.s32.totalorder %s9, 0
    %p71 = por %p69, %p70
    %p72 = scmp.ne.s32.totalorder %s64, %s66
    %p73 = scmp.eq.s32.totalorder %s14, 1
    %p74 = por %p72, %p73
    %p75 = scmp.ne.s32.totalorder %s66, %s67
    %p76 = scmp.eq.s32.totalorder %s14, 0
    %p77 = por %p75, %p76
    %p78 = scmp.ne.s32.totalorder %s66, %s67
    %p79 = scmp.eq.s32.totalorder %s15, 1
    %p80 = por %p78, %p79
    %p82 = scmp.ne.s32.totalorder %s67, %s81
    %p83 = scmp.eq.s32.totalorder %s15, 0
    %p84 = por %p82, %p83
    %s85 = ssub.s32 %s9, %s16
    %p86 = scmp.eq.s32.totalorder %s85, 0
    %s88 = sadd.s32 %s87, 1
    %s89 = scalar_select %p86, %s87, %s88
    %p92 = pneg %p86
    %p93 = scmp.eq.s32.totalorder %s9, 1
    %p94 = por %p92, %p93
    %p95 = scmp.ne.s32.totalorder %s87, %s90
    %p96 = scmp.eq.s32.totalorder %s9, 0
    %p97 = por %p95, %p96
    %p98 = scmp.ne.s32.totalorder %s87, %s90
    %p99 = scmp.eq.s32.totalorder %s14, 1
    %p100 = por %p98, %p99
    %p101 = scmp.ne.s32.totalorder %s90, %s91
    %p102 = scmp.eq.s32.totalorder %s14, 0
    %p103 = por %p101, %p102
    %p104 = scmp.ne.s32.totalorder %s90, %s91
    %p105 = scmp.eq.s32.totalorder %s15, 1
    %p106 = por %p104, %p105
    %p108 = scmp.ne.s32.totalorder %s91, %s107
    %p109 = scmp.eq.s32.totalorder %s15, 0
    %p110 = por %p108, %p109
    %p111 = scmp.le.s32.totalorder 1, %s9
    %p112 = scmp.lt.s32.totalorder %s9, 3
    %p113 = pnand %p111, %p112
    %p114 = pneg %p113
    // Predicated region
    $region9: #{_lambda_.37} parent=5 // pred_check
      _
    $region10: #{_lambda_.37} parent=5 // pred_check_branch
      %116 = sbr.rel (%p113) target = $region12
    $region11: #{_lambda_.37} parent=5 // pred_region
      %s117 = ssub.s32 %s9, 1
      // Predicated region
      $region13: #{_lambda_.37} parent=11 // pred_check
        %p118 = pneg %p56
      $region14: #{_lambda_.37} parent=11 // pred_check_branch
        %120 = sbr.rel (%p118) target = $region16
      $region15: #{_lambda_.37} parent=11 // pred_region
        _
      $region16: #{_lambda_.37} parent=11 // pred_fallthru
        _
      // Predicated region
      $region17: #{_lambda_.37} parent=11 // pred_check
        %p121 = pneg %p77
      $region18: #{_lambda_.37} parent=11 // pred_check_branch
        %123 = sbr.rel (%p121) target = $region20
      $region19: #{_lambda_.37} parent=11 // pred_region
        _
      $region20: #{_lambda_.37} parent=11 // pred_fallthru
        _
    $region12: #{_lambda_.37} parent=5 // pred_fallthru
      _
    %p124 = scmp.lt.s32.totalorder %s9, 2
    // Predicated region
    $region21: #{_lambda_.37} parent=5 // pred_check
      %p125 = pneg %p124
    $region22: #{_lambda_.37} parent=5 // pred_check_branch
      %127 = sbr.rel (%p125) target = $region24
    $region23: #{_lambda_.37} parent=5 // pred_region
      // Predicated region
      $region25: #{_lambda_.37} parent=23 // pred_check
        %p128 = pneg %p29
      $region26: #{_lambda_.37} parent=23 // pred_check_branch
        %130 = sbr.rel (%p128) target = $region28
      $region27: #{_lambda_.37} parent=23 // pred_region
        %p131 = scmp.lt.s32.totalorder %s9, 1
        %s132 = scalar_select %p131, %s9, 1
        %s133 = smul.addr %s132, 2
        %s134 = smul.addr %s133, 8
        %s135 = scalar_lea.vmem %s0, %s134
      $region28: #{_lambda_.37} parent=23 // pred_fallthru
        _
    $region24: #{_lambda_.37} parent=5 // pred_fallthru
      _
    %p136 = scmp.le.s32.totalorder 1, %s9
    %p137 = scmp.lt.s32.totalorder %s9, 3
    %p138 = pnand %p136, %p137
    %p139 = pneg %p138
    // Predicated region
    $region29: #{_lambda_.37} parent=5 // pred_check
      _
    $region30: #{_lambda_.37} parent=5 // pred_check_branch
      %141 = sbr.rel (%p138) target = $region32
    $region31: #{_lambda_.37} parent=5 // pred_region
      %s142 = ssub.s32 %s9, 1
      %p143 = scmp.lt.s32.totalorder %s14, 1
      %s144 = scalar_select %p143, %s14, 1
      %s145 = smul.addr %s144, 2
      %s146 = smul.addr %s145, 8
      %s147 = scalar_lea.vmem %s0, %s146
      %p148 = pneg %p35
      %p149 = pneg %p32
      %p150 = pneg %p56
      %p151 = pneg %p53
      %p152 = pneg %p77
      %p153 = pneg %p74
      %p154 = pneg %p103
      %p155 = pneg %p100
      %p156 = scmp.lt.s32.totalorder %s14, 1
      %s157 = scalar_select %p156, %s14, 1
      %s158 = smul.addr %s157, 2
      %s159 = smul.addr %s158, 8
      %s160 = scalar_lea.vmem %s3, %s159
      %p161 = scmp.lt.s32.totalorder %s14, 1
      %s162 = scalar_select %p161, %s14, 1
      %s163 = smul.addr %s162, 2
      %s164 = smul.addr %s163, 8
      %s165 = scalar_lea.vmem %s0, %s164
      %p166 = scmp.lt.s32.totalorder %s14, 1
      %s167 = scalar_select %p166, %s14, 1
      %s168 = smul.addr %s167, 2
      %s169 = smul.addr %s168, 8
      %s170 = scalar_lea.vmem %s3, %s169
      %v171 = vld [vmem:[%s165] sm:$0xff]
      %v172 = vld [vmem:[%s165 + $0x8] sm:$0xff]
      %vm173 = vcmask 261120
      %v174 = vsel %vm173, %v171, 0.0
      %175 = vadd.xlane.f32.xlu0 %v174
      %v176 = vpop.xlane.xlu0 %175
      %v177 = vsel %vm173, %v172, 0.0
      %178 = vadd.xlane.f32.xlu0 %v177
      %v179 = vpop.xlane.xlu0 %178
      %v180 = vrcp.pop 32.0
      %v181 = vmul.f32 %v176, %v180
      %v182 = vmul.f32 %v179, %v180
      %v183 = vsub.f32 %v171, %v181
      %v184 = vsub.f32 %v172, %v182
      %v185 = vmul.f32 %v183, %v183
      %v186 = vmul.f32 %v184, %v184
      %v187 = vsel %vm173, %v185, 0.0
      %188 = vadd.xlane.f32.xlu0 %v187
      %v189 = vpop.xlane.xlu0 %188
      %v190 = vsel %vm173, %v186, 0.0
      %191 = vadd.xlane.f32.xlu0 %v190
      %v192 = vpop.xlane.xlu0 %191
      %v193 = vmul.f32 %v189, %v180
      %v194 = vmul.f32 %v192, %v180
      %v195 = vadd.f32 %v193, 1e-05
      %v196 = vadd.f32 %v194, 1e-05
      %v197 = vrsqrt.pop %v195
      %v198 = vrsqrt.pop %v196
      %v199 = vmul.f32 %v183, %v197
      %v200 = vmul.f32 %v184, %v198
      %v201 = vld [vmem:[%s1] sm:$0x1]
      %v203 = vlaneseq
      %v204 = vshrl.u32 %v203, 7
      %v205 = vsub.s32 0, %v204
      %v206 = vrot.slane %v201, %v205
      %v208 = vmul.f32 %v199, %v206
      %v209 = vmul.f32 %v200, %v206
      %v210 = vld [vmem:[%s2] sm:$0x1]
      %v212 = vlaneseq
      %v213 = vshrl.u32 %v212, 7
      %v214 = vsub.s32 0, %v213
      %v215 = vrot.slane %v210, %v214
      %v217 = vadd.f32 %v208, %v215
      %v218 = vadd.f32 %v209, %v215
      %v219 = vsel %vm173, %v217, 0.0
      %v220 = vsel %vm173, %v218, 0.0
      %v221 = vadd.f32 %v219, %v220
      %v222 = vrot.slane %v221, 4
      %v223 = vadd.f32 %v221, %v222
      %v224 = vrot.slane %v223, 2
      %v225 = vadd.f32 %v223, %v224
      %v226 = vrot.slane %v225, 1
      %v227 = vadd.f32 %v225, %v226
      %v228 = vrcp.pop 16.0
      %v229 = vmul.f32 %v227, %v228
      %v230 = vsub.f32 %v217, %v229
      %v231 = vsub.f32 %v218, %v229
      %232 = vst.msk [vmem:[%s170] sm:$0xff] %vm173, %v230
      %233 = vst.msk [vmem:[%s170 + $0x8] sm:$0xff] %vm173, %v231
      %p234 = scmp.lt.s32.totalorder %s14, 1
      %s235 = scalar_select %p234, %s14, 1
      %s236 = smul.addr %s235, 2
      %s237 = smul.addr %s236, 8
      %s238 = scalar_lea.vmem %s3, %s237
      // Predicated region
      $region33: #{_lambda_.37} parent=31 // pred_check
        %p239 = pneg %p100
      $region34: #{_lambda_.37} parent=31 // pred_check_branch
        %241 = sbr.rel (%p239) target = $region36
      $region35: #{_lambda_.37} parent=31 // pred_region
        _
      $region36: #{_lambda_.37} parent=31 // pred_fallthru
        _
    $region32: #{_lambda_.37} parent=5 // pred_fallthru
      _
    %p242 = scmp.le.s32.totalorder 2, %s9
    // Predicated region
    $region37: #{_lambda_.37} parent=5 // pred_check
      %p243 = pneg %p242
    $region38: #{_lambda_.37} parent=5 // pred_check_branch
      %245 = sbr.rel (%p243) target = $region40
    $region39: #{_lambda_.37} parent=5 // pred_region
      %s246 = ssub.s32 %s9, 2
      // Predicated region
      $region41: #{_lambda_.37} parent=39 // pred_check
        %p247 = pneg %p106
      $region42: #{_lambda_.37} parent=39 // pred_check_branch
        %249 = sbr.rel (%p247) target = $region44
      $region43: #{_lambda_.37} parent=39 // pred_region
        %p250 = scmp.lt.s32.totalorder %s15, 1
        %s251 = scalar_select %p250, %s15, 1
        %s252 = smul.addr %s251, 2
        %s253 = smul.addr %s252, 8
        %s254 = scalar_lea.vmem %s3, %s253
      $region44: #{_lambda_.37} parent=39 // pred_fallthru
        _
    $region40: #{_lambda_.37} parent=5 // pred_fallthru
      _
  $region6: #{_lambda_.37} parent=0 // loop_footer
    %s13 = sadd.s32 1, %s9
  $region7: #{_lambda_.37} parent=0 // loop_footer_branch
    %8 = sbr.rel target = $region3
  $region8: #{_lambda_.37} parent=0 // loop_exit
    _

// kernel: _lambda_.30
$region0: #{_lambda_.30}
  #allocation0 [shape = 'u32[]', space=smem, size = 0x4, offset = 0x4, fixed_abs, tag = 'smem constant byte address 0x4 - core index']
  #allocation1 [shape = 'u32[144,128]{1,0:T(1,128)}', space=vmem, size = 0x12000, scoped, tag = 'internal scratch']
  %s0 = inlined_call_operand.vmem [shape: f32[32,32], index: 0, kind: input, shape index: {}]
  %s1 = inlined_call_operand.vmem [shape: bf16[32,64], index: 1, kind: input, shape index: {}]
  %s2 = inlined_call_operand.vmem [shape: bf16[64,32], index: 2, kind: input, shape index: {}]
  %s3 = inlined_call_operand.vmem [shape: f32[32,32], index: 3, kind: output, shape index: {}]
  %s4 = sld [smem:[#allocation0]]
  $region22: #{_lambda_.30} parent=0
    _
  %s6 = ssub.s32 1, %s4
  %s7 = scalar_select 0, %s6, %s4
  // Predicated region
  $region2: #{_lambda_.30} parent=0 // pred_check
    _
  $region3: #{_lambda_.30} parent=0 // pred_check_branch
    %9 = sbr.rel (0) target = $region5
  $region4: #{_lambda_.30} parent=0 // pred_region
    _
  $region5: #{_lambda_.30} parent=0 // pred_fallthru
    _
  // Predicated region
  $region6: #{_lambda_.30} parent=0 // pred_check
    _
  $region7: #{_lambda_.30} parent=0 // pred_check_branch
    %11 = sbr.rel (0) target = $region9
  $region8: #{_lambda_.30} parent=0 // pred_region
    _
  $region9: #{_lambda_.30} parent=0 // pred_fallthru
    _
  // Predicated region
  $region10: #{_lambda_.30} parent=0 // pred_check
    _
  $region11: #{_lambda_.30} parent=0 // pred_check_branch
    %13 = sbr.rel (0) target = $region13
  $region12: #{_lambda_.30} parent=0 // pred_region
    _
  $region13: #{_lambda_.30} parent=0 // pred_fallthru
    _
  %v15 = vld [vmem:[%s0] sm:$0xff]
  %v16 = vld [vmem:[%s0 + $0x8] sm:$0xff]
  %v17 = vld [vmem:[%s0 + $0x10] sm:$0xff]
  %v18 = vld [vmem:[%s0 + $0x18] sm:$0xff]
  %v19 = vpack.c.bf16 %v16, %v15
  %v20 = vpack.c.bf16 %v18, %v17
  %v21 = vld [vmem:[%s1] sm:$0xf]
  %v22 = vld [vmem:[%s1 + $0x4] sm:$0xf]
  %v23 = vld [vmem:[%s1 + $0x8] sm:$0xf]
  %v24 = vld [vmem:[%s1 + $0xc] sm:$0xf]
  %v29 = vunpack.c.l.b16 %v21
  %v30 = vunpack.c.l.b16 %v22
  %v31 = vunpack.c.l.b16 %v23
  %v32 = vunpack.c.l.b16 %v24
  %v33 = vpack.c.b16 %v30, %v29
  %v34 = vpack.c.b16 %v32, %v31
  %vm37 = vcmask 261120
  %v39 = vsel %vm37, %v19, 0
  %v42 = vsel %vm37, %v20, 0
  %44 = vmatprep.subr.bf16.mxu0 0
  %45 = vmatpush1.bf16.msra.mxu0 %v33
  %46 = vmatprep.subr.bf16.mxu0 0
  %47 = vmatpush1.bf16.msra.mxu0 %v34
  %48 = vmatprep.subr.bf16.mxu0 0
  %49 = vmatpush1.bf16.msra.mxu0 0
  %50 = vmatprep.subr.bf16.mxu0 0
  %51 = vmatpush1.bf16.msra.mxu0 0
  %52 = vmatprep.subr.bf16.mxu0 0
  %53 = vmatpush1.bf16.msra.mxu0 0
  %54 = vmatprep.subr.bf16.mxu0 0
  %55 = vmatpush1.bf16.msra.mxu0 0
  %56 = vmatprep.subr.bf16.mxu0 0
  %57 = vmatpush1.bf16.msra.mxu0 0
  %58 = vmatprep.subr.bf16.mxu0 0
  %59 = vmatpush1.bf16.msra.mxu0 0
  %60 = vmatprep.subr.bf16.mxu0 0
  %61 = vmatpush1.bf16.msra.mxu0 0
  %62 = vmatprep.subr.bf16.mxu0 0
  %63 = vmatpush1.bf16.msra.mxu0 0
  %64 = vmatprep.subr.bf16.mxu0 0
  %65 = vmatpush1.bf16.msra.mxu0 0
  %66 = vmatprep.subr.bf16.mxu0 0
  %67 = vmatpush1.bf16.msra.mxu0 0
  %68 = vmatprep.subr.bf16.mxu0 0
  %69 = vmatpush1.bf16.msra.mxu0 0
  %70 = vmatprep.subr.bf16.mxu0 0
  %71 = vmatpush1.bf16.msra.mxu0 0
  %72 = vmatprep.subr.bf16.mxu0 0
  %73 = vmatpush1.bf16.msra.mxu0 0
  %74 = vmatprep.subr.bf16.mxu0 0
  %75 = vmatpush1.bf16.msra.mxu0 0
  %76 = vmatprep.mubr.bf16.mxu0 0
  %77 = vmatmul.mubr.bf16.gmra.mrb[0].mxu0 %v39
  %v78 = vpop.f32.mrb[0].mxu0
  %v79 = vadd.f32 0.0, %v78
  %v80 = vpop.f32.mrb[0].mxu0
  %v81 = vpop.f32.mrb[0].mxu0
  %v82 = vadd.f32 0.0, %v81
  %v83 = vpop.f32.mrb[0].mxu0
  %84 = vmatprep.mubr.bf16.mxu0 0
  %85 = vmatmul.mubr.bf16.gmra.mrb[0].mxu0 %v42
  %v86 = vpop.f32.mrb[0].mxu0
  %v87 = vadd.f32 0.0, %v86
  %v88 = vpop.f32.mrb[0].mxu0
  %v89 = vpop.f32.mrb[0].mxu0
  %v90 = vadd.f32 0.0, %v89
  %v91 = vpop.f32.mrb[0].mxu0
  %92 = vdwg.mxu0
  %v93 = vmul.f32 %v79, 0.5
  %v94 = vmul.f32 %v82, 0.5
  %v95 = vmul.f32 %v87, 0.5
  %v96 = vmul.f32 %v90, 0.5
  %v97 = vmul.f32 %v79, 0.044715
  %v98 = vmul.f32 %v82, 0.044715
  %v99 = vmul.f32 %v87, 0.044715
  %v100 = vmul.f32 %v90, 0.044715
  %v101 = vmul.f32 %v97, %v79
  %v102 = vmul.f32 %v98, %v82
  %v103 = vmul.f32 %v99, %v87
  %v104 = vmul.f32 %v100, %v90
  %v105 = vmul.f32 %v101, %v79
  %v106 = vmul.f32 %v102, %v82
  %v107 = vmul.f32 %v103, %v87
  %v108 = vmul.f32 %v104, %v90
  %v109 = vadd.f32 %v79, %v105
  %v110 = vadd.f32 %v82, %v106
  %v111 = vadd.f32 %v87, %v107
  %v112 = vadd.f32 %v90, %v108
  %v113 = vmul.f32 %v109, 0.7978846
  %v114 = vmul.f32 %v110, 0.7978846
  %v115 = vmul.f32 %v111, 0.7978846
  %v116 = vmul.f32 %v112, 0.7978846
  %v117 = vtanh.pop %v113
  %v118 = vtanh.pop %v114
  %v119 = vtanh.pop %v115
  %v120 = vtanh.pop %v116
  %v121 = vadd.f32 %v117, 1.0
  %v122 = vadd.f32 %v118, 1.0
  %v123 = vadd.f32 %v119, 1.0
  %v124 = vadd.f32 %v120, 1.0
  %v125 = vmul.f32 %v93, %v121
  %v126 = vmul.f32 %v94, %v122
  %v127 = vmul.f32 %v95, %v123
  %v128 = vmul.f32 %v96, %v124
  %v129 = vpack.c.bf16 %v126, %v125
  %v130 = vpack.c.bf16 %v128, %v127
  %v131 = vld [vmem:[%s2] sm:$0xf]
  %v132 = vld [vmem:[%s2 + $0x4] sm:$0xf]
  %v133 = vld [vmem:[%s2 + $0x8] sm:$0xf]
  %v134 = vld [vmem:[%s2 + $0xc] sm:$0xf]
  %v135 = vld [vmem:[%s2 + $0x10] sm:$0xf]
  %v136 = vld [vmem:[%s2 + $0x14] sm:$0xf]
  %v137 = vld [vmem:[%s2 + $0x18] sm:$0xf]
  %v138 = vld [vmem:[%s2 + $0x1c] sm:$0xf]
  %v147 = vunpack.c.l.b16 %v131
  %v148 = vunpack.c.l.b16 %v132
  %v149 = vunpack.c.l.b16 %v133
  %v150 = vunpack.c.l.b16 %v134
  %v151 = vunpack.c.l.b16 %v135
  %v152 = vunpack.c.l.b16 %v136
  %v153 = vunpack.c.l.b16 %v137
  %v154 = vunpack.c.l.b16 %v138
  %v155 = vpack.c.b16 %v148, %v147
  %v156 = vpack.c.b16 %v150, %v149
  %v157 = vpack.c.b16 %v152, %v151
  %v158 = vpack.c.b16 %v154, %v153
  %vm163 = vcmask 523264
  %v165 = vsel %vm163, %v129, 0
  %v168 = vsel %vm163, %v130, 0
  %170 = vmatprep.subr.bf16.mxu0 0
  %171 = vmatpush1.bf16.msra.mxu0 %v155
  %172 = vmatprep.subr.bf16.mxu0 0
  %173 = vmatpush1.bf16.msra.mxu0 %v156
  %174 = vmatprep.subr.bf16.mxu0 0
  %175 = vmatpush1.bf16.msra.mxu0 %v157
  %176 = vmatprep.subr.bf16.mxu0 0
  %177 = vmatpush1.bf16.msra.mxu0 %v158
  %178 = vmatprep.subr.bf16.mxu0 0
  %179 = vmatpush1.bf16.msra.mxu0 0
  %180 = vmatprep.subr.bf16.mxu0 0
  %181 = vmatpush1.bf16.msra.mxu0 0
  %182 = vmatprep.subr.bf16.mxu0 0
  %183 = vmatpush1.bf16.msra.mxu0 0
  %184 = vmatprep.subr.bf16.mxu0 0
  %185 = vmatpush1.bf16.msra.mxu0 0
  %186 = vmatprep.subr.bf16.mxu0 0
  %187 = vmatpush1.bf16.msra.mxu0 0
  %188 = vmatprep.subr.bf16.mxu0 0
  %189 = vmatpush1.bf16.msra.mxu0 0
  %190 = vmatprep.subr.bf16.mxu0 0
  %191 = vmatpush1.bf16.msra.mxu0 0
  %192 = vmatprep.subr.bf16.mxu0 0
  %193 = vmatpush1.bf16.msra.mxu0 0
  %194 = vmatprep.subr.bf16.mxu0 0
  %195 = vmatpush1.bf16.msra.mxu0 0
  %196 = vmatprep.subr.bf16.mxu0 0
  %197 = vmatpush1.bf16.msra.mxu0 0
  %198 = vmatprep.subr.bf16.mxu0 0
  %199 = vmatpush1.bf16.msra.mxu0 0
  %200 = vmatprep.subr.bf16.mxu0 0
  %201 = vmatpush1.bf16.msra.mxu0 0
  %202 = vmatprep.mubr.bf16.mxu0 0
  %203 = vmatmul.mubr.bf16.gmra.mrb[0].mxu0 %v165
  %v204 = vpop.f32.mrb[0].mxu0
  %v205 = vadd.f32 0.0, %v204
  %v206 = vpop.f32.mrb[0].mxu0
  %v207 = vpop.f32.mrb[0].mxu0
  %v208 = vadd.f32 0.0, %v207
  %v209 = vpop.f32.mrb[0].mxu0
  %210 = vmatprep.mubr.bf16.mxu0 0
  %211 = vmatmul.mubr.bf16.gmra.mrb[0].mxu0 %v168
  %v212 = vpop.f32.mrb[0].mxu0
  %v213 = vadd.f32 0.0, %v212
  %v214 = vpop.f32.mrb[0].mxu0
  %v215 = vpop.f32.mrb[0].mxu0
  %v216 = vadd.f32 0.0, %v215
  %v217 = vpop.f32.mrb[0].mxu0
  %218 = vdwg.mxu0
  %v219 = vadd.f32 %v15, %v205
  %v220 = vadd.f32 %v16, %v208
  %v221 = vadd.f32 %v17, %v213
  %v222 = vadd.f32 %v18, %v216
  %223 = vst.msk [vmem:[%s3] sm:$0xff] %vm37, %v219
  %224 = vst.msk [vmem:[%s3 + $0x8] sm:$0xff] %vm37, %v220
  %225 = vst.msk [vmem:[%s3 + $0x10] sm:$0xff] %vm37, %v221
  %226 = vst.msk [vmem:[%s3 + $0x18] sm:$0xff] %vm37, %v222
  // Predicated region
  $region14: #{_lambda_.30} parent=0 // pred_check
    _
  $region15: #{_lambda_.30} parent=0 // pred_check_branch
    %228 = sbr.rel (0) target = $region17
  $region16: #{_lambda_.30} parent=0 // pred_region
    _
  $region17: #{_lambda_.30} parent=0 // pred_fallthru
    _
  // Predicated region
  $region18: #{_lambda_.30} parent=0 // pred_check
    _
  $region19: #{_lambda_.30} parent=0 // pred_check_branch
    %230 = sbr.rel (0) target = $region21
  $region20: #{_lambda_.30} parent=0 // pred_region
    _
  $region21: #{_lambda_.30} parent=0 // pred_fallthru
    _

// kernel: _lambda_.39
$region0: #{_lambda_.39}
  #allocation0 [shape = 'u32[]', space=smem, size = 0x4, offset = 0x4, fixed_abs, tag = 'smem constant byte address 0x4 - core index']
  #allocation1 [shape = 'u32[144,128]{1,0:T(1,128)}', space=vmem, size = 0x12000, scoped, tag = 'internal scratch']
  %s0 = inlined_call_operand.vmem [shape: f32[2,16,4], index: 0, kind: input, shape index: {}]
  %s1 = inlined_call_operand.vmem [shape: f32[16,16], index: 1, kind: input, shape index: {}]
  %s2 = inlined_call_operand.vmem [shape: f32[2,16,4], index: 2, kind: output, shape index: {0}]
  %s3 = inlined_call_operand.vmem [shape: f32[2,16,4], index: 3, kind: output, shape index: {1}]
  %4 = xla_tuple %s2, %s3
  %s5 = sld [smem:[#allocation0]]
  $region49: #{_lambda_.39} parent=0
    _
  %s7 = ssub.s32 1, %s5
  %s8 = scalar_select 0, %s7, %s5
  loop: start=0, step=1, limit=4
  $region2: #{_lambda_.39} parent=0 // loop_pre_header
    _
  $region3: #{_lambda_.39} parent=0 // loop_header
    %s10 = sphi 0, %s14
    %p11 = scmp.ge.s32.totalorder %s10, 4
    %s20 = sphi 0, %s22
    %s23 = sphi 0, %s20
    %s24 = sphi 0, %s23
    %s40 = sphi 0, %s24
    %s44 = sphi 0, %s44
    %s46 = sphi 0, %s44
    %s47 = sphi 0, %s46
    %s61 = sphi 0, %s47
    %s67 = sphi 0, %s69
    %s70 = sphi 0, %s67
    %s71 = sphi 0, %s70
    %s87 = sphi 0, %s71
    %s93 = sphi 0, %s95
    %s96 = sphi 0, %s93
    %s97 = sphi 0, %s96
    %s113 = sphi 0, %s97
  $region4: #{_lambda_.39} parent=0 // loop_header_branch
    %13 = sbr.rel (%p11) target = $region8
  $region5: #{_lambda_.39} parent=0 // loop_body
    %s15 = ssub.s32 %s10, 1
    %s16 = ssub.s32 %s10, 2
    %s17 = sadd.s32 %s10, 1
    %s18 = ssub.s32 %s10, %s17
    %p19 = scmp.eq.s32.totalorder %s18, 0
    %s21 = sadd.s32 %s20, 1
    %s22 = scalar_select %p19, %s20, %s21
    %p25 = pneg %p19
    %p26 = scmp.eq.s32.totalorder %s10, 1
    %p27 = por %p25, %p26
    %p28 = scmp.ne.s32.totalorder %s20, %s23
    %p29 = scmp.eq.s32.totalorder %s10, 0
    %p30 = por %p28, %p29
    %p31 = scmp.ne.s32.totalorder %s20, %s23
    %p32 = scmp.eq.s32.totalorder %s15, 1
    %p33 = por %p31, %p32
    %p34 = scmp.ne.s32.totalorder %s23, %s24
    %p35 = scmp.eq.s32.totalorder %s15, 0
    %p36 = por %p34, %p35
    %p37 = scmp.ne.s32.totalorder %s23, %s24
    %p38 = scmp.eq.s32.totalorder %s16, 1
    %p39 = por %p37, %p38
    %p41 = scmp.ne.s32.totalorder %s24, %s40
    %p42 = scmp.eq.s32.totalorder %s16, 0
    %p43 = por %p41, %p42
    %s45 = sadd.s32 %s44, 1
    %p48 = scmp.eq.s32.totalorder %s10, 1
    %p49 = scmp.ne.s32.totalorder %s44, %s46
    %p50 = scmp.eq.s32.totalorder %s10, 0
    %p51 = por %p49, %p50
    %p52 = scmp.ne.s32.totalorder %s44, %s46
    %p53 = scmp.eq.s32.totalorder %s15, 1
    %p54 = por %p52, %p53
    %p55 = scmp.ne.s32.totalorder %s46, %s47
    %p56 = scmp.eq.s32.totalorder %s15, 0
    %p57 = por %p55, %p56
    %p58 = scmp.ne.s32.totalorder %s46, %s47
    %p59 = scmp.eq.s32.totalorder %s16, 1
    %p60 = por %p58, %p59
    %p62 = scmp.ne.s32.totalorder %s47, %s61
    %p63 = scmp.eq.s32.totalorder %s16, 0
    %p64 = por %p62, %p63
    %s65 = ssub.s32 %s10, %s17
    %p66 = scmp.eq.s32.totalorder %s65, 0
    %s68 = sadd.s32 %s67, 1
    %s69 = scalar_select %p66, %s67, %s68
    %p72 = pneg %p66
    %p73 = scmp.eq.s32.totalorder %s10, 1
    %p74 = por %p72, %p73
    %p75 = scmp.ne.s32.totalorder %s67, %s70
    %p76 = scmp.eq.s32.totalorder %s10, 0
    %p77 = por %p75, %p76
    %p78 = scmp.ne.s32.totalorder %s67, %s70
    %p79 = scmp.eq.s32.totalorder %s15, 1
    %p80 = por %p78, %p79
    %p81 = scmp.ne.s32.totalorder %s70, %s71
    %p82 = scmp.eq.s32.totalorder %s15, 0
    %p83 = por %p81, %p82
    %p84 = scmp.ne.s32.totalorder %s70, %s71
    %p85 = scmp.eq.s32.totalorder %s16, 1
    %p86 = por %p84, %p85
    %p88 = scmp.ne.s32.totalorder %s71, %s87
    %p89 = scmp.eq.s32.totalorder %s16, 0
    %p90 = por %p88, %p89
    %s91 = ssub.s32 %s10, %s17
    %p92 = scmp.eq.s32.totalorder %s91, 0
    %s94 = sadd.s32 %s93, 1
    %s95 = scalar_select %p92, %s93, %s94
    %p98 = pneg %p92
    %p99 = scmp.eq.s32.totalorder %s10, 1
    %p100 = por %p98, %p99
    %p101 = scmp.ne.s32.totalorder %s93, %s96
    %p102 = scmp.eq.s32.totalorder %s10, 0
    %p103 = por %p101, %p102
    %p104 = scmp.ne.s32.totalorder %s93, %s96
    %p105 = scmp.eq.s32.totalorder %s15, 1
    %p106 = por %p104, %p105
    %p107 = scmp.ne.s32.totalorder %s96, %s97
    %p108 = scmp.eq.s32.totalorder %s15, 0
    %p109 = por %p107, %p108
    %p110 = scmp.ne.s32.totalorder %s96, %s97
    %p111 = scmp.eq.s32.totalorder %s16, 1
    %p112 = por %p110, %p111
    %p114 = scmp.ne.s32.totalorder %s97, %s113
    %p115 = scmp.eq.s32.totalorder %s16, 0
    %p116 = por %p114, %p115
    %p117 = scmp.le.s32.totalorder 1, %s10
    %p118 = scmp.lt.s32.totalorder %s10, 3
    %p119 = pnand %p117, %p118
    %p120 = pneg %p119
    // Predicated region
    $region9: #{_lambda_.39} parent=5 // pred_check
      _
    $region10: #{_lambda_.39} parent=5 // pred_check_branch
      %122 = sbr.rel (%p119) target = $region12
    $region11: #{_lambda_.39} parent=5 // pred_region
      %s123 = ssub.s32 %s10, 1
      // Predicated region
      $region13: #{_lambda_.39} parent=11 // pred_check
        %p124 = pneg %p57
      $region14: #{_lambda_.39} parent=11 // pred_check_branch
        %126 = sbr.rel (%p124) target = $region16
      $region15: #{_lambda_.39} parent=11 // pred_region
        _
      $region16: #{_lambda_.39} parent=11 // pred_fallthru
        _
    $region12: #{_lambda_.39} parent=5 // pred_fallthru
      _
    %p127 = scmp.lt.s32.totalorder %s10, 2
    // Predicated region
    $region17: #{_lambda_.39} parent=5 // pred_check
      %p128 = pneg %p127
    $region18: #{_lambda_.39} parent=5 // pred_check_branch
      %130 = sbr.rel (%p128) target = $region20
    $region19: #{_lambda_.39} parent=5 // pred_region
      // Predicated region
      $region21: #{_lambda_.39} parent=19 // pred_check
        %p131 = pneg %p30
      $region22: #{_lambda_.39} parent=19 // pred_check_branch
        %133 = sbr.rel (%p131) target = $region24
      $region23: #{_lambda_.39} parent=19 // pred_region
        %p134 = scmp.lt.s32.totalorder %s10, 1
        %s135 = scalar_select %p134, %s10, 1
        %s136 = smul.addr %s135, 2
        %s137 = smul.addr %s136, 8
        %s138 = scalar_lea.vmem %s0, %s137
      $region24: #{_lambda_.39} parent=19 // pred_fallthru
        _
    $region20: #{_lambda_.39} parent=5 // pred_fallthru
      _
    %p139 = scmp.le.s32.totalorder 1, %s10
    %p140 = scmp.lt.s32.totalorder %s10, 3
    %p141 = pnand %p139, %p140
    %p142 = pneg %p141
    // Predicated region
    $region25: #{_lambda_.39} parent=5 // pred_check
      _
    $region26: #{_lambda_.39} parent=5 // pred_check_branch
      %144 = sbr.rel (%p141) target = $region28
    $region27: #{_lambda_.39} parent=5 // pred_region
      %s145 = ssub.s32 %s10, 1
      %p146 = scmp.lt.s32.totalorder %s15, 1
      %s147 = scalar_select %p146, %s15, 1
      %s148 = smul.addr %s147, 2
      %s149 = smul.addr %s148, 8
      %s150 = scalar_lea.vmem %s0, %s149
      %p151 = pneg %p36
      %p152 = pneg %p33
      %p153 = pneg %p57
      %p154 = pneg %p54
      %p155 = pneg %p83
      %p156 = pneg %p80
      %p157 = scmp.lt.s32.totalorder %s15, 1
      %s158 = scalar_select %p157, %s15, 1
      %s159 = smul.addr %s158, 2
      %s160 = smul.addr %s159, 8
      %s161 = scalar_lea.vmem %s2, %s160
      %p162 = pneg %p109
      %p163 = pneg %p106
      %p164 = scmp.lt.s32.totalorder %s15, 1
      %s165 = scalar_select %p164, %s15, 1
      %s166 = smul.addr %s165, 2
      %s167 = smul.addr %s166, 8
      %s168 = scalar_lea.vmem %s3, %s167
      %p169 = scmp.lt.s32.totalorder %s15, 1
      %s170 = scalar_select %p169, %s15, 1
      %s171 = smul.addr %s170, 2
      %s172 = smul.addr %s171, 8
      %s173 = scalar_lea.vmem %s0, %s172
      %p174 = scmp.lt.s32.totalorder %s15, 1
      %s175 = scalar_select %p174, %s15, 1
      %s176 = smul.addr %s175, 2
      %s177 = smul.addr %s176, 8
      %s178 = scalar_lea.vmem %s2, %s177
      %p179 = scmp.lt.s32.totalorder %s15, 1
      %s180 = scalar_select %p179, %s15, 1
      %s181 = smul.addr %s180, 2
      %s182 = smul.addr %s181, 8
      %s183 = scalar_lea.vmem %s3, %s182
      %v184 = vld [vmem:[%s173] sm:$0xff]
      %v185 = vld [vmem:[%s173 + $0x8] sm:$0xff]
      %v186 = vld [vmem:[%s1] sm:$0xff]
      %v187 = vld [vmem:[%s1 + $0x8] sm:$0xff]
      %vm188 = vcmask 130048
      %v190 = vsel %vm188, %v186, 0
      %v193 = vsel %vm188, %v187, 0
      %195 = vmatprep.subr.mxu0 0.0
      %196 = vmatpush1.msra.mxu0 %v184
      %197 = vmatprep.subr.mxu0 0.0
      %198 = vmatpush1.msra.mxu0 %v185
      %199 = vmatprep.subr.mxu0 0.0
      %200 = vmatpush1.msra.mxu0 0.0
      %201 = vmatprep.subr.mxu0 0.0
      %202 = vmatpush1.msra.mxu0 0.0
      %203 = vmatprep.subr.mxu0 0.0
      %204 = vmatpush1.msra.mxu0 0.0
      %205 = vmatprep.subr.mxu0 0.0
      %206 = vmatpush1.msra.mxu0 0.0
      %207 = vmatprep.subr.mxu0 0.0
      %208 = vmatpush1.msra.mxu0 0.0
      %209 = vmatprep.subr.mxu0 0.0
      %210 = vmatpush1.msra.mxu0 0.0
      %211 = vmatprep.subr.mxu0 0.0
      %212 = vmatpush1.msra.mxu0 0.0
      %213 = vmatprep.subr.mxu0 0.0
      %214 = vmatpush1.msra.mxu0 0.0
      %215 = vmatprep.subr.mxu0 0.0
      %216 = vmatpush1.msra.mxu0 0.0
      %217 = vmatprep.subr.mxu0 0.0
      %218 = vmatpush1.msra.mxu0 0.0
      %219 = vmatprep.subr.mxu0 0.0
      %220 = vmatpush1.msra.mxu0 0.0
      %221 = vmatprep.subr.mxu0 0.0
      %222 = vmatpush1.msra.mxu0 0.0
      %223 = vmatprep.subr.mxu0 0.0
      %224 = vmatpush1.msra.mxu0 0.0
      %225 = vmatprep.subr.mxu0 0.0
      %226 = vmatpush1.msra.mxu0 0.0
      %227 = vmatprep.subr.mxu0 0.0
      %228 = vmatpush1.msra.mxu0 0.0
      %229 = vmatprep.subr.mxu0 0.0
      %230 = vmatpush1.msra.mxu0 0.0
      %231 = vmatprep.subr.mxu0 0.0
      %232 = vmatpush1.msra.mxu0 0.0
      %233 = vmatprep.subr.mxu0 0.0
      %234 = vmatpush1.msra.mxu0 0.0
      %235 = vmatprep.subr.mxu0 0.0
      %236 = vmatpush1.msra.mxu0 0.0
      %237 = vmatprep.subr.mxu0 0.0
      %238 = vmatpush1.msra.mxu0 0.0
      %239 = vmatprep.subr.mxu0 0.0
      %240 = vmatpush1.msra.mxu0 0.0
      %241 = vmatprep.subr.mxu0 0.0
      %242 = vmatpush1.msra.mxu0 0.0
      %243 = vmatprep.subr.mxu0 0.0
      %244 = vmatpush1.msra.mxu0 0.0
      %245 = vmatprep.subr.mxu0 0.0
      %246 = vmatpush1.msra.mxu0 0.0
      %247 = vmatprep.subr.mxu0 0.0
      %248 = vmatpush1.msra.mxu0 0.0
      %249 = vmatprep.subr.mxu0 0.0
      %250 = vmatpush1.msra.mxu0 0.0
      %251 = vmatprep.subr.mxu0 0.0
      %252 = vmatpush1.msra.mxu0 0.0
      %253 = vmatprep.subr.mxu0 0.0
      %254 = vmatpush1.msra.mxu0 0.0
      %255 = vmatprep.subr.mxu0 0.0
      %256 = vmatpush1.msra.mxu0 0.0
      %257 = vmatprep.subr.mxu0 0.0
      %258 = vmatpush1.msra.mxu0 0.0
      %259 = vmatprep.mubr.f32.mxu0 0.0
      %260 = vmatmul.mubr.f32.gmra.mrb[0].mxu0 %v190
      %v261 = vpop.f32.mrb[0].mxu0
      %v262 = vadd.f32 0.0, %v261
      %v263 = vpop.f32.mrb[0].mxu0
      %264 = vmatprep.mubr.f32.mxu0 0.0
      %265 = vmatmul.mubr.f32.gmra.mrb[0].mxu0 %v193
      %v266 = vpop.f32.mrb[0].mxu0
      %v267 = vadd.f32 0.0, %v266
      %v268 = vpop.f32.mrb[0].mxu0
      %269 = vdwg.mxu0
      %v270 = vsub.f32 %v184, %v262
      %v271 = vsub.f32 %v185, %v267
      %vm272 = vcmask 31744
      %273 = vst.msk [vmem:[%s178] sm:$0xff] %vm272, %v270
      %274 = vst.msk [vmem:[%s178 + $0x8] sm:$0xff] %vm272, %v271
      %275 = vst.msk [vmem:[%s183] sm:$0xff] %vm272, %v262
      %276 = vst.msk [vmem:[%s183 + $0x8] sm:$0xff] %vm272, %v267
      %p277 = scmp.lt.s32.totalorder %s15, 1
      %s278 = scalar_select %p277, %s15, 1
      %s279 = smul.addr %s278, 2
      %s280 = smul.addr %s279, 8
      %s281 = scalar_lea.vmem %s2, %s280
      %p282 = scmp.lt.s32.totalorder %s15, 1
      %s283 = scalar_select %p282, %s15, 1
      %s284 = smul.addr %s283, 2
      %s285 = smul.addr %s284, 8
      %s286 = scalar_lea.vmem %s3, %s285
      // Predicated region
      $region29: #{_lambda_.39} parent=27 // pred_check
        %p287 = pneg %p80
      $region30: #{_lambda_.39} parent=27 // pred_check_branch
        %289 = sbr.rel (%p287) target = $region32
      $region31: #{_lambda_.39} parent=27 // pred_region
        _
      $region32: #{_lambda_.39} parent=27 // pred_fallthru
        _
      // Predicated region
      $region33: #{_lambda_.39} parent=27 // pred_check
        %p290 = pneg %p106
      $region34: #{_lambda_.39} parent=27 // pred_check_branch
        %292 = sbr.rel (%p290) target = $region36
      $region35: #{_lambda_.39} parent=27 // pred_region
        _
      $region36: #{_lambda_.39} parent=27 // pred_fallthru
        _
    $region28: #{_lambda_.39} parent=5 // pred_fallthru
      _
    %p293 = scmp.le.s32.totalorder 2, %s10
    // Predicated region
    $region37: #{_lambda_.39} parent=5 // pred_check
      %p294 = pneg %p293
    $region38: #{_lambda_.39} parent=5 // pred_check_branch
      %296 = sbr.rel (%p294) target = $region40
    $region39: #{_lambda_.39} parent=5 // pred_region
      %s297 = ssub.s32 %s10, 2
      // Predicated region
      $region41: #{_lambda_.39} parent=39 // pred_check
        %p298 = pneg %p86
      $region42: #{_lambda_.39} parent=39 // pred_check_branch
        %300 = sbr.rel (%p298) target = $region44
      $region43: #{_lambda_.39} parent=39 // pred_region
        %p301 = scmp.lt.s32.totalorder %s16, 1
        %s302 = scalar_select %p301, %s16, 1
        %s303 = smul.addr %s302, 2
        %s304 = smul.addr %s303, 8
        %s305 = scalar_lea.vmem %s2, %s304
      $region44: #{_lambda_.39} parent=39 // pred_fallthru
        _
      // Predicated region
      $region45: #{_lambda_.39} parent=39 // pred_check
        %p306 = pneg %p112
      $region46: #{_lambda_.39} parent=39 // pred_check_branch
        %308 = sbr.rel (%p306) target = $region48
      $region47: #{_lambda_.39} parent=39 // pred_region
        %p309 = scmp.lt.s32.totalorder %s16, 1
        %s310 = scalar_select %p309, %s16, 1
        %s311 = smul.addr %s310, 2
        %s312 = smul.addr %s311, 8
        %s313 = scalar_lea.vmem %s3, %s312
      $region48: #{_lambda_.39} parent=39 // pred_fallthru
        _
    $region40: #{_lambda_.39} parent=5 // pred_fallthru
      _
  $region6: #{_lambda_.39} parent=0 // loop_footer
    %s14 = sadd.s32 1, %s10
  $region7: #{_lambda_.39} parent=0 // loop_footer_branch
    %9 = sbr.rel target = $region3
  $region8: #{_lambda_.39} parent=0 // loop_exit
    _

// kernel: _lambda_.43
$region0: #{_lambda_.43}
  #allocation0 [shape = 'u32[]', space=smem, size = 0x4, offset = 0x4, fixed_abs, tag = 'smem constant byte address 0x4 - core index']
  #allocation1 [shape = 'u32[144,128]{1,0:T(1,128)}', space=vmem, size = 0x12000, scoped, tag = 'internal scratch']
  %s0 = inlined_call_operand.vmem [shape: f32[2,16,32], index: 0, kind: input, shape index: {}]
  %s1 = inlined_call_operand.vmem [shape: f32[16,16], index: 1, kind: input, shape index: {}]
  %s2 = inlined_call_operand.vmem [shape: f32[2,16,32], index: 2, kind: output, shape index: {0}]
  %s3 = inlined_call_operand.vmem [shape: f32[2,16,32], index: 3, kind: output, shape index: {1}]
  %4 = xla_tuple %s2, %s3
  %s5 = sld [smem:[#allocation0]]
  $region49: #{_lambda_.43} parent=0
    _
  %s7 = ssub.s32 1, %s5
  %s8 = scalar_select 0, %s7, %s5
  loop: start=0, step=1, limit=4
  $region2: #{_lambda_.43} parent=0 // loop_pre_header
    _
  $region3: #{_lambda_.43} parent=0 // loop_header
    %s10 = sphi 0, %s14
    %p11 = scmp.ge.s32.totalorder %s10, 4
    %s20 = sphi 0, %s22
    %s23 = sphi 0, %s20
    %s24 = sphi 0, %s23
    %s40 = sphi 0, %s24
    %s44 = sphi 0, %s44
    %s46 = sphi 0, %s44
    %s47 = sphi 0, %s46
    %s61 = sphi 0, %s47
    %s67 = sphi 0, %s69
    %s70 = sphi 0, %s67
    %s71 = sphi 0, %s70
    %s87 = sphi 0, %s71
    %s93 = sphi 0, %s95
    %s96 = sphi 0, %s93
    %s97 = sphi 0, %s96
    %s113 = sphi 0, %s97
  $region4: #{_lambda_.43} parent=0 // loop_header_branch
    %13 = sbr.rel (%p11) target = $region8
  $region5: #{_lambda_.43} parent=0 // loop_body
    %s15 = ssub.s32 %s10, 1
    %s16 = ssub.s32 %s10, 2
    %s17 = sadd.s32 %s10, 1
    %s18 = ssub.s32 %s10, %s17
    %p19 = scmp.eq.s32.totalorder %s18, 0
    %s21 = sadd.s32 %s20, 1
    %s22 = scalar_select %p19, %s20, %s21
    %p25 = pneg %p19
    %p26 = scmp.eq.s32.totalorder %s10, 1
    %p27 = por %p25, %p26
    %p28 = scmp.ne.s32.totalorder %s20, %s23
    %p29 = scmp.eq.s32.totalorder %s10, 0
    %p30 = por %p28, %p29
    %p31 = scmp.ne.s32.totalorder %s20, %s23
    %p32 = scmp.eq.s32.totalorder %s15, 1
    %p33 = por %p31, %p32
    %p34 = scmp.ne.s32.totalorder %s23, %s24
    %p35 = scmp.eq.s32.totalorder %s15, 0
    %p36 = por %p34, %p35
    %p37 = scmp.ne.s32.totalorder %s23, %s24
    %p38 = scmp.eq.s32.totalorder %s16, 1
    %p39 = por %p37, %p38
    %p41 = scmp.ne.s32.totalorder %s24, %s40
    %p42 = scmp.eq.s32.totalorder %s16, 0
    %p43 = por %p41, %p42
    %s45 = sadd.s32 %s44, 1
    %p48 = scmp.eq.s32.totalorder %s10, 1
    %p49 = scmp.ne.s32.totalorder %s44, %s46
    %p50 = scmp.eq.s32.totalorder %s10, 0
    %p51 = por %p49, %p50
    %p52 = scmp.ne.s32.totalorder %s44, %s46
    %p53 = scmp.eq.s32.totalorder %s15, 1
    %p54 = por %p52, %p53
    %p55 = scmp.ne.s32.totalorder %s46, %s47
    %p56 = scmp.eq.s32.totalorder %s15, 0
    %p57 = por %p55, %p56
    %p58 = scmp.ne.s32.totalorder %s46, %s47
    %p59 = scmp.eq.s32.totalorder %s16, 1
    %p60 = por %p58, %p59
    %p62 = scmp.ne.s32.totalorder %s47, %s61
    %p63 = scmp.eq.s32.totalorder %s16, 0
    %p64 = por %p62, %p63
    %s65 = ssub.s32 %s10, %s17
    %p66 = scmp.eq.s32.totalorder %s65, 0
    %s68 = sadd.s32 %s67, 1
    %s69 = scalar_select %p66, %s67, %s68
    %p72 = pneg %p66
    %p73 = scmp.eq.s32.totalorder %s10, 1
    %p74 = por %p72, %p73
    %p75 = scmp.ne.s32.totalorder %s67, %s70
    %p76 = scmp.eq.s32.totalorder %s10, 0
    %p77 = por %p75, %p76
    %p78 = scmp.ne.s32.totalorder %s67, %s70
    %p79 = scmp.eq.s32.totalorder %s15, 1
    %p80 = por %p78, %p79
    %p81 = scmp.ne.s32.totalorder %s70, %s71
    %p82 = scmp.eq.s32.totalorder %s15, 0
    %p83 = por %p81, %p82
    %p84 = scmp.ne.s32.totalorder %s70, %s71
    %p85 = scmp.eq.s32.totalorder %s16, 1
    %p86 = por %p84, %p85
    %p88 = scmp.ne.s32.totalorder %s71, %s87
    %p89 = scmp.eq.s32.totalorder %s16, 0
    %p90 = por %p88, %p89
    %s91 = ssub.s32 %s10, %s17
    %p92 = scmp.eq.s32.totalorder %s91, 0
    %s94 = sadd.s32 %s93, 1
    %s95 = scalar_select %p92, %s93, %s94
    %p98 = pneg %p92
    %p99 = scmp.eq.s32.totalorder %s10, 1
    %p100 = por %p98, %p99
    %p101 = scmp.ne.s32.totalorder %s93, %s96
    %p102 = scmp.eq.s32.totalorder %s10, 0
    %p103 = por %p101, %p102
    %p104 = scmp.ne.s32.totalorder %s93, %s96
    %p105 = scmp.eq.s32.totalorder %s15, 1
    %p106 = por %p104, %p105
    %p107 = scmp.ne.s32.totalorder %s96, %s97
    %p108 = scmp.eq.s32.totalorder %s15, 0
    %p109 = por %p107, %p108
    %p110 = scmp.ne.s32.totalorder %s96, %s97
    %p111 = scmp.eq.s32.totalorder %s16, 1
    %p112 = por %p110, %p111
    %p114 = scmp.ne.s32.totalorder %s97, %s113
    %p115 = scmp.eq.s32.totalorder %s16, 0
    %p116 = por %p114, %p115
    %p117 = scmp.le.s32.totalorder 1, %s10
    %p118 = scmp.lt.s32.totalorder %s10, 3
    %p119 = pnand %p117, %p118
    %p120 = pneg %p119
    // Predicated region
    $region9: #{_lambda_.43} parent=5 // pred_check
      _
    $region10: #{_lambda_.43} parent=5 // pred_check_branch
      %122 = sbr.rel (%p119) target = $region12
    $region11: #{_lambda_.43} parent=5 // pred_region
      %s123 = ssub.s32 %s10, 1
      // Predicated region
      $region13: #{_lambda_.43} parent=11 // pred_check
        %p124 = pneg %p57
      $region14: #{_lambda_.43} parent=11 // pred_check_branch
        %126 = sbr.rel (%p124) target = $region16
      $region15: #{_lambda_.43} parent=11 // pred_region
        _
      $region16: #{_lambda_.43} parent=11 // pred_fallthru
        _
    $region12: #{_lambda_.43} parent=5 // pred_fallthru
      _
    %p127 = scmp.lt.s32.totalorder %s10, 2
    // Predicated region
    $region17: #{_lambda_.43} parent=5 // pred_check
      %p128 = pneg %p127
    $region18: #{_lambda_.43} parent=5 // pred_check_branch
      %130 = sbr.rel (%p128) target = $region20
    $region19: #{_lambda_.43} parent=5 // pred_region
      // Predicated region
      $region21: #{_lambda_.43} parent=19 // pred_check
        %p131 = pneg %p30
      $region22: #{_lambda_.43} parent=19 // pred_check_branch
        %133 = sbr.rel (%p131) target = $region24
      $region23: #{_lambda_.43} parent=19 // pred_region
        %p134 = scmp.lt.s32.totalorder %s10, 1
        %s135 = scalar_select %p134, %s10, 1
        %s136 = smul.addr %s135, 2
        %s137 = smul.addr %s136, 8
        %s138 = scalar_lea.vmem %s0, %s137
      $region24: #{_lambda_.43} parent=19 // pred_fallthru
        _
    $region20: #{_lambda_.43} parent=5 // pred_fallthru
      _
    %p139 = scmp.le.s32.totalorder 1, %s10
    %p140 = scmp.lt.s32.totalorder %s10, 3
    %p141 = pnand %p139, %p140
    %p142 = pneg %p141
    // Predicated region
    $region25: #{_lambda_.43} parent=5 // pred_check
      _
    $region26: #{_lambda_.43} parent=5 // pred_check_branch
      %144 = sbr.rel (%p141) target = $region28
    $region27: #{_lambda_.43} parent=5 // pred_region
      %s145 = ssub.s32 %s10, 1
      %p146 = scmp.lt.s32.totalorder %s15, 1
      %s147 = scalar_select %p146, %s15, 1
      %s148 = smul.addr %s147, 2
      %s149 = smul.addr %s148, 8
      %s150 = scalar_lea.vmem %s0, %s149
      %p151 = pneg %p36
      %p152 = pneg %p33
      %p153 = pneg %p57
      %p154 = pneg %p54
      %p155 = pneg %p83
      %p156 = pneg %p80
      %p157 = scmp.lt.s32.totalorder %s15, 1
      %s158 = scalar_select %p157, %s15, 1
      %s159 = smul.addr %s158, 2
      %s160 = smul.addr %s159, 8
      %s161 = scalar_lea.vmem %s2, %s160
      %p162 = pneg %p109
      %p163 = pneg %p106
      %p164 = scmp.lt.s32.totalorder %s15, 1
      %s165 = scalar_select %p164, %s15, 1
      %s166 = smul.addr %s165, 2
      %s167 = smul.addr %s166, 8
      %s168 = scalar_lea.vmem %s3, %s167
      %p169 = scmp.lt.s32.totalorder %s15, 1
      %s170 = scalar_select %p169, %s15, 1
      %s171 = smul.addr %s170, 2
      %s172 = smul.addr %s171, 8
      %s173 = scalar_lea.vmem %s0, %s172
      %p174 = scmp.lt.s32.totalorder %s15, 1
      %s175 = scalar_select %p174, %s15, 1
      %s176 = smul.addr %s175, 2
      %s177 = smul.addr %s176, 8
      %s178 = scalar_lea.vmem %s2, %s177
      %p179 = scmp.lt.s32.totalorder %s15, 1
      %s180 = scalar_select %p179, %s15, 1
      %s181 = smul.addr %s180, 2
      %s182 = smul.addr %s181, 8
      %s183 = scalar_lea.vmem %s3, %s182
      %v184 = vld [vmem:[%s173] sm:$0xff]
      %v185 = vld [vmem:[%s173 + $0x8] sm:$0xff]
      %v186 = vld [vmem:[%s1] sm:$0xff]
      %v187 = vld [vmem:[%s1 + $0x8] sm:$0xff]
      %vm188 = vcmask 130048
      %v190 = vsel %vm188, %v186, 0
      %v193 = vsel %vm188, %v187, 0
      %195 = vmatprep.subr.mxu0 0.0
      %196 = vmatpush1.msra.mxu0 %v184
      %197 = vmatprep.subr.mxu0 0.0
      %198 = vmatpush1.msra.mxu0 %v185
      %199 = vmatprep.subr.mxu0 0.0
      %200 = vmatpush1.msra.mxu0 0.0
      %201 = vmatprep.subr.mxu0 0.0
      %202 = vmatpush1.msra.mxu0 0.0
      %203 = vmatprep.subr.mxu0 0.0
      %204 = vmatpush1.msra.mxu0 0.0
      %205 = vmatprep.subr.mxu0 0.0
      %206 = vmatpush1.msra.mxu0 0.0
      %207 = vmatprep.subr.mxu0 0.0
      %208 = vmatpush1.msra.mxu0 0.0
      %209 = vmatprep.subr.mxu0 0.0
      %210 = vmatpush1.msra.mxu0 0.0
      %211 = vmatprep.subr.mxu0 0.0
      %212 = vmatpush1.msra.mxu0 0.0
      %213 = vmatprep.subr.mxu0 0.0
      %214 = vmatpush1.msra.mxu0 0.0
      %215 = vmatprep.subr.mxu0 0.0
      %216 = vmatpush1.msra.mxu0 0.0
      %217 = vmatprep.subr.mxu0 0.0
      %218 = vmatpush1.msra.mxu0 0.0
      %219 = vmatprep.subr.mxu0 0.0
      %220 = vmatpush1.msra.mxu0 0.0
      %221 = vmatprep.subr.mxu0 0.0
      %222 = vmatpush1.msra.mxu0 0.0
      %223 = vmatprep.subr.mxu0 0.0
      %224 = vmatpush1.msra.mxu0 0.0
      %225 = vmatprep.subr.mxu0 0.0
      %226 = vmatpush1.msra.mxu0 0.0
      %227 = vmatprep.subr.mxu0 0.0
      %228 = vmatpush1.msra.mxu0 0.0
      %229 = vmatprep.subr.mxu0 0.0
      %230 = vmatpush1.msra.mxu0 0.0
      %231 = vmatprep.subr.mxu0 0.0
      %232 = vmatpush1.msra.mxu0 0.0
      %233 = vmatprep.subr.mxu0 0.0
      %234 = vmatpush1.msra.mxu0 0.0
      %235 = vmatprep.subr.mxu0 0.0
      %236 = vmatpush1.msra.mxu0 0.0
      %237 = vmatprep.subr.mxu0 0.0
      %238 = vmatpush1.msra.mxu0 0.0
      %239 = vmatprep.subr.mxu0 0.0
      %240 = vmatpush1.msra.mxu0 0.0
      %241 = vmatprep.subr.mxu0 0.0
      %242 = vmatpush1.msra.mxu0 0.0
      %243 = vmatprep.subr.mxu0 0.0
      %244 = vmatpush1.msra.mxu0 0.0
      %245 = vmatprep.subr.mxu0 0.0
      %246 = vmatpush1.msra.mxu0 0.0
      %247 = vmatprep.subr.mxu0 0.0
      %248 = vmatpush1.msra.mxu0 0.0
      %249 = vmatprep.subr.mxu0 0.0
      %250 = vmatpush1.msra.mxu0 0.0
      %251 = vmatprep.subr.mxu0 0.0
      %252 = vmatpush1.msra.mxu0 0.0
      %253 = vmatprep.subr.mxu0 0.0
      %254 = vmatpush1.msra.mxu0 0.0
      %255 = vmatprep.subr.mxu0 0.0
      %256 = vmatpush1.msra.mxu0 0.0
      %257 = vmatprep.subr.mxu0 0.0
      %258 = vmatpush1.msra.mxu0 0.0
      %259 = vmatprep.mubr.f32.mxu0 0.0
      %260 = vmatmul.mubr.f32.gmra.mrb[0].mxu0 %v190
      %v261 = vpop.f32.mrb[0].mxu0
      %v262 = vadd.f32 0.0, %v261
      %v263 = vpop.f32.mrb[0].mxu0
      %264 = vmatprep.mubr.f32.mxu0 0.0
      %265 = vmatmul.mubr.f32.gmra.mrb[0].mxu0 %v193
      %v266 = vpop.f32.mrb[0].mxu0
      %v267 = vadd.f32 0.0, %v266
      %v268 = vpop.f32.mrb[0].mxu0
      %269 = vdwg.mxu0
      %v270 = vsub.f32 %v184, %v262
      %v271 = vsub.f32 %v185, %v267
      %vm272 = vcmask 261120
      %273 = vst.msk [vmem:[%s178] sm:$0xff] %vm272, %v270
      %274 = vst.msk [vmem:[%s178 + $0x8] sm:$0xff] %vm272, %v271
      %275 = vst.msk [vmem:[%s183] sm:$0xff] %vm272, %v262
      %276 = vst.msk [vmem:[%s183 + $0x8] sm:$0xff] %vm272, %v267
      %p277 = scmp.lt.s32.totalorder %s15, 1
      %s278 = scalar_select %p277, %s15, 1
      %s279 = smul.addr %s278, 2
      %s280 = smul.addr %s279, 8
      %s281 = scalar_lea.vmem %s2, %s280
      %p282 = scmp.lt.s32.totalorder %s15, 1
      %s283 = scalar_select %p282, %s15, 1
      %s284 = smul.addr %s283, 2
      %s285 = smul.addr %s284, 8
      %s286 = scalar_lea.vmem %s3, %s285
      // Predicated region
      $region29: #{_lambda_.43} parent=27 // pred_check
        %p287 = pneg %p80
      $region30: #{_lambda_.43} parent=27 // pred_check_branch
        %289 = sbr.rel (%p287) target = $region32
      $region31: #{_lambda_.43} parent=27 // pred_region
        _
      $region32: #{_lambda_.43} parent=27 // pred_fallthru
        _
      // Predicated region
      $region33: #{_lambda_.43} parent=27 // pred_check
        %p290 = pneg %p106
      $region34: #{_lambda_.43} parent=27 // pred_check_branch
        %292 = sbr.rel (%p290) target = $region36
      $region35: #{_lambda_.43} parent=27 // pred_region
        _
      $region36: #{_lambda_.43} parent=27 // pred_fallthru
        _
    $region28: #{_lambda_.43} parent=5 // pred_fallthru
      _
    %p293 = scmp.le.s32.totalorder 2, %s10
    // Predicated region
    $region37: #{_lambda_.43} parent=5 // pred_check
      %p294 = pneg %p293
    $region38: #{_lambda_.43} parent=5 // pred_check_branch
      %296 = sbr.rel (%p294) target = $region40
    $region39: #{_lambda_.43} parent=5 // pred_region
      %s297 = ssub.s32 %s10, 2
      // Predicated region
      $region41: #{_lambda_.43} parent=39 // pred_check
        %p298 = pneg %p86
      $region42: #{_lambda_.43} parent=39 // pred_check_branch
        %300 = sbr.rel (%p298) target = $region44
      $region43: #{_lambda_.43} parent=39 // pred_region
        %p301 = scmp.lt.s32.totalorder %s16, 1
        %s302 = scalar_select %p301, %s16, 1
        %s303 = smul.addr %s302, 2
        %s304 = smul.addr %s303, 8
        %s305 = scalar_lea.vmem %s2, %s304
      $region44: #{_lambda_.43} parent=39 // pred_fallthru
        _
      // Predicated region
      $region45: #{_lambda_.43} parent=39 // pred_check
        %p306 = pneg %p112
      $region46: #{_lambda_.43} parent=39 // pred_check_branch
        %308 = sbr.rel (%p306) target = $region48
      $region47: #{_lambda_.43} parent=39 // pred_region
        %p309 = scmp.lt.s32.totalorder %s16, 1
        %s310 = scalar_select %p309, %s16, 1
        %s311 = smul.addr %s310, 2
        %s312 = smul.addr %s311, 8
        %s313 = scalar_lea.vmem %s3, %s312
      $region48: #{_lambda_.43} parent=39 // pred_fallthru
        _
    $region40: #{_lambda_.43} parent=5 // pred_fallthru
      _
  $region6: #{_lambda_.43} parent=0 // loop_footer
    %s14 = sadd.s32 1, %s10
  $region7: #{_lambda_.43} parent=0 // loop_footer_branch
    %9 = sbr.rel target = $region3
  $region8: #{_lambda_.43} parent=0 // loop_exit
    _

// kernel: _lambda_.50
$region0: #{_lambda_.50}
  #allocation0 [shape = 'u32[]', space=smem, size = 0x4, offset = 0x4, fixed_abs, tag = 'smem constant byte address 0x4 - core index']
  #allocation1 [shape = 'u32[144,128]{1,0:T(1,128)}', space=vmem, size = 0x12000, scoped, tag = 'internal scratch']
  %s0 = inlined_call_operand.vmem [shape: bf16[32,96], index: 0, kind: input, shape index: {}]
  %s1 = inlined_call_operand.vmem [shape: bf16[96,4], index: 1, kind: input, shape index: {}]
  %s2 = inlined_call_operand.vmem [shape: f32[32,4], index: 2, kind: output, shape index: {}]
  %s3 = sld [smem:[#allocation0]]
  $region18: #{_lambda_.50} parent=0
    _
  %s5 = ssub.s32 1, %s3
  %s6 = scalar_select 0, %s5, %s3
  // Predicated region
  $region2: #{_lambda_.50} parent=0 // pred_check
    _
  $region3: #{_lambda_.50} parent=0 // pred_check_branch
    %8 = sbr.rel (0) target = $region5
  $region4: #{_lambda_.50} parent=0 // pred_region
    _
  $region5: #{_lambda_.50} parent=0 // pred_fallthru
    _
  // Predicated region
  $region6: #{_lambda_.50} parent=0 // pred_check
    _
  $region7: #{_lambda_.50} parent=0 // pred_check_branch
    %10 = sbr.rel (0) target = $region9
  $region8: #{_lambda_.50} parent=0 // pred_region
    _
  $region9: #{_lambda_.50} parent=0 // pred_fallthru
    _
  %v12 = vld [vmem:[%s0] sm:$0xf]
  %v13 = vld [vmem:[%s0 + $0x4] sm:$0xf]
  %v14 = vld [vmem:[%s0 + $0x8] sm:$0xf]
  %v15 = vld [vmem:[%s0 + $0xc] sm:$0xf]
  %v16 = vld [vmem:[%s1] sm:$0xf]
  %v17 = vld [vmem:[%s1 + $0x4] sm:$0xf]
  %v18 = vld [vmem:[%s1 + $0x8] sm:$0xf]
  %v19 = vld [vmem:[%s1 + $0xc] sm:$0xf]
  %v20 = vld [vmem:[%s1 + $0x10] sm:$0xf]
  %v21 = vld [vmem:[%s1 + $0x14] sm:$0xf]
  %v22 = vld [vmem:[%s1 + $0x18] sm:$0xf]
  %v23 = vld [vmem:[%s1 + $0x1c] sm:$0xf]
  %v24 = vld [vmem:[%s1 + $0x20] sm:$0xf]
  %v25 = vld [vmem:[%s1 + $0x24] sm:$0xf]
  %v26 = vld [vmem:[%s1 + $0x28] sm:$0xf]
  %v27 = vld [vmem:[%s1 + $0x2c] sm:$0xf]
  %v32 = vunpack.c.l.b16 %v12
  %v33 = vunpack.c.l.b16 %v13
  %v34 = vunpack.c.l.b16 %v14
  %v35 = vunpack.c.l.b16 %v15
  %v36 = vpack.c.b16 %v33, %v32
  %v37 = vpack.c.b16 %v35, %v34
  %v50 = vunpack.c.l.b16 %v16
  %v51 = vunpack.c.l.b16 %v17
  %v52 = vunpack.c.l.b16 %v18
  %v53 = vunpack.c.l.b16 %v19
  %v54 = vunpack.c.l.b16 %v20
  %v55 = vunpack.c.l.b16 %v21
  %v56 = vunpack.c.l.b16 %v22
  %v57 = vunpack.c.l.b16 %v23
  %v58 = vunpack.c.l.b16 %v24
  %v59 = vunpack.c.l.b16 %v25
  %v60 = vunpack.c.l.b16 %v26
  %v61 = vunpack.c.l.b16 %v27
  %v62 = vpack.c.b16 %v51, %v50
  %v63 = vpack.c.b16 %v53, %v52
  %v64 = vpack.c.b16 %v55, %v54
  %v65 = vpack.c.b16 %v57, %v56
  %v66 = vpack.c.b16 %v59, %v58
  %v67 = vpack.c.b16 %v61, %v60
  %vm74 = vcmask 785408
  %v76 = vsel %vm74, %v36, 0
  %v79 = vsel %vm74, %v37, 0
  %81 = vmatprep.subr.bf16.mxu0 0
  %82 = vmatpush1.bf16.msra.mxu0 %v62
  %83 = vmatprep.subr.bf16.mxu0 0
  %84 = vmatpush1.bf16.msra.mxu0 %v63
  %85 = vmatprep.subr.bf16.mxu0 0
  %86 = vmatpush1.bf16.msra.mxu0 %v64
  %87 = vmatprep.subr.bf16.mxu0 0
  %88 = vmatpush1.bf16.msra.mxu0 %v65
  %89 = vmatprep.subr.bf16.mxu0 0
  %90 = vmatpush1.bf16.msra.mxu0 %v66
  %91 = vmatprep.subr.bf16.mxu0 0
  %92 = vmatpush1.bf16.msra.mxu0 %v67
  %93 = vmatprep.subr.bf16.mxu0 0
  %94 = vmatpush1.bf16.msra.mxu0 0
  %95 = vmatprep.subr.bf16.mxu0 0
  %96 = vmatpush1.bf16.msra.mxu0 0
  %97 = vmatprep.subr.bf16.mxu0 0
  %98 = vmatpush1.bf16.msra.mxu0 0
  %99 = vmatprep.subr.bf16.mxu0 0
  %100 = vmatpush1.bf16.msra.mxu0 0
  %101 = vmatprep.subr.bf16.mxu0 0
  %102 = vmatpush1.bf16.msra.mxu0 0
  %103 = vmatprep.subr.bf16.mxu0 0
  %104 = vmatpush1.bf16.msra.mxu0 0
  %105 = vmatprep.subr.bf16.mxu0 0
  %106 = vmatpush1.bf16.msra.mxu0 0
  %107 = vmatprep.subr.bf16.mxu0 0
  %108 = vmatpush1.bf16.msra.mxu0 0
  %109 = vmatprep.subr.bf16.mxu0 0
  %110 = vmatpush1.bf16.msra.mxu0 0
  %111 = vmatprep.subr.bf16.mxu0 0
  %112 = vmatpush1.bf16.msra.mxu0 0
  %113 = vmatprep.mubr.bf16.mxu0 0
  %114 = vmatmul.mubr.bf16.gmra.mrb[0].mxu0 %v76
  %v115 = vpop.f32.mrb[0].mxu0
  %v116 = vadd.f32 0.0, %v115
  %v117 = vpop.f32.mrb[0].mxu0
  %v118 = vpop.f32.mrb[0].mxu0
  %v119 = vadd.f32 0.0, %v118
  %v120 = vpop.f32.mrb[0].mxu0
  %121 = vmatprep.mubr.bf16.mxu0 0
  %122 = vmatmul.mubr.bf16.gmra.mrb[0].mxu0 %v79
  %v123 = vpop.f32.mrb[0].mxu0
  %v124 = vadd.f32 0.0, %v123
  %v125 = vpop.f32.mrb[0].mxu0
  %v126 = vpop.f32.mrb[0].mxu0
  %v127 = vadd.f32 0.0, %v126
  %v128 = vpop.f32.mrb[0].mxu0
  %129 = vdwg.mxu0
  %vm130 = vcmask 31744
  %131 = vst.msk [vmem:[%s2] sm:$0xff] %vm130, %v116
  %132 = vst.msk [vmem:[%s2 + $0x8] sm:$0xff] %vm130, %v119
  %133 = vst.msk [vmem:[%s2 + $0x10] sm:$0xff] %vm130, %v124
  %134 = vst.msk [vmem:[%s2 + $0x18] sm:$0xff] %vm130, %v127
  // Predicated region
  $region10: #{_lambda_.50} parent=0 // pred_check
    _
  $region11: #{_lambda_.50} parent=0 // pred_check_branch
    %136 = sbr.rel (0) target = $region13
  $region12: #{_lambda_.50} parent=0 // pred_region
    _
  $region13: #{_lambda_.50} parent=0 // pred_fallthru
    _
  // Predicated region
  $region14: #{_lambda_.50} parent=0 // pred_check
    _
  $region15: #{_lambda_.50} parent=0 // pred_check_branch
    %138 = sbr.rel (0) target = $region17
  $region16: #{_lambda_.50} parent=0 // pred_region
    _
  $region17: #{_lambda_.50} parent=0 // pred_fallthru
    _

// kernel: _lambda_.51
$region0: #{_lambda_.51}
  #allocation0 [shape = 'u32[]', space=smem, size = 0x4, offset = 0x4, fixed_abs, tag = 'smem constant byte address 0x4 - core index']
  #allocation1 [shape = 'u32[144,128]{1,0:T(1,128)}', space=vmem, size = 0x12000, scoped, tag = 'internal scratch']
  %s0 = inlined_call_operand.vmem [shape: bf16[16,32], index: 0, kind: input, shape index: {}]
  %s1 = inlined_call_operand.vmem [shape: bf16[32,4], index: 1, kind: input, shape index: {}]
  %s2 = inlined_call_operand.vmem [shape: f32[1,4], index: 2, kind: input, shape index: {}]
  %s3 = inlined_call_operand.vmem [shape: f32[16,4], index: 3, kind: input, shape index: {}]
  %s4 = inlined_call_operand.vmem [shape: f32[16,4], index: 4, kind: output, shape index: {}]
  %s5 = sld [smem:[#allocation0]]
  $region26: #{_lambda_.51} parent=0
    _
  %s7 = ssub.s32 1, %s5
  %s8 = scalar_select 0, %s7, %s5
  // Predicated region
  $region2: #{_lambda_.51} parent=0 // pred_check
    _
  $region3: #{_lambda_.51} parent=0 // pred_check_branch
    %10 = sbr.rel (0) target = $region5
  $region4: #{_lambda_.51} parent=0 // pred_region
    _
  $region5: #{_lambda_.51} parent=0 // pred_fallthru
    _
  // Predicated region
  $region6: #{_lambda_.51} parent=0 // pred_check
    _
  $region7: #{_lambda_.51} parent=0 // pred_check_branch
    %12 = sbr.rel (0) target = $region9
  $region8: #{_lambda_.51} parent=0 // pred_region
    _
  $region9: #{_lambda_.51} parent=0 // pred_fallthru
    _
  // Predicated region
  $region10: #{_lambda_.51} parent=0 // pred_check
    _
  $region11: #{_lambda_.51} parent=0 // pred_check_branch
    %14 = sbr.rel (0) target = $region13
  $region12: #{_lambda_.51} parent=0 // pred_region
    _
  $region13: #{_lambda_.51} parent=0 // pred_fallthru
    _
  // Predicated region
  $region14: #{_lambda_.51} parent=0 // pred_check
    _
  $region15: #{_lambda_.51} parent=0 // pred_check_branch
    %16 = sbr.rel (0) target = $region17
  $region16: #{_lambda_.51} parent=0 // pred_region
    _
  $region17: #{_lambda_.51} parent=0 // pred_fallthru
    _
  %v18 = vld [vmem:[%s0] sm:$0xf]
  %v19 = vld [vmem:[%s0 + $0x4] sm:$0xf]
  %v20 = vld [vmem:[%s1] sm:$0xf]
  %v21 = vld [vmem:[%s1 + $0x4] sm:$0xf]
  %v22 = vld [vmem:[%s1 + $0x8] sm:$0xf]
  %v23 = vld [vmem:[%s1 + $0xc] sm:$0xf]
  %v24 = vld [vmem:[%s2] sm:$0x1]
  %v26 = vlaneseq
  %v27 = vshrl.u32 %v26, 7
  %v28 = vsub.s32 0, %v27
  %v29 = vrot.slane %v24, %v28
  %v33 = vunpack.c.l.b16 %v18
  %v34 = vunpack.c.l.b16 %v19
  %v35 = vpack.c.b16 %v34, %v33
  %v40 = vunpack.c.l.b16 %v20
  %v41 = vunpack.c.l.b16 %v21
  %v42 = vunpack.c.l.b16 %v22
  %v43 = vunpack.c.l.b16 %v23
  %v44 = vpack.c.b16 %v41, %v40
  %v45 = vpack.c.b16 %v43, %v42
  %vm48 = vcmask 261120
  %v50 = vsel %vm48, %v35, 0
  %52 = vmatprep.subr.bf16.mxu0 0
  %53 = vmatpush1.bf16.msra.mxu0 %v44
  %54 = vmatprep.subr.bf16.mxu0 0
  %55 = vmatpush1.bf16.msra.mxu0 %v45
  %56 = vmatprep.subr.bf16.mxu0 0
  %57 = vmatpush1.bf16.msra.mxu0 0
  %58 = vmatprep.subr.bf16.mxu0 0
  %59 = vmatpush1.bf16.msra.mxu0 0
  %60 = vmatprep.subr.bf16.mxu0 0
  %61 = vmatpush1.bf16.msra.mxu0 0
  %62 = vmatprep.subr.bf16.mxu0 0
  %63 = vmatpush1.bf16.msra.mxu0 0
  %64 = vmatprep.subr.bf16.mxu0 0
  %65 = vmatpush1.bf16.msra.mxu0 0
  %66 = vmatprep.subr.bf16.mxu0 0
  %67 = vmatpush1.bf16.msra.mxu0 0
  %68 = vmatprep.subr.bf16.mxu0 0
  %69 = vmatpush1.bf16.msra.mxu0 0
  %70 = vmatprep.subr.bf16.mxu0 0
  %71 = vmatpush1.bf16.msra.mxu0 0
  %72 = vmatprep.subr.bf16.mxu0 0
  %73 = vmatpush1.bf16.msra.mxu0 0
  %74 = vmatprep.subr.bf16.mxu0 0
  %75 = vmatpush1.bf16.msra.mxu0 0
  %76 = vmatprep.subr.bf16.mxu0 0
  %77 = vmatpush1.bf16.msra.mxu0 0
  %78 = vmatprep.subr.bf16.mxu0 0
  %79 = vmatpush1.bf16.msra.mxu0 0
  %80 = vmatprep.subr.bf16.mxu0 0
  %81 = vmatpush1.bf16.msra.mxu0 0
  %82 = vmatprep.subr.bf16.mxu0 0
  %83 = vmatpush1.bf16.msra.mxu0 0
  %84 = vmatprep.mubr.bf16.mxu0 0
  %85 = vmatmul.mubr.bf16.gmra.mrb[0].mxu0 %v50
  %v86 = vpop.f32.mrb[0].mxu0
  %v87 = vadd.f32 %v29, %v86
  %v88 = vpop.f32.mrb[0].mxu0
  %v89 = vpop.f32.mrb[0].mxu0
  %v90 = vadd.f32 %v29, %v89
  %v91 = vpop.f32.mrb[0].mxu0
  %92 = vdwg.mxu0
  %v93 = vld [vmem:[%s3] sm:$0xff]
  %v94 = vld [vmem:[%s3 + $0x8] sm:$0xff]
  %v95 = vadd.f32 %v87, %v93
  %v96 = vadd.f32 %v90, %v94
  %vm97 = vcmask 31744
  %98 = vst.msk [vmem:[%s4] sm:$0xff] %vm97, %v95
  %99 = vst.msk [vmem:[%s4 + $0x8] sm:$0xff] %vm97, %v96
  // Predicated region
  $region18: #{_lambda_.51} parent=0 // pred_check
    _
  $region19: #{_lambda_.51} parent=0 // pred_check_branch
    %101 = sbr.rel (0) target = $region21
  $region20: #{_lambda_.51} parent=0 // pred_region
    _
  $region21: #{_lambda_.51} parent=0 // pred_fallthru
    _
  // Predicated region
  $region22: #{_lambda_.51} parent=0 // pred_check
    _
  $region23: #{_lambda_.51} parent=0 // pred_check_branch
    %103 = sbr.rel (0) target = $region25
  $region24: #{_lambda_.51} parent=0 // pred_region
    _
  $region25: #{_lambda_.51} parent=0 // pred_fallthru
    _

</llo_original>
